<compile_context>
chip_gen: v6e
topology: v6e:2x2x1
jax: 0.10.0
libtpu: 0.0.40
codegen_flags: <defaults>
</compile_context>

<pallas_src>
import functools

import jax
import jax.numpy as jnp
from jax.experimental import pallas as pl
from jax.experimental.pallas import tpu as pltpu

_LANE = 128
_SUBLANE = 8
_VMEM = pl.BlockSpec(memory_space=pltpu.MemorySpace.VMEM)


# ----------------------------- Pallas kernel --------------------------------

def _gcn_fused_kernel(adj_hbm, x_ref, mask_ref, gid_ref, icnt_ref, t_ref,
                      w1r_ref, w1o_ref, b1c_ref,
                      wmr_ref, wmo_ref, bm_ref,
                      w2r_ref, w2o_ref, b2c_ref,
                      wmax_ref, wmean_ref, wadd_ref, w1t_ref, bl1_ref,
                      wl2_ref, bl2_ref, wl3_ref, bl3_ref,
                      o_ref,
                      abuf, dma_sem, h_a, h_b, hf_sc, maxp_sc,
                      *, num_mid, row_tile, num_row_tiles, num_graphs):
    f32 = jnp.float32
    bf16 = jnp.bfloat16

    # -------- one GraphConv layer, adjacency streamed HBM -> VMEM row tiles --------
    def conv_layer(in_ref, out_ref, w_rel, w_root, b, relu):
        def fetch(t, slot):
            pltpu.make_async_copy(
                adj_hbm.at[pl.ds(t * row_tile, row_tile), :],
                abuf.at[slot], dma_sem.at[slot]).start()

        fetch(0, 0)
        for t in range(num_row_tiles):            # static unroll (tile count is small)
            slot = t & 1
            pltpu.make_async_copy(
                adj_hbm.at[pl.ds(t * row_tile, row_tile), :],
                abuf.at[slot], dma_sem.at[slot]).wait()
            if t + 1 < num_row_tiles:
                fetch(t + 1, 1 - slot)            # prefetch next tile while computing
            x_all = in_ref[...]                   # [Np, D] bf16, read at point of use
            ax = jnp.dot(abuf[slot], x_all,
                         preferred_element_type=f32).astype(bf16)         # [RT, D]
            r0 = t * row_tile
            out = (jnp.dot(ax, w_rel, preferred_element_type=f32)
                   + jnp.dot(in_ref[pl.ds(r0, row_tile), :], w_root,
                             preferred_element_type=f32)
                   + b)
            if relu:
                out = jnp.maximum(out, 0.0)
            out_ref[pl.ds(r0, row_tile), :] = out.astype(out_ref.dtype)

    # conv1 + relu : x -> h_a
    conv_layer(x_ref, h_a, w1r_ref[...], w1o_ref[...], b1c_ref[...], True)

    # middle convs + relu, ping-ponging h_a <-> h_b
    # TODO(synk): switch to lax.fori_loop with dynamic weight indexing if num_mid grows.
    cur, nxt = h_a, h_b
    for l in range(num_mid):
        conv_layer(cur, nxt, wmr_ref[l], wmo_ref[l], bm_ref[l], True)
        cur, nxt = nxt, cur

    # conv2 (no relu) -> hf_sc (f32 for pooling fidelity)
    conv_layer(cur, hf_sc, w2r_ref[...], w2o_ref[...], b2c_ref[...], False)

    # -------------------------------- pooling --------------------------------
    h_bf = hf_sc[...].astype(bf16)
    addp = jnp.dot(mask_ref[...], h_bf, preferred_element_type=f32)   # global_add_pool [Gp, Hp]
    meanp = addp * icnt_ref[...]                                      # global_mean_pool

    # global_max_pool: per-graph masked reduction (working set Np x Hp, no 3D temp).
    maxp_sc[...] = jnp.zeros_like(maxp_sc)        # padded graph rows stay exactly 0
    neg = jnp.float32(-3.0e38)

    @pl.loop(0, num_graphs)
    def _(g):
        sel = gid_ref[...] == g                   # [Np, 1]; padded nodes have gid = -1
        masked = jnp.where(sel, hf_sc[...], neg)  # [Np, Hp]
        maxp_sc[pl.ds(g, 1), :] = jnp.max(masked, axis=0, keepdims=True)

    maxp = maxp_sc[...]

    # -------------------------------- MLP head --------------------------------
    h1 = (jnp.dot(maxp.astype(bf16), wmax_ref[...], preferred_element_type=f32)
          + jnp.dot(meanp.astype(bf16), wmean_ref[...], preferred_element_type=f32)
          + jnp.dot(addp.astype(bf16), wadd_ref[...], preferred_element_type=f32)
          + t_ref[...] * w1t_ref[...]             # rank-1 "T" term on the VPU
          + bl1_ref[...])
    h1 = jnp.maximum(h1, 0.0)
    # TODO(synk): dropout p=0.2 skipped (identity in eval mode)
    h2 = jnp.dot(h1.astype(bf16), wl2_ref[...],
                 preferred_element_type=f32) + bl2_ref[...]
    h2 = jnp.maximum(h2, 0.0)
    o_ref[...] = (jnp.dot(h2.astype(bf16), wl3_ref[...],
                          preferred_element_type=f32) + bl3_ref[...])   # [Gp, 128]


# ------------------------------ Wrappers -------------------------------------

def _ceil_to(v, m):
    return ((v + m - 1) // m) * m


def _pad2(a, rows, cols):
    return jnp.pad(a, ((0, rows - a.shape[0]), (0, cols - a.shape[1])))


def _vmem_cap_bytes():
    try:
        info = pltpu.get_tpu_info()
        cap = getattr(info, "vmem_capacity_bytes", None)
        if cap:
            return int(cap)
    except Exception:
        pass
    return 64 * 1024 * 1024        # conservative (v7x-sized) fallback


def _vmem_bytes(shape, dtype):
    shape = tuple(shape)
    if len(shape) == 1:
        shape = (1,) + shape
    lead = 1
    for d in shape[:-2]:
        lead *= int(d)
    r = _ceil_to(max(int(shape[-2]), 1), _SUBLANE)
    c = _ceil_to(max(int(shape[-1]), 1), _LANE)
    return lead * r * c * jnp.dtype(dtype).itemsize


def pack_params(params, num_features, hidden, hl_size):
    """Zero-pad to 128-lane widths; weights -> bf16, biases -> f32."""
    Fp = _ceil_to(num_features, _LANE)
    Hp = _ceil_to(hidden, _LANE)
    HLp = _ceil_to(hl_size, _LANE)
    bf, f32 = jnp.bfloat16, jnp.float32
    p = {}
    p["w1r"] = _pad2(params["conv1_w_rel"], Fp, Hp).astype(bf)
    p["w1o"] = _pad2(params["conv1_w_root"], Fp, Hp).astype(bf)
    p["b1c"] = _pad2(params["conv1_b"], 1, Hp).astype(f32)

    mids = params["mid_convs"]
    num_mid = len(mids)
    if num_mid == 0:
        p["wmr"] = jnp.zeros((1, Hp, Hp), bf)
        p["wmo"] = jnp.zeros((1, Hp, Hp), bf)
        p["bm"] = jnp.zeros((1, 1, Hp), f32)
    else:
        p["wmr"] = jnp.stack([_pad2(wr, Hp, Hp) for (wr, _, _) in mids]).astype(bf)
        p["wmo"] = jnp.stack([_pad2(wo, Hp, Hp) for (_, wo, _) in mids]).astype(bf)
        p["bm"] = jnp.stack([_pad2(bb, 1, Hp) for (_, _, bb) in mids]).astype(f32)

    p["w2r"] = _pad2(params["conv2_w_rel"], Hp, Hp).astype(bf)
    p["w2o"] = _pad2(params["conv2_w_root"], Hp, Hp).astype(bf)
    p["b2c"] = _pad2(params["conv2_b"], 1, Hp).astype(f32)

    p["wmax"] = _pad2(params["w1_max"], Hp, HLp).astype(bf)
    p["wmean"] = _pad2(params["w1_mean"], Hp, HLp).astype(bf)
    p["wadd"] = _pad2(params["w1_add"], Hp, HLp).astype(bf)
    p["w1t"] = _pad2(params["w1_T"], 1, HLp).astype(f32)
    p["bl1"] = _pad2(params["b1"], 1, HLp).astype(f32)
    p["wl2"] = _pad2(params["w2"], HLp, HLp).astype(bf)
    p["bl2"] = _pad2(params["b2"], 1, HLp).astype(f32)
    # pad output dim of lin3 from 1 -> 128 so the final store is lane-dense
    p["wl3"] = _pad2(params["w3"], HLp, _LANE).astype(bf)
    p["bl3"] = _pad2(params["b3"], 1, _LANE).astype(f32)

    p.update(num_mid=num_mid, Fp=Fp, Hp=Hp, HLp=HLp)
    return p


def gcn_forward(x, adj, batch, num_graphs, T, packed):
    N, _ = x.shape
    G = int(num_graphs)
    Fp, Hp, HLp = packed["Fp"], packed["Hp"], packed["HLp"]
    Np = _ceil_to(max(N, _LANE), _LANE)       # lane-aligned node dim (MXU K of A@X)
    Gp = _ceil_to(max(G, 16), 16)             # sublane-aligned graph dim

    row_tile = 256 if Np % 256 == 0 else _LANE
    num_row_tiles = Np // row_tile

    # ----- padded device inputs -----
    x_p = _pad2(x, Np, Fp).astype(jnp.bfloat16)
    adj_p = _pad2(adj, Np, Np).astype(jnp.bfloat16)     # stays in HBM, streamed by DMA

    g_ids = jnp.arange(G, dtype=jnp.int32)
    mask = (batch[None, :] == g_ids[:, None]).astype(jnp.float32)       # [G, N]
    counts = jnp.sum(mask, axis=1, keepdims=True)                       # [G, 1]
    mask_p = _pad2(mask, Gp, Np).astype(jnp.bfloat16)
    icnt_p = _pad2((1.0 / jnp.maximum(counts, 1.0)).astype(jnp.float32), Gp, 1)
    gid_p = jnp.pad(batch.astype(jnp.int32), (0, Np - N),
                    constant_values=-1)[:, None]                        # [Np, 1]
    t_p = _pad2(T.astype(jnp.float32), Gp, 1)

    # ----- scratch -----
    scratch = [
        pltpu.VMEM((2, row_tile, Np), jnp.bfloat16),   # adjacency row-tile double buffer
        pltpu.SemaphoreType.DMA((2,)),
        pltpu.VMEM((Np, Hp), jnp.bfloat16),            # h_a (activation ping)
        pltpu.VMEM((Np, Hp), jnp.bfloat16),            # h_b (activation pong)
        pltpu.VMEM((Np, Hp), jnp.float32),             # final conv output (f32)
        pltpu.VMEM((Gp, Hp), jnp.float32),             # max-pool accumulator
    ]

    # ----- generation-aware VMEM limit from actual padded shapes -----
    weight_keys = ["w1r", "w1o", "b1c", "wmr", "wmo", "bm", "w2r", "w2o", "b2c",
                   "wmax", "wmean", "wadd", "w1t", "bl1", "wl2", "bl2", "wl3", "bl3"]
    need = 0
    need += _vmem_bytes(x_p.shape, x_p.dtype)
    need += _vmem_bytes(mask_p.shape, mask_p.dtype)
    need += _vmem_bytes((Np, 1), jnp.int32)
    need += _vmem_bytes((Gp, 1), jnp.float32) * 2
    need += _vmem_bytes((Gp, _LANE), jnp.float32)                 # output
    need += _vmem_bytes((2, row_tile, Np), jnp.bfloat16)
    need += _vmem_bytes((Np, Hp), jnp.bfloat16) * 2
    need += _vmem_bytes((Np, Hp), jnp.float32)
    need += _vmem_bytes((Gp, Hp), jnp.float32)
    for k in weight_keys:
        need += _vmem_bytes(packed[k].shape, packed[k].dtype)
    need = int(need * 1.3) + (4 << 20)                            # headroom / internal scratch
    cap = _vmem_cap_bytes()
    vmem_limit = max(16 << 20, min(need, int(cap * 0.85)))

    kernel = functools.partial(
        _gcn_fused_kernel, num_mid=packed["num_mid"],
        row_tile=row_tile, num_row_tiles=num_row_tiles, num_graphs=G)

    out = pl.pallas_call(
        kernel,
        out_shape=jax.ShapeDtypeStruct((Gp, _LANE), jnp.float32),
        in_specs=[pl.BlockSpec(memory_space=pl.ANY)] + [_VMEM] * 23,
        out_specs=_VMEM,
        scratch_shapes=scratch,
        compiler_params=pltpu.CompilerParams(vmem_limit_bytes=vmem_limit),
    )(adj_p, x_p, mask_p, gid_p, icnt_p, t_p,
      packed["w1r"], packed["w1o"], packed["b1c"],
      packed["wmr"], packed["wmo"], packed["bm"],
      packed["w2r"], packed["w2o"], packed["b2c"],
      packed["wmax"], packed["wmean"], packed["wadd"],
      packed["w1t"], packed["bl1"],
      packed["wl2"], packed["bl2"], packed["wl3"], packed["bl3"])
    return out[:G, :1]                                            # [G, 1]


# ------------------------------ Setup / main --------------------------------

def make_params(key, num_features, num_layers, hidden, hl_size):
    keys = iter(jax.random.split(key, 64))

    def w(shape, scale=0.1):
        return (scale * jax.random.normal(next(keys), shape)).astype(jnp.float32)

    params = {
        "conv1_w_rel": w((num_features, hidden)),
        "conv1_w_root": w((num_features, hidden)),
        "conv1_b": w((1, hidden)),
        "conv2_w_rel": w((hidden, hidden)),
        "conv2_w_root": w((hidden, hidden)),
        "conv2_b": w((1, hidden)),
        "mid_convs": [],
        # lin1: in = 3*hidden + 1, out = hl_size, split by pooled-feature block
        "w1_max": w((hidden, hl_size)),
        "w1_mean": w((hidden, hl_size)),
        "w1_add": w((hidden, hl_size)),
        "w1_T": w((1, hl_size)),
        "b1": w((1, hl_size)),
        "w2": w((hl_size, hl_size)),
        "b2": w((1, hl_size)),
        "w3": w((hl_size, 1)),
        "b3": w((1, 1)),
    }
    for _ in range(num_layers - 2):
        params["mid_convs"].append((w((hidden, hidden)), w((hidden, hidden)), w((1, hidden))))
    return params


if __name__ == "__main__":
    # Small, deterministic problem: 2 graphs, 8 nodes each, ring topology.
    num_features = 4
    hidden = 32
    hl_size = 32
    num_layers = 3          # conv1 + 1 middle conv + conv2
    N = 16                  # total nodes
    G = 2                   # graphs
    nodes_per_graph = N // G

    key = jax.random.PRNGKey(0)
    k_x, k_T, k_p = jax.random.split(key, 3)

    x = jax.random.normal(k_x, (N, num_features), dtype=jnp.float32)
    T = jax.random.normal(k_T, (G, 1), dtype=jnp.float32)
    params = make_params(k_p, num_features, num_layers, hidden, hl_size)
    packed = pack_params(params, num_features, hidden, hl_size)

    # edge_index: bidirectional ring inside each graph -> dense adjacency (glue, plain JAX)
    src, dst = [], []
    for g in range(G):
        base = g * nodes_per_graph
        for k in range(nodes_per_graph):
            a = base + k
            b = base + (k + 1) % nodes_per_graph
            src += [a, b]
            dst += [b, a]
    src = jnp.array(src, dtype=jnp.int32)
    dst = jnp.array(dst, dtype=jnp.int32)
    adj = jnp.zeros((N, N), dtype=jnp.float32).at[dst, src].add(1.0)

    # batch assignment (per-node graph id)
    batch = jnp.repeat(jnp.arange(G, dtype=jnp.int32), nodes_per_graph)   # [N]

    out = gcn_forward(x, adj, batch, G, T, packed)
    out = jax.block_until_ready(out)
    assert out.shape == (G, 1)
    print("KERNEL_OK")
</pallas_src>

<mosaic_0001>
module attributes {stable_mosaic.version = 11 : i64} {
  func.func @_gcn_fused_kernel(%arg0: memref<128x128xbf16, #tpu.memory_space<any>>, %arg1: memref<128x128xbf16, #tpu.memory_space<vmem>>, %arg2: memref<16x128xbf16, #tpu.memory_space<vmem>>, %arg3: memref<128x1xi32, #tpu.memory_space<vmem>>, %arg4: memref<16x1xf32, #tpu.memory_space<vmem>>, %arg5: memref<16x1xf32, #tpu.memory_space<vmem>>, %arg6: memref<128x128xbf16, #tpu.memory_space<vmem>>, %arg7: memref<128x128xbf16, #tpu.memory_space<vmem>>, %arg8: memref<1x128xf32, #tpu.memory_space<vmem>>, %arg9: memref<1x128x128xbf16, #tpu.memory_space<vmem>>, %arg10: memref<1x128x128xbf16, #tpu.memory_space<vmem>>, %arg11: memref<1x1x128xf32, #tpu.memory_space<vmem>>, %arg12: memref<128x128xbf16, #tpu.memory_space<vmem>>, %arg13: memref<128x128xbf16, #tpu.memory_space<vmem>>, %arg14: memref<1x128xf32, #tpu.memory_space<vmem>>, %arg15: memref<128x128xbf16, #tpu.memory_space<vmem>>, %arg16: memref<128x128xbf16, #tpu.memory_space<vmem>>, %arg17: memref<128x128xbf16, #tpu.memory_space<vmem>>, %arg18: memref<1x128xf32, #tpu.memory_space<vmem>>, %arg19: memref<1x128xf32, #tpu.memory_space<vmem>>, %arg20: memref<128x128xbf16, #tpu.memory_space<vmem>>, %arg21: memref<1x128xf32, #tpu.memory_space<vmem>>, %arg22: memref<128x128xbf16, #tpu.memory_space<vmem>>, %arg23: memref<1x128xf32, #tpu.memory_space<vmem>>, %arg24: memref<16x128xf32, #tpu.memory_space<vmem>>, %arg25: memref<2x128x128xbf16, #tpu.memory_space<vmem>>, %arg26: memref<2x!tpu.dma_semaphore, #tpu.memory_space<semaphore_mem>>, %arg27: memref<128x128xbf16, #tpu.memory_space<vmem>>, %arg28: memref<128x128xbf16, #tpu.memory_space<vmem>>, %arg29: memref<128x128xf32, #tpu.memory_space<vmem>>, %arg30: memref<16x128xf32, #tpu.memory_space<vmem>>) attributes {dimension_semantics = [], scalar_prefetch = 0 : i64, scratch_operands = 6 : i64, tpu.core_type = #tpu.core_type<tc>} {
    %c0 = arith.constant 0 : index
    %c0_0 = arith.constant 0 : index
    %0 = vector.load %arg6[%c0, %c0_0] : memref<128x128xbf16, #tpu.memory_space<vmem>>, vector<128x128xbf16>
    %c0_1 = arith.constant 0 : index
    %c0_2 = arith.constant 0 : index
    %1 = vector.load %arg7[%c0_1, %c0_2] : memref<128x128xbf16, #tpu.memory_space<vmem>>, vector<128x128xbf16>
    %c0_3 = arith.constant 0 : index
    %c0_4 = arith.constant 0 : index
    %2 = vector.load %arg8[%c0_3, %c0_4] : memref<1x128xf32, #tpu.memory_space<vmem>>, vector<1x128xf32>
    %c0_i32 = arith.constant 0 : i32
    %c0_i32_5 = arith.constant 0 : i32
    %c0_i32_6 = arith.constant 0 : i32
    %c0_i32_7 = arith.constant 0 : i32
    %3 = tpu.memref_slice %arg0[%c0_i32_6, %c0_i32_7] : memref<128x128xbf16, #tpu.memory_space<any>> -> memref<128x128xbf16, #tpu.memory_space<any>>
    %c0_i32_8 = arith.constant 0 : i32
    %c0_i32_9 = arith.constant 0 : i32
    %4 = tpu.memref_slice %arg25[%c0_i32, %c0_i32_8, %c0_i32_9] : memref<2x128x128xbf16, #tpu.memory_space<vmem>> -> memref<1x128x128xbf16, #tpu.memory_space<vmem>>
    %5 = tpu.memref_squeeze %4 : memref<1x128x128xbf16, #tpu.memory_space<vmem>> -> memref<128x128xbf16, #tpu.memory_space<vmem>>
    %6 = tpu.memref_slice %arg26[%c0_i32_5] : memref<2x!tpu.dma_semaphore, #tpu.memory_space<semaphore_mem>> -> memref<1x!tpu.dma_semaphore, #tpu.memory_space<semaphore_mem>>
    %7 = tpu.memref_squeeze %6 : memref<1x!tpu.dma_semaphore, #tpu.memory_space<semaphore_mem>> -> memref<!tpu.dma_semaphore, #tpu.memory_space<semaphore_mem>>
    tpu.enqueue_dma source(%3 : memref<128x128xbf16, #tpu.memory_space<any>>) target(%5 : memref<128x128xbf16, #tpu.memory_space<vmem>>) target_semaphore(%7 : memref<!tpu.dma_semaphore, #tpu.memory_space<semaphore_mem>>)
    %c0_i32_10 = arith.constant 0 : i32
    %c0_i32_11 = arith.constant 0 : i32
    %c0_i32_12 = arith.constant 0 : i32
    %c0_i32_13 = arith.constant 0 : i32
    %8 = tpu.memref_slice %arg0[%c0_i32_12, %c0_i32_13] : memref<128x128xbf16, #tpu.memory_space<any>> -> memref<128x128xbf16, #tpu.memory_space<any>>
    %c0_i32_14 = arith.constant 0 : i32
    %c0_i32_15 = arith.constant 0 : i32
    %9 = tpu.memref_slice %arg25[%c0_i32_10, %c0_i32_14, %c0_i32_15] : memref<2x128x128xbf16, #tpu.memory_space<vmem>> -> memref<1x128x128xbf16, #tpu.memory_space<vmem>>
    %10 = tpu.memref_squeeze %9 : memref<1x128x128xbf16, #tpu.memory_space<vmem>> -> memref<128x128xbf16, #tpu.memory_space<vmem>>
    %11 = tpu.memref_slice %arg26[%c0_i32_11] : memref<2x!tpu.dma_semaphore, #tpu.memory_space<semaphore_mem>> -> memref<1x!tpu.dma_semaphore, #tpu.memory_space<semaphore_mem>>
    %12 = tpu.memref_squeeze %11 : memref<1x!tpu.dma_semaphore, #tpu.memory_space<semaphore_mem>> -> memref<!tpu.dma_semaphore, #tpu.memory_space<semaphore_mem>>
    tpu.wait_dma2 semaphore(%12 : memref<!tpu.dma_semaphore, #tpu.memory_space<semaphore_mem>>) src(%8 : memref<128x128xbf16, #tpu.memory_space<any>>) dst(%10 : memref<128x128xbf16, #tpu.memory_space<vmem>>)
    %c0_16 = arith.constant 0 : index
    %c0_17 = arith.constant 0 : index
    %13 = vector.load %arg1[%c0_16, %c0_17] : memref<128x128xbf16, #tpu.memory_space<vmem>>, vector<128x128xbf16>
    %c0_18 = arith.constant 0 : index
    %c0_19 = arith.constant 0 : index
    %c0_20 = arith.constant 0 : index
    %14 = vector.load %arg25[%c0_18, %c0_19, %c0_20] : memref<2x128x128xbf16, #tpu.memory_space<vmem>>, vector<1x128x128xbf16>
    %15 = vector.shape_cast %14 : vector<1x128x128xbf16> to vector<128x128xbf16>
    %cst = arith.constant dense<0.000000e+00> : vector<128x128xf32>
    %16 = tpu.matmul %15, %13, %cst {dimension_numbers = #tpu.dot_dimension_numbers<[1], [0], [0], [1], [0, 0, 1, 1], [], []>} : vector<128x128xbf16>, vector<128x128xbf16>, vector<128x128xf32> -> vector<128x128xf32>
    %17 = arith.truncf %16 : vector<128x128xf32> to vector<128x128xbf16>
    %cst_21 = arith.constant dense<0.000000e+00> : vector<128x128xf32>
    %18 = tpu.matmul %17, %0, %cst_21 {dimension_numbers = #tpu.dot_dimension_numbers<[1], [0], [0], [1], [0, 0, 1, 1], [], []>} : vector<128x128xbf16>, vector<128x128xbf16>, vector<128x128xf32> -> vector<128x128xf32>
    %c0_22 = arith.constant 0 : index
    %c0_23 = arith.constant 0 : index
    %19 = vector.load %arg1[%c0_22, %c0_23] : memref<128x128xbf16, #tpu.memory_space<vmem>>, vector<128x128xbf16>
    %cst_24 = arith.constant dense<0.000000e+00> : vector<128x128xf32>
    %20 = tpu.matmul %19, %1, %cst_24 {dimension_numbers = #tpu.dot_dimension_numbers<[1], [0], [0], [1], [0, 0, 1, 1], [], []>} : vector<128x128xbf16>, vector<128x128xbf16>, vector<128x128xf32> -> vector<128x128xf32>
    %21 = arith.addf %18, %20 : vector<128x128xf32>
    %22 = vector.broadcast %2 : vector<1x128xf32> to vector<128x128xf32>
    %23 = arith.addf %21, %22 : vector<128x128xf32>
    %cst_25 = arith.constant 0.000000e+00 : f32
    %24 = vector.broadcast %cst_25 : f32 to vector<128x128xf32>
    %25 = arith.maximumf %23, %24 : vector<128x128xf32>
    %26 = arith.truncf %25 : vector<128x128xf32> to vector<128x128xbf16>
    %c0_26 = arith.constant 0 : index
    %c0_27 = arith.constant 0 : index
    %27 = vector.load %arg27[%c0_26, %c0_27] : memref<128x128xbf16, #tpu.memory_space<vmem>>, vector<128x128xbf16>
    tpu.vector_store %arg27[%c0_26, %c0_27], %26 {strides = array<i32>} : memref<128x128xbf16, #tpu.memory_space<vmem>>, vector<128x128xbf16>,
    %c0_28 = arith.constant 0 : index
    %c0_29 = arith.constant 0 : index
    %c0_30 = arith.constant 0 : index
    %28 = vector.load %arg9[%c0_28, %c0_29, %c0_30] : memref<1x128x128xbf16, #tpu.memory_space<vmem>>, vector<1x128x128xbf16>
    %29 = vector.shape_cast %28 : vector<1x128x128xbf16> to vector<128x128xbf16>
    %c0_31 = arith.constant 0 : index
    %c0_32 = arith.constant 0 : index
    %c0_33 = arith.constant 0 : index
    %30 = vector.load %arg10[%c0_31, %c0_32, %c0_33] : memref<1x128x128xbf16, #tpu.memory_space<vmem>>, vector<1x128x128xbf16>
    %31 = vector.shape_cast %30 : vector<1x128x128xbf16> to vector<128x128xbf16>
    %c0_34 = arith.constant 0 : index
    %c0_35 = arith.constant 0 : index
    %c0_36 = arith.constant 0 : index
    %32 = vector.load %arg11[%c0_34, %c0_35, %c0_36] : memref<1x1x128xf32, #tpu.memory_space<vmem>>, vector<1x1x128xf32>
    %33 = vector.shape_cast %32 : vector<1x1x128xf32> to vector<1x128xf32>
    %c0_i32_37 = arith.constant 0 : i32
    %c0_i32_38 = arith.constant 0 : i32
    %c0_i32_39 = arith.constant 0 : i32
    %c0_i32_40 = arith.constant 0 : i32
    %34 = tpu.memref_slice %arg0[%c0_i32_39, %c0_i32_40] : memref<128x128xbf16, #tpu.memory_space<any>> -> memref<128x128xbf16, #tpu.memory_space<any>>
    %c0_i32_41 = arith.constant 0 : i32
    %c0_i32_42 = arith.constant 0 : i32
    %35 = tpu.memref_slice %arg25[%c0_i32_37, %c0_i32_41, %c0_i32_42] : memref<2x128x128xbf16, #tpu.memory_space<vmem>> -> memref<1x128x128xbf16, #tpu.memory_space<vmem>>
    %36 = tpu.memref_squeeze %35 : memref<1x128x128xbf16, #tpu.memory_space<vmem>> -> memref<128x128xbf16, #tpu.memory_space<vmem>>
    %37 = tpu.memref_slice %arg26[%c0_i32_38] : memref<2x!tpu.dma_semaphore, #tpu.memory_space<semaphore_mem>> -> memref<1x!tpu.dma_semaphore, #tpu.memory_space<semaphore_mem>>
    %38 = tpu.memref_squeeze %37 : memref<1x!tpu.dma_semaphore, #tpu.memory_space<semaphore_mem>> -> memref<!tpu.dma_semaphore, #tpu.memory_space<semaphore_mem>>
    tpu.enqueue_dma source(%34 : memref<128x128xbf16, #tpu.memory_space<any>>) target(%36 : memref<128x128xbf16, #tpu.memory_space<vmem>>) target_semaphore(%38 : memref<!tpu.dma_semaphore, #tpu.memory_space<semaphore_mem>>)
    %c0_i32_43 = arith.constant 0 : i32
    %c0_i32_44 = arith.constant 0 : i32
    %c0_i32_45 = arith.constant 0 : i32
    %c0_i32_46 = arith.constant 0 : i32
    %39 = tpu.memref_slice %arg0[%c0_i32_45, %c0_i32_46] : memref<128x128xbf16, #tpu.memory_space<any>> -> memref<128x128xbf16, #tpu.memory_space<any>>
    %c0_i32_47 = arith.constant 0 : i32
    %c0_i32_48 = arith.constant 0 : i32
    %40 = tpu.memref_slice %arg25[%c0_i32_43, %c0_i32_47, %c0_i32_48] : memref<2x128x128xbf16, #tpu.memory_space<vmem>> -> memref<1x128x128xbf16, #tpu.memory_space<vmem>>
    %41 = tpu.memref_squeeze %40 : memref<1x128x128xbf16, #tpu.memory_space<vmem>> -> memref<128x128xbf16, #tpu.memory_space<vmem>>
    %42 = tpu.memref_slice %arg26[%c0_i32_44] : memref<2x!tpu.dma_semaphore, #tpu.memory_space<semaphore_mem>> -> memref<1x!tpu.dma_semaphore, #tpu.memory_space<semaphore_mem>>
    %43 = tpu.memref_squeeze %42 : memref<1x!tpu.dma_semaphore, #tpu.memory_space<semaphore_mem>> -> memref<!tpu.dma_semaphore, #tpu.memory_space<semaphore_mem>>
    tpu.wait_dma2 semaphore(%43 : memref<!tpu.dma_semaphore, #tpu.memory_space<semaphore_mem>>) src(%39 : memref<128x128xbf16, #tpu.memory_space<any>>) dst(%41 : memref<128x128xbf16, #tpu.memory_space<vmem>>)
    %c0_49 = arith.constant 0 : index
    %c0_50 = arith.constant 0 : index
    %44 = vector.load %arg27[%c0_49, %c0_50] : memref<128x128xbf16, #tpu.memory_space<vmem>>, vector<128x128xbf16>
    %c0_51 = arith.constant 0 : index
    %c0_52 = arith.constant 0 : index
    %c0_53 = arith.constant 0 : index
    %45 = vector.load %arg25[%c0_51, %c0_52, %c0_53] : memref<2x128x128xbf16, #tpu.memory_space<vmem>>, vector<1x128x128xbf16>
    %46 = vector.shape_cast %45 : vector<1x128x128xbf16> to vector<128x128xbf16>
    %cst_54 = arith.constant dense<0.000000e+00> : vector<128x128xf32>
    %47 = tpu.matmul %46, %44, %cst_54 {dimension_numbers = #tpu.dot_dimension_numbers<[1], [0], [0], [1], [0, 0, 1, 1], [], []>} : vector<128x128xbf16>, vector<128x128xbf16>, vector<128x128xf32> -> vector<128x128xf32>
    %48 = arith.truncf %47 : vector<128x128xf32> to vector<128x128xbf16>
    %cst_55 = arith.constant dense<0.000000e+00> : vector<128x128xf32>
    %49 = tpu.matmul %48, %29, %cst_55 {dimension_numbers = #tpu.dot_dimension_numbers<[1], [0], [0], [1], [0, 0, 1, 1], [], []>} : vector<128x128xbf16>, vector<128x128xbf16>, vector<128x128xf32> -> vector<128x128xf32>
    %c0_56 = arith.constant 0 : index
    %c0_57 = arith.constant 0 : index
    %50 = vector.load %arg27[%c0_56, %c0_57] : memref<128x128xbf16, #tpu.memory_space<vmem>>, vector<128x128xbf16>
    %cst_58 = arith.constant dense<0.000000e+00> : vector<128x128xf32>
    %51 = tpu.matmul %50, %31, %cst_58 {dimension_numbers = #tpu.dot_dimension_numbers<[1], [0], [0], [1], [0, 0, 1, 1], [], []>} : vector<128x128xbf16>, vector<128x128xbf16>, vector<128x128xf32> -> vector<128x128xf32>
    %52 = arith.addf %49, %51 : vector<128x128xf32>
    %53 = vector.broadcast %33 : vector<1x128xf32> to vector<128x128xf32>
    %54 = arith.addf %52, %53 : vector<128x128xf32>
    %cst_59 = arith.constant 0.000000e+00 : f32
    %55 = vector.broadcast %cst_59 : f32 to vector<128x128xf32>
    %56 = arith.maximumf %54, %55 : vector<128x128xf32>
    %57 = arith.truncf %56 : vector<128x128xf32> to vector<128x128xbf16>
    %c0_60 = arith.constant 0 : index
    %c0_61 = arith.constant 0 : index
    %58 = vector.load %arg28[%c0_60, %c0_61] : memref<128x128xbf16, #tpu.memory_space<vmem>>, vector<128x128xbf16>
    tpu.vector_store %arg28[%c0_60, %c0_61], %57 {strides = array<i32>} : memref<128x128xbf16, #tpu.memory_space<vmem>>, vector<128x128xbf16>,
    %c0_62 = arith.constant 0 : index
    %c0_63 = arith.constant 0 : index
    %59 = vector.load %arg12[%c0_62, %c0_63] : memref<128x128xbf16, #tpu.memory_space<vmem>>, vector<128x128xbf16>
    %c0_64 = arith.constant 0 : index
    %c0_65 = arith.constant 0 : index
    %60 = vector.load %arg13[%c0_64, %c0_65] : memref<128x128xbf16, #tpu.memory_space<vmem>>, vector<128x128xbf16>
    %c0_66 = arith.constant 0 : index
    %c0_67 = arith.constant 0 : index
    %61 = vector.load %arg14[%c0_66, %c0_67] : memref<1x128xf32, #tpu.memory_space<vmem>>, vector<1x128xf32>
    %c0_i32_68 = arith.constant 0 : i32
    %c0_i32_69 = arith.constant 0 : i32
    %c0_i32_70 = arith.constant 0 : i32
    %c0_i32_71 = arith.constant 0 : i32
    %62 = tpu.memref_slice %arg0[%c0_i32_70, %c0_i32_71] : memref<128x128xbf16, #tpu.memory_space<any>> -> memref<128x128xbf16, #tpu.memory_space<any>>
    %c0_i32_72 = arith.constant 0 : i32
    %c0_i32_73 = arith.constant 0 : i32
    %63 = tpu.memref_slice %arg25[%c0_i32_68, %c0_i32_72, %c0_i32_73] : memref<2x128x128xbf16, #tpu.memory_space<vmem>> -> memref<1x128x128xbf16, #tpu.memory_space<vmem>>
    %64 = tpu.memref_squeeze %63 : memref<1x128x128xbf16, #tpu.memory_space<vmem>> -> memref<128x128xbf16, #tpu.memory_space<vmem>>
    %65 = tpu.memref_slice %arg26[%c0_i32_69] : memref<2x!tpu.dma_semaphore, #tpu.memory_space<semaphore_mem>> -> memref<1x!tpu.dma_semaphore, #tpu.memory_space<semaphore_mem>>
    %66 = tpu.memref_squeeze %65 : memref<1x!tpu.dma_semaphore, #tpu.memory_space<semaphore_mem>> -> memref<!tpu.dma_semaphore, #tpu.memory_space<semaphore_mem>>
    tpu.enqueue_dma source(%62 : memref<128x128xbf16, #tpu.memory_space<any>>) target(%64 : memref<128x128xbf16, #tpu.memory_space<vmem>>) target_semaphore(%66 : memref<!tpu.dma_semaphore, #tpu.memory_space<semaphore_mem>>)
    %c0_i32_74 = arith.constant 0 : i32
    %c0_i32_75 = arith.constant 0 : i32
    %c0_i32_76 = arith.constant 0 : i32
    %c0_i32_77 = arith.constant 0 : i32
    %67 = tpu.memref_slice %arg0[%c0_i32_76, %c0_i32_77] : memref<128x128xbf16, #tpu.memory_space<any>> -> memref<128x128xbf16, #tpu.memory_space<any>>
    %c0_i32_78 = arith.constant 0 : i32
    %c0_i32_79 = arith.constant 0 : i32
    %68 = tpu.memref_slice %arg25[%c0_i32_74, %c0_i32_78, %c0_i32_79] : memref<2x128x128xbf16, #tpu.memory_space<vmem>> -> memref<1x128x128xbf16, #tpu.memory_space<vmem>>
    %69 = tpu.memref_squeeze %68 : memref<1x128x128xbf16, #tpu.memory_space<vmem>> -> memref<128x128xbf16, #tpu.memory_space<vmem>>
    %70 = tpu.memref_slice %arg26[%c0_i32_75] : memref<2x!tpu.dma_semaphore, #tpu.memory_space<semaphore_mem>> -> memref<1x!tpu.dma_semaphore, #tpu.memory_space<semaphore_mem>>
    %71 = tpu.memref_squeeze %70 : memref<1x!tpu.dma_semaphore, #tpu.memory_space<semaphore_mem>> -> memref<!tpu.dma_semaphore, #tpu.memory_space<semaphore_mem>>
    tpu.wait_dma2 semaphore(%71 : memref<!tpu.dma_semaphore, #tpu.memory_space<semaphore_mem>>) src(%67 : memref<128x128xbf16, #tpu.memory_space<any>>) dst(%69 : memref<128x128xbf16, #tpu.memory_space<vmem>>)
    %c0_80 = arith.constant 0 : index
    %c0_81 = arith.constant 0 : index
    %72 = vector.load %arg28[%c0_80, %c0_81] : memref<128x128xbf16, #tpu.memory_space<vmem>>, vector<128x128xbf16>
    %c0_82 = arith.constant 0 : index
    %c0_83 = arith.constant 0 : index
    %c0_84 = arith.constant 0 : index
    %73 = vector.load %arg25[%c0_82, %c0_83, %c0_84] : memref<2x128x128xbf16, #tpu.memory_space<vmem>>, vector<1x128x128xbf16>
    %74 = vector.shape_cast %73 : vector<1x128x128xbf16> to vector<128x128xbf16>
    %cst_85 = arith.constant dense<0.000000e+00> : vector<128x128xf32>
    %75 = tpu.matmul %74, %72, %cst_85 {dimension_numbers = #tpu.dot_dimension_numbers<[1], [0], [0], [1], [0, 0, 1, 1], [], []>} : vector<128x128xbf16>, vector<128x128xbf16>, vector<128x128xf32> -> vector<128x128xf32>
    %76 = arith.truncf %75 : vector<128x128xf32> to vector<128x128xbf16>
    %cst_86 = arith.constant dense<0.000000e+00> : vector<128x128xf32>
    %77 = tpu.matmul %76, %59, %cst_86 {dimension_numbers = #tpu.dot_dimension_numbers<[1], [0], [0], [1], [0, 0, 1, 1], [], []>} : vector<128x128xbf16>, vector<128x128xbf16>, vector<128x128xf32> -> vector<128x128xf32>
    %c0_87 = arith.constant 0 : index
    %c0_88 = arith.constant 0 : index
    %78 = vector.load %arg28[%c0_87, %c0_88] : memref<128x128xbf16, #tpu.memory_space<vmem>>, vector<128x128xbf16>
    %cst_89 = arith.constant dense<0.000000e+00> : vector<128x128xf32>
    %79 = tpu.matmul %78, %60, %cst_89 {dimension_numbers = #tpu.dot_dimension_numbers<[1], [0], [0], [1], [0, 0, 1, 1], [], []>} : vector<128x128xbf16>, vector<128x128xbf16>, vector<128x128xf32> -> vector<128x128xf32>
    %80 = arith.addf %77, %79 : vector<128x128xf32>
    %81 = vector.broadcast %61 : vector<1x128xf32> to vector<128x128xf32>
    %82 = arith.addf %80, %81 : vector<128x128xf32>
    %c0_90 = arith.constant 0 : index
    %c0_91 = arith.constant 0 : index
    %83 = vector.load %arg29[%c0_90, %c0_91] : memref<128x128xf32, #tpu.memory_space<vmem>>, vector<128x128xf32>
    tpu.vector_store %arg29[%c0_90, %c0_91], %82 {strides = array<i32>} : memref<128x128xf32, #tpu.memory_space<vmem>>, vector<128x128xf32>,
    %c0_92 = arith.constant 0 : index
    %c0_93 = arith.constant 0 : index
    %84 = vector.load %arg29[%c0_92, %c0_93] : memref<128x128xf32, #tpu.memory_space<vmem>>, vector<128x128xf32>
    %85 = arith.truncf %84 : vector<128x128xf32> to vector<128x128xbf16>
    %c0_94 = arith.constant 0 : index
    %c0_95 = arith.constant 0 : index
    %86 = vector.load %arg2[%c0_94, %c0_95] : memref<16x128xbf16, #tpu.memory_space<vmem>>, vector<16x128xbf16>
    %cst_96 = arith.constant dense<0.000000e+00> : vector<16x128xf32>
    %87 = tpu.matmul %86, %85, %cst_96 {dimension_numbers = #tpu.dot_dimension_numbers<[1], [0], [0], [1], [0, 0, 1, 1], [], []>} : vector<16x128xbf16>, vector<128x128xbf16>, vector<16x128xf32> -> vector<16x128xf32>
    %c0_97 = arith.constant 0 : index
    %c0_98 = arith.constant 0 : index
    %88 = vector.load %arg4[%c0_97, %c0_98] : memref<16x1xf32, #tpu.memory_space<vmem>>, vector<16x1xf32>
    %89 = vector.broadcast %88 : vector<16x1xf32> to vector<16x128xf32>
    %90 = arith.mulf %87, %89 : vector<16x128xf32>
    %cst_99 = arith.constant 0.000000e+00 : f32
    %91 = vector.broadcast %cst_99 : f32 to vector<16x128xf32>
    %c0_100 = arith.constant 0 : index
    %c0_101 = arith.constant 0 : index
    %92 = vector.load %arg30[%c0_100, %c0_101] : memref<16x128xf32, #tpu.memory_space<vmem>>, vector<16x128xf32>
    tpu.vector_store %arg30[%c0_100, %c0_101], %91 {strides = array<i32>} : memref<16x128xf32, #tpu.memory_space<vmem>>, vector<16x128xf32>,
    %cst_102 = arith.constant -3.000000e+38 : f32
    %c0_i32_103 = arith.constant 0 : i32
    %c2_i32 = arith.constant 2 : i32
    %93 = arith.addi %c0_i32_103, %c2_i32 : i32
    %c1_i32 = arith.constant 1 : i32
    scf.for %arg31 = %c0_i32_103 to %93 step %c1_i32  : i32 {
      %c1_i32_136 = arith.constant 1 : i32
      %132 = arith.muli %arg31, %c1_i32_136 : i32
      %c0_i32_137 = arith.constant 0 : i32
      %133 = arith.addi %c0_i32_137, %132 : i32
      %c0_138 = arith.constant 0 : index
      %c0_139 = arith.constant 0 : index
      %134 = vector.load %arg3[%c0_138, %c0_139] : memref<128x1xi32, #tpu.memory_space<vmem>>, vector<128x1xi32>
      %135 = vector.broadcast %133 : i32 to vector<128x1xi32>
      %136 = arith.cmpi eq, %134, %135 : vector<128x1xi32>
      %c0_140 = arith.constant 0 : index
      %c0_141 = arith.constant 0 : index
      %137 = vector.load %arg29[%c0_140, %c0_141] : memref<128x128xf32, #tpu.memory_space<vmem>>, vector<128x128xf32>
      %138 = vector.shape_cast %136 : vector<128x1xi1> to vector<128x1xi1>
      %139 = vector.broadcast %138 : vector<128x1xi1> to vector<128x128xi1>
      %140 = vector.broadcast %cst_102 : f32 to vector<128x128xf32>
      %141 = arith.select %139, %137, %140 : vector<128x128xi1>, vector<128x128xf32>
      %cst_142 = arith.constant dense<0xFF800000> : vector<128xf32>
      %142 = vector.multi_reduction <maximumf>, %141, %cst_142 [0] : vector<128x128xf32> to vector<128xf32>
      %143 = vector.shape_cast %142 : vector<128xf32> to vector<1x128xf32>
      %144 = arith.index_cast %133 : i32 to index
      %c0_143 = arith.constant 0 : index
      %145 = vector.load %arg30[%144, %c0_143] : memref<16x128xf32, #tpu.memory_space<vmem>>, vector<1x128xf32>
      tpu.vector_store %arg30[%144, %c0_143], %143 {strides = array<i32>} : memref<16x128xf32, #tpu.memory_space<vmem>>, vector<1x128xf32>,
    }
    %c2_i32_104 = arith.constant 2 : i32
    %c0_105 = arith.constant 0 : index
    %c0_106 = arith.constant 0 : index
    %94 = vector.load %arg30[%c0_105, %c0_106] : memref<16x128xf32, #tpu.memory_space<vmem>>, vector<16x128xf32>
    %95 = arith.truncf %94 : vector<16x128xf32> to vector<16x128xbf16>
    %c0_107 = arith.constant 0 : index
    %c0_108 = arith.constant 0 : index
    %96 = vector.load %arg15[%c0_107, %c0_108] : memref<128x128xbf16, #tpu.memory_space<vmem>>, vector<128x128xbf16>
    %cst_109 = arith.constant dense<0.000000e+00> : vector<16x128xf32>
    %97 = tpu.matmul %95, %96, %cst_109 {dimension_numbers = #tpu.dot_dimension_numbers<[1], [0], [0], [1], [0, 0, 1, 1], [], []>} : vector<16x128xbf16>, vector<128x128xbf16>, vector<16x128xf32> -> vector<16x128xf32>
    %98 = arith.truncf %90 : vector<16x128xf32> to vector<16x128xbf16>
    %c0_110 = arith.constant 0 : index
    %c0_111 = arith.constant 0 : index
    %99 = vector.load %arg16[%c0_110, %c0_111] : memref<128x128xbf16, #tpu.memory_space<vmem>>, vector<128x128xbf16>
    %cst_112 = arith.constant dense<0.000000e+00> : vector<16x128xf32>
    %100 = tpu.matmul %98, %99, %cst_112 {dimension_numbers = #tpu.dot_dimension_numbers<[1], [0], [0], [1], [0, 0, 1, 1], [], []>} : vector<16x128xbf16>, vector<128x128xbf16>, vector<16x128xf32> -> vector<16x128xf32>
    %101 = arith.addf %97, %100 : vector<16x128xf32>
    %102 = arith.truncf %87 : vector<16x128xf32> to vector<16x128xbf16>
    %c0_113 = arith.constant 0 : index
    %c0_114 = arith.constant 0 : index
    %103 = vector.load %arg17[%c0_113, %c0_114] : memref<128x128xbf16, #tpu.memory_space<vmem>>, vector<128x128xbf16>
    %cst_115 = arith.constant dense<0.000000e+00> : vector<16x128xf32>
    %104 = tpu.matmul %102, %103, %cst_115 {dimension_numbers = #tpu.dot_dimension_numbers<[1], [0], [0], [1], [0, 0, 1, 1], [], []>} : vector<16x128xbf16>, vector<128x128xbf16>, vector<16x128xf32> -> vector<16x128xf32>
    %105 = arith.addf %101, %104 : vector<16x128xf32>
    %c0_116 = arith.constant 0 : index
    %c0_117 = arith.constant 0 : index
    %106 = vector.load %arg5[%c0_116, %c0_117] : memref<16x1xf32, #tpu.memory_space<vmem>>, vector<16x1xf32>
    %c0_118 = arith.constant 0 : index
    %c0_119 = arith.constant 0 : index
    %107 = vector.load %arg18[%c0_118, %c0_119] : memref<1x128xf32, #tpu.memory_space<vmem>>, vector<1x128xf32>
    %108 = vector.broadcast %106 : vector<16x1xf32> to vector<16x128xf32>
    %109 = vector.broadcast %107 : vector<1x128xf32> to vector<16x128xf32>
    %110 = arith.mulf %108, %109 : vector<16x128xf32>
    %111 = arith.addf %105, %110 : vector<16x128xf32>
    %c0_120 = arith.constant 0 : index
    %c0_121 = arith.constant 0 : index
    %112 = vector.load %arg19[%c0_120, %c0_121] : memref<1x128xf32, #tpu.memory_space<vmem>>, vector<1x128xf32>
    %113 = vector.broadcast %112 : vector<1x128xf32> to vector<16x128xf32>
    %114 = arith.addf %111, %113 : vector<16x128xf32>
    %cst_122 = arith.constant 0.000000e+00 : f32
    %115 = vector.broadcast %cst_122 : f32 to vector<16x128xf32>
    %116 = arith.maximumf %114, %115 : vector<16x128xf32>
    %117 = arith.truncf %116 : vector<16x128xf32> to vector<16x128xbf16>
    %c0_123 = arith.constant 0 : index
    %c0_124 = arith.constant 0 : index
    %118 = vector.load %arg20[%c0_123, %c0_124] : memref<128x128xbf16, #tpu.memory_space<vmem>>, vector<128x128xbf16>
    %cst_125 = arith.constant dense<0.000000e+00> : vector<16x128xf32>
    %119 = tpu.matmul %117, %118, %cst_125 {dimension_numbers = #tpu.dot_dimension_numbers<[1], [0], [0], [1], [0, 0, 1, 1], [], []>} : vector<16x128xbf16>, vector<128x128xbf16>, vector<16x128xf32> -> vector<16x128xf32>
    %c0_126 = arith.constant 0 : index
    %c0_127 = arith.constant 0 : index
    %120 = vector.load %arg21[%c0_126, %c0_127] : memref<1x128xf32, #tpu.memory_space<vmem>>, vector<1x128xf32>
    %121 = vector.broadcast %120 : vector<1x128xf32> to vector<16x128xf32>
    %122 = arith.addf %119, %121 : vector<16x128xf32>
    %cst_128 = arith.constant 0.000000e+00 : f32
    %123 = vector.broadcast %cst_128 : f32 to vector<16x128xf32>
    %124 = arith.maximumf %122, %123 : vector<16x128xf32>
    %125 = arith.truncf %124 : vector<16x128xf32> to vector<16x128xbf16>
    %c0_129 = arith.constant 0 : index
    %c0_130 = arith.constant 0 : index
    %126 = vector.load %arg22[%c0_129, %c0_130] : memref<128x128xbf16, #tpu.memory_space<vmem>>, vector<128x128xbf16>
    %cst_131 = arith.constant dense<0.000000e+00> : vector<16x128xf32>
    %127 = tpu.matmul %125, %126, %cst_131 {dimension_numbers = #tpu.dot_dimension_numbers<[1], [0], [0], [1], [0, 0, 1, 1], [], []>} : vector<16x128xbf16>, vector<128x128xbf16>, vector<16x128xf32> -> vector<16x128xf32>
    %c0_132 = arith.constant 0 : index
    %c0_133 = arith.constant 0 : index
    %128 = vector.load %arg23[%c0_132, %c0_133] : memref<1x128xf32, #tpu.memory_space<vmem>>, vector<1x128xf32>
    %129 = vector.broadcast %128 : vector<1x128xf32> to vector<16x128xf32>
    %130 = arith.addf %127, %129 : vector<16x128xf32>
    %c0_134 = arith.constant 0 : index
    %c0_135 = arith.constant 0 : index
    %131 = vector.load %arg24[%c0_134, %c0_135] : memref<16x128xf32, #tpu.memory_space<vmem>>, vector<16x128xf32>
    tpu.vector_store %arg24[%c0_134, %c0_135], %130 {strides = array<i32>} : memref<16x128xf32, #tpu.memory_space<vmem>>, vector<16x128xf32>,
    return
  }
}

</mosaic_0001>

<llo_original>
// kernel: tpu_custom_call.1
$region0: #{tpu_custom_call.1}
  #allocation0 [shape = 'u32[]', space=smem, size = 0x4, offset = 0x4, fixed_abs, tag = 'smem constant byte address 0x4 - core index']
  #allocation1 [shape = 'u32[144,128]{1,0:T(1,128)}', space=vmem, size = 0x12000, scoped, tag = 'internal scratch']
  #allocation2 [shape = 'bf16[2,128,128]{2,1,0:T(8,128)(2,1)}', space=vmem, size = 0x10000, scoped, tag = 'scratch operand']
  #allocation3 [shape = 's32[2]{0}', space=sflag, size = 0x8, scoped, tag = 'scratch operand']
  #allocation4 [shape = 'bf16[128,128]{1,0:T(8,128)(2,1)}', space=vmem, size = 0x8000, scoped, tag = 'scratch operand']
  #allocation5 [shape = 'bf16[128,128]{1,0:T(8,128)(2,1)}', space=vmem, size = 0x8000, scoped, tag = 'scratch operand']
  #allocation6 [shape = 'f32[128,128]{1,0:T(8,128)}', space=vmem, size = 0x10000, scoped, tag = 'scratch operand']
  #allocation7 [shape = 'f32[16,128]{1,0:T(8,128)}', space=vmem, size = 0x2000, scoped, tag = 'scratch operand']
  #allocation32 [shape = 's32[]', space=sflag, size = 0x4, offset = 0, fixed_abs, tag = 'sflag constant byte address 0x0 - dummy sync flag']
  #allocation33 [shape = 's32[]', space=sflag, size = 0x4, offset = 0, fixed_abs, tag = 'sflag constant byte address 0x0 - dummy sync flag']
  #allocation34 [shape = 's32[]', space=sflag, size = 0x4, offset = 0, fixed_abs, tag = 'sflag constant byte address 0x0 - dummy sync flag']
  %s0 = inlined_call_operand.vmem [shape: bf16[128,128], index: 0, kind: input, shape index: {}]
  %s1 = inlined_call_operand.vmem [shape: bf16[128,128], index: 1, kind: input, shape index: {}]
  %s2 = inlined_call_operand.hbm [shape: bf16[16,128], index: 2, kind: input, shape index: {}]
  %s3 = inlined_call_operand.vmem [shape: s32[128,1], index: 3, kind: input, shape index: {}]
  %s4 = inlined_call_operand.vmem [shape: f32[16,1], index: 4, kind: input, shape index: {}]
  %s5 = inlined_call_operand.vmem [shape: f32[16,1], index: 5, kind: input, shape index: {}]
  %s6 = inlined_call_operand.hbm [shape: bf16[128,128], index: 6, kind: input, shape index: {}]
  %s7 = inlined_call_operand.hbm [shape: bf16[128,128], index: 7, kind: input, shape index: {}]
  %s8 = inlined_call_operand.hbm [shape: f32[1,128], index: 8, kind: input, shape index: {}]
  %s9 = inlined_call_operand.hbm [shape: bf16[1,128,128], index: 9, kind: input, shape index: {}]
  %s10 = inlined_call_operand.hbm [shape: bf16[1,128,128], index: 10, kind: input, shape index: {}]
  %s11 = inlined_call_operand.hbm [shape: f32[1,1,128], index: 11, kind: input, shape index: {}]
  %s12 = inlined_call_operand.hbm [shape: bf16[128,128], index: 12, kind: input, shape index: {}]
  %s13 = inlined_call_operand.hbm [shape: bf16[128,128], index: 13, kind: input, shape index: {}]
  %s14 = inlined_call_operand.hbm [shape: f32[1,128], index: 14, kind: input, shape index: {}]
  %s15 = inlined_call_operand.hbm [shape: bf16[128,128], index: 15, kind: input, shape index: {}]
  %s16 = inlined_call_operand.vmem [shape: bf16[128,128], index: 16, kind: input, shape index: {}]
  %s17 = inlined_call_operand.hbm [shape: bf16[128,128], index: 17, kind: input, shape index: {}]
  %s18 = inlined_call_operand.vmem [shape: f32[1,128], index: 18, kind: input, shape index: {}]
  %s19 = inlined_call_operand.vmem [shape: f32[1,128], index: 19, kind: input, shape index: {}]
  %s20 = inlined_call_operand.hbm [shape: bf16[128,128], index: 20, kind: input, shape index: {}]
  %s21 = inlined_call_operand.vmem [shape: f32[1,128], index: 21, kind: input, shape index: {}]
  %s22 = inlined_call_operand.hbm [shape: bf16[128,128], index: 22, kind: input, shape index: {}]
  %s23 = inlined_call_operand.vmem [shape: f32[1,128], index: 23, kind: input, shape index: {}]
  %s24 = inlined_call_operand.hbm [shape: f32[16,128], index: 24, kind: output, shape index: {}]
  %s25 = sld [smem:[#allocation0]]
  $region267: #{tpu_custom_call.1} parent=0
    _
  %s27 = ssub.s32 1, %s25
  %s28 = scalar_select 0, %s27, %s25
  $region1: #{tpu_custom_call.1} parent=0
    #allocation8 [shape = 'u8[4096]{0}', space=vmem, size = 0x1000, scoped, tag = 'input window, operand 2, single buffered']
    #allocation9 [shape = 's32[1]{0}', space=sflag, size = 0x4, scoped, tag = 'scoped memory for tpu_custom_call.1']
    #allocation10 [shape = 's32[1]{0}', space=sflag, size = 0x4, scoped, tag = 'scoped memory for tpu_custom_call.1']
    #allocation11 [shape = 'u8[32768]{0}', space=vmem, size = 0x8000, scoped, tag = 'input window, operand 6, single buffered']
    #allocation12 [shape = 's32[1]{0}', space=sflag, size = 0x4, scoped, tag = 'scoped memory for tpu_custom_call.1']
    #allocation13 [shape = 'u8[32768]{0}', space=vmem, size = 0x8000, scoped, tag = 'input window, operand 7, single buffered']
    #allocation14 [shape = 'u8[512]{0}', space=vmem, size = 0x400, scoped, tag = 'input window, operand 8, single buffered']
    #allocation15 [shape = 's32[1]{0}', space=sflag, size = 0x4, scoped, tag = 'scoped memory for tpu_custom_call.1']
    #allocation16 [shape = 'u8[32768]{0}', space=vmem, size = 0x8000, scoped, tag = 'input window, operand 9, single buffered']
    #allocation17 [shape = 'u8[32768]{0}', space=vmem, size = 0x8000, scoped, tag = 'input window, operand 10, single buffered']
    #allocation18 [shape = 's32[1]{0}', space=sflag, size = 0x4, scoped, tag = 'scoped memory for tpu_custom_call.1']
    #allocation19 [shape = 'u8[512]{0}', space=vmem, size = 0x400, scoped, tag = 'input window, operand 11, single buffered']
    #allocation20 [shape = 'u8[32768]{0}', space=vmem, size = 0x8000, scoped, tag = 'input window, operand 12, single buffered']
    #allocation21 [shape = 's32[1]{0}', space=sflag, size = 0x4, scoped, tag = 'scoped memory for tpu_custom_call.1']
    #allocation22 [shape = 'u8[32768]{0}', space=vmem, size = 0x8000, scoped, tag = 'input window, operand 13, single buffered']
    #allocation23 [shape = 'u8[512]{0}', space=vmem, size = 0x400, scoped, tag = 'input window, operand 14, single buffered']
    #allocation24 [shape = 's32[1]{0}', space=sflag, size = 0x4, scoped, tag = 'scoped memory for tpu_custom_call.1']
    #allocation25 [shape = 'u8[32768]{0}', space=vmem, size = 0x8000, scoped, tag = 'input window, operand 15, single buffered']
    #allocation26 [shape = 'u8[32768]{0}', space=vmem, size = 0x8000, scoped, tag = 'input window, operand 17, single buffered']
    #allocation27 [shape = 's32[1]{0}', space=sflag, size = 0x4, scoped, tag = 'scoped memory for tpu_custom_call.1']
    #allocation28 [shape = 'u8[32768]{0}', space=vmem, size = 0x8000, scoped, tag = 'input window, operand 20, single buffered']
    #allocation29 [shape = 'u8[32768]{0}', space=vmem, size = 0x8000, scoped, tag = 'input window, operand 22, single buffered']
    #allocation30 [shape = 's32[1]{0}', space=sflag, size = 0x4, scoped, tag = 'scoped memory for tpu_custom_call.1']
    #allocation31 [shape = 'u8[8192]{0}', space=vmem, size = 0x2000, scoped, tag = 'output window, operand 0, single buffered']
    %29 = vsyncpa [#allocation9], 0
    %30 = vsyncpa [#allocation12], 0
    %31 = vsyncpa [#allocation15], 0
    %32 = vsyncpa [#allocation18], 0
    %33 = vsyncpa [#allocation21], 0
    %34 = vsyncpa [#allocation24], 0
    %35 = vsyncpa [#allocation27], 0
    %36 = vsyncpa [#allocation30], 0
    %37 = vsyncpa [#allocation10], 0
    // Predicated region
    $region2: #{tpu_custom_call.1} parent=1 // pred_check
      _
    $region3: #{tpu_custom_call.1} parent=1 // pred_check_branch
      %39 = sbr.rel (0) target = $region5
    $region4: #{tpu_custom_call.1} parent=1 // pred_region
      _
    $region5: #{tpu_custom_call.1} parent=1 // pred_fallthru
      _
    // Predicated region
    $region6: #{tpu_custom_call.1} parent=1 // pred_check
      _
    $region7: #{tpu_custom_call.1} parent=1 // pred_check_branch
      %41 = sbr.rel (0) target = $region9
    $region8: #{tpu_custom_call.1} parent=1 // pred_region
      %s43 = ssub.s32 128, 128
      %44 = vsyncadd [#allocation9], %s43
      %s45 = sshll.u32 [#allocation8], 4
      %s46 = int_to_ptr.vmem [resolvable:$true] %s45
      %51 = dma.hbm_to_vmem [thread:$0]  %s2, 128, %s46, [#allocation9], 64, 64, 4
    $region9: #{tpu_custom_call.1} parent=1 // pred_fallthru
      _
    // Predicated region
    $region10: #{tpu_custom_call.1} parent=1 // pred_check
      _
    $region11: #{tpu_custom_call.1} parent=1 // pred_check_branch
      %53 = sbr.rel (0) target = $region13
    $region12: #{tpu_custom_call.1} parent=1 // pred_region
      _
    $region13: #{tpu_custom_call.1} parent=1 // pred_fallthru
      _
    // Predicated region
    $region14: #{tpu_custom_call.1} parent=1 // pred_check
      _
    $region15: #{tpu_custom_call.1} parent=1 // pred_check_branch
      %55 = sbr.rel (0) target = $region17
    $region16: #{tpu_custom_call.1} parent=1 // pred_region
      _
    $region17: #{tpu_custom_call.1} parent=1 // pred_fallthru
      _
    // Predicated region
    $region18: #{tpu_custom_call.1} parent=1 // pred_check
      _
    $region19: #{tpu_custom_call.1} parent=1 // pred_check_branch
      %57 = sbr.rel (0) target = $region21
    $region20: #{tpu_custom_call.1} parent=1 // pred_region
      _
    $region21: #{tpu_custom_call.1} parent=1 // pred_fallthru
      _
    // Predicated region
    $region22: #{tpu_custom_call.1} parent=1 // pred_check
      _
    $region23: #{tpu_custom_call.1} parent=1 // pred_check_branch
      %59 = sbr.rel (0) target = $region25
    $region24: #{tpu_custom_call.1} parent=1 // pred_region
      %s61 = ssub.s32 1024, 1024
      %62 = vsyncadd [#allocation12], %s61
      %s63 = sshll.u32 [#allocation11], 4
      %s64 = int_to_ptr.vmem [resolvable:$true] %s63
      %69 = dma.hbm_to_vmem [thread:$0]  %s6, 1024, %s64, [#allocation12], 64, 64, 4
    $region25: #{tpu_custom_call.1} parent=1 // pred_fallthru
      _
    // Predicated region
    $region26: #{tpu_custom_call.1} parent=1 // pred_check
      _
    $region27: #{tpu_custom_call.1} parent=1 // pred_check_branch
      %71 = sbr.rel (0) target = $region29
    $region28: #{tpu_custom_call.1} parent=1 // pred_region
      %s73 = ssub.s32 1024, 1024
      %74 = vsyncadd [#allocation12], %s73
      %s75 = sshll.u32 [#allocation13], 4
      %s76 = int_to_ptr.vmem [resolvable:$true] %s75
      %81 = dma.hbm_to_vmem [thread:$0]  %s7, 1024, %s76, [#allocation12], 64, 64, 4
    $region29: #{tpu_custom_call.1} parent=1 // pred_fallthru
      _
    // Predicated region
    $region30: #{tpu_custom_call.1} parent=1 // pred_check
      _
    $region31: #{tpu_custom_call.1} parent=1 // pred_check_branch
      %83 = sbr.rel (0) target = $region33
    $region32: #{tpu_custom_call.1} parent=1 // pred_region
      %s85 = ssub.s32 16, 16
      %86 = vsyncadd [#allocation15], %s85
      %s88 = sshll.u32 [#allocation14], 4
      %s89 = int_to_ptr.vmem [resolvable:$true] %s88
      %91 = dma.hbm_to_vmem [thread:$0]  %s8, 16, %s89, [#allocation15]
    $region33: #{tpu_custom_call.1} parent=1 // pred_fallthru
      _
    // Predicated region
    $region34: #{tpu_custom_call.1} parent=1 // pred_check
      _
    $region35: #{tpu_custom_call.1} parent=1 // pred_check_branch
      %93 = sbr.rel (0) target = $region37
    $region36: #{tpu_custom_call.1} parent=1 // pred_region
      %s95 = ssub.s32 1024, 1024
      %96 = vsyncadd [#allocation15], %s95
      %s97 = sshll.u32 [#allocation16], 4
      %s98 = int_to_ptr.vmem [resolvable:$true] %s97
      %103 = dma.hbm_to_vmem [thread:$0]  %s9, 1024, %s98, [#allocation15], 64, 64, 4
    $region37: #{tpu_custom_call.1} parent=1 // pred_fallthru
      _
    // Predicated region
    $region38: #{tpu_custom_call.1} parent=1 // pred_check
      _
    $region39: #{tpu_custom_call.1} parent=1 // pred_check_branch
      %105 = sbr.rel (0) target = $region41
    $region40: #{tpu_custom_call.1} parent=1 // pred_region
      %s107 = ssub.s32 1024, 1024
      %108 = vsyncadd [#allocation18], %s107
      %s109 = sshll.u32 [#allocation17], 4
      %s110 = int_to_ptr.vmem [resolvable:$true] %s109
      %115 = dma.hbm_to_vmem [thread:$0]  %s10, 1024, %s110, [#allocation18], 64, 64, 4
    $region41: #{tpu_custom_call.1} parent=1 // pred_fallthru
      _
    // Predicated region
    $region42: #{tpu_custom_call.1} parent=1 // pred_check
      _
    $region43: #{tpu_custom_call.1} parent=1 // pred_check_branch
      %117 = sbr.rel (0) target = $region45
    $region44: #{tpu_custom_call.1} parent=1 // pred_region
      %s119 = ssub.s32 16, 16
      %120 = vsyncadd [#allocation18], %s119
      %s122 = sshll.u32 [#allocation19], 4
      %s123 = int_to_ptr.vmem [resolvable:$true] %s122
      %125 = dma.hbm_to_vmem [thread:$0]  %s11, 16, %s123, [#allocation18]
    $region45: #{tpu_custom_call.1} parent=1 // pred_fallthru
      _
    // Predicated region
    $region46: #{tpu_custom_call.1} parent=1 // pred_check
      _
    $region47: #{tpu_custom_call.1} parent=1 // pred_check_branch
      %127 = sbr.rel (0) target = $region49
    $region48: #{tpu_custom_call.1} parent=1 // pred_region
      %s129 = ssub.s32 1024, 1024
      %130 = vsyncadd [#allocation21], %s129
      %s131 = sshll.u32 [#allocation20], 4
      %s132 = int_to_ptr.vmem [resolvable:$true] %s131
      %137 = dma.hbm_to_vmem [thread:$0]  %s12, 1024, %s132, [#allocation21], 64, 64, 4
    $region49: #{tpu_custom_call.1} parent=1 // pred_fallthru
      _
    // Predicated region
    $region50: #{tpu_custom_call.1} parent=1 // pred_check
      _
    $region51: #{tpu_custom_call.1} parent=1 // pred_check_branch
      %139 = sbr.rel (0) target = $region53
    $region52: #{tpu_custom_call.1} parent=1 // pred_region
      %s141 = ssub.s32 1024, 1024
      %142 = vsyncadd [#allocation21], %s141
      %s143 = sshll.u32 [#allocation22], 4
      %s144 = int_to_ptr.vmem [resolvable:$true] %s143
      %149 = dma.hbm_to_vmem [thread:$0]  %s13, 1024, %s144, [#allocation21], 64, 64, 4
    $region53: #{tpu_custom_call.1} parent=1 // pred_fallthru
      _
    // Predicated region
    $region54: #{tpu_custom_call.1} parent=1 // pred_check
      _
    $region55: #{tpu_custom_call.1} parent=1 // pred_check_branch
      %151 = sbr.rel (0) target = $region57
    $region56: #{tpu_custom_call.1} parent=1 // pred_region
      %s153 = ssub.s32 16, 16
      %154 = vsyncadd [#allocation24], %s153
      %s156 = sshll.u32 [#allocation23], 4
      %s157 = int_to_ptr.vmem [resolvable:$true] %s156
      %159 = dma.hbm_to_vmem [thread:$0]  %s14, 16, %s157, [#allocation24]
    $region57: #{tpu_custom_call.1} parent=1 // pred_fallthru
      _
    // Predicated region
    $region58: #{tpu_custom_call.1} parent=1 // pred_check
      _
    $region59: #{tpu_custom_call.1} parent=1 // pred_check_branch
      %161 = sbr.rel (0) target = $region61
    $region60: #{tpu_custom_call.1} parent=1 // pred_region
      %s163 = ssub.s32 1024, 1024
      %164 = vsyncadd [#allocation24], %s163
      %s165 = sshll.u32 [#allocation25], 4
      %s166 = int_to_ptr.vmem [resolvable:$true] %s165
      %171 = dma.hbm_to_vmem [thread:$0]  %s15, 1024, %s166, [#allocation24], 64, 64, 4
    $region61: #{tpu_custom_call.1} parent=1 // pred_fallthru
      _
    // Predicated region
    $region62: #{tpu_custom_call.1} parent=1 // pred_check
      _
    $region63: #{tpu_custom_call.1} parent=1 // pred_check_branch
      %173 = sbr.rel (0) target = $region65
    $region64: #{tpu_custom_call.1} parent=1 // pred_region
      _
    $region65: #{tpu_custom_call.1} parent=1 // pred_fallthru
      _
    // Predicated region
    $region66: #{tpu_custom_call.1} parent=1 // pred_check
      _
    $region67: #{tpu_custom_call.1} parent=1 // pred_check_branch
      %175 = sbr.rel (0) target = $region69
    $region68: #{tpu_custom_call.1} parent=1 // pred_region
      %s177 = ssub.s32 1024, 1024
      %178 = vsyncadd [#allocation27], %s177
      %s179 = sshll.u32 [#allocation26], 4
      %s180 = int_to_ptr.vmem [resolvable:$true] %s179
      %185 = dma.hbm_to_vmem [thread:$0]  %s17, 1024, %s180, [#allocation27], 64, 64, 4
    $region69: #{tpu_custom_call.1} parent=1 // pred_fallthru
      _
    // Predicated region
    $region70: #{tpu_custom_call.1} parent=1 // pred_check
      _
    $region71: #{tpu_custom_call.1} parent=1 // pred_check_branch
      %187 = sbr.rel (0) target = $region73
    $region72: #{tpu_custom_call.1} parent=1 // pred_region
      _
    $region73: #{tpu_custom_call.1} parent=1 // pred_fallthru
      _
    // Predicated region
    $region74: #{tpu_custom_call.1} parent=1 // pred_check
      _
    $region75: #{tpu_custom_call.1} parent=1 // pred_check_branch
      %189 = sbr.rel (0) target = $region77
    $region76: #{tpu_custom_call.1} parent=1 // pred_region
      _
    $region77: #{tpu_custom_call.1} parent=1 // pred_fallthru
      _
    // Predicated region
    $region78: #{tpu_custom_call.1} parent=1 // pred_check
      _
    $region79: #{tpu_custom_call.1} parent=1 // pred_check_branch
      %191 = sbr.rel (0) target = $region81
    $region80: #{tpu_custom_call.1} parent=1 // pred_region
      %s193 = ssub.s32 1024, 1024
      %194 = vsyncadd [#allocation27], %s193
      %s195 = sshll.u32 [#allocation28], 4
      %s196 = int_to_ptr.vmem [resolvable:$true] %s195
      %201 = dma.hbm_to_vmem [thread:$0]  %s20, 1024, %s196, [#allocation27], 64, 64, 4
    $region81: #{tpu_custom_call.1} parent=1 // pred_fallthru
      _
    // Predicated region
    $region82: #{tpu_custom_call.1} parent=1 // pred_check
      _
    $region83: #{tpu_custom_call.1} parent=1 // pred_check_branch
      %203 = sbr.rel (0) target = $region85
    $region84: #{tpu_custom_call.1} parent=1 // pred_region
      _
    $region85: #{tpu_custom_call.1} parent=1 // pred_fallthru
      _
    // Predicated region
    $region86: #{tpu_custom_call.1} parent=1 // pred_check
      _
    $region87: #{tpu_custom_call.1} parent=1 // pred_check_branch
      %205 = sbr.rel (0) target = $region89
    $region88: #{tpu_custom_call.1} parent=1 // pred_region
      %s207 = ssub.s32 1024, 1024
      %208 = vsyncadd [#allocation30], %s207
      %s209 = sshll.u32 [#allocation29], 4
      %s210 = int_to_ptr.vmem [resolvable:$true] %s209
      %215 = dma.hbm_to_vmem [thread:$0]  %s22, 1024, %s210, [#allocation30], 64, 64, 4
    $region89: #{tpu_custom_call.1} parent=1 // pred_fallthru
      _
    // Predicated region
    $region90: #{tpu_custom_call.1} parent=1 // pred_check
      _
    $region91: #{tpu_custom_call.1} parent=1 // pred_check_branch
      %217 = sbr.rel (0) target = $region93
    $region92: #{tpu_custom_call.1} parent=1 // pred_region
      _
    $region93: #{tpu_custom_call.1} parent=1 // pred_fallthru
      _
    // Predicated region
    $region94: #{tpu_custom_call.1} parent=1 // pred_check
      _
    $region95: #{tpu_custom_call.1} parent=1 // pred_check_branch
      %219 = sbr.rel (0) target = $region97
    $region96: #{tpu_custom_call.1} parent=1 // pred_region
      %220 = dma.done [#allocation9], 128
    $region97: #{tpu_custom_call.1} parent=1 // pred_fallthru
      _
    // Predicated region
    $region98: #{tpu_custom_call.1} parent=1 // pred_check
      _
    $region99: #{tpu_custom_call.1} parent=1 // pred_check_branch
      %222 = sbr.rel (0) target = $region101
    $region100: #{tpu_custom_call.1} parent=1 // pred_region
      %223 = dma.done [#allocation12], 1024
    $region101: #{tpu_custom_call.1} parent=1 // pred_fallthru
      _
    // Predicated region
    $region102: #{tpu_custom_call.1} parent=1 // pred_check
      _
    $region103: #{tpu_custom_call.1} parent=1 // pred_check_branch
      %225 = sbr.rel (0) target = $region105
    $region104: #{tpu_custom_call.1} parent=1 // pred_region
      %226 = dma.done [#allocation12], 1024
    $region105: #{tpu_custom_call.1} parent=1 // pred_fallthru
      _
    // Predicated region
    $region106: #{tpu_custom_call.1} parent=1 // pred_check
      _
    $region107: #{tpu_custom_call.1} parent=1 // pred_check_branch
      %228 = sbr.rel (0) target = $region109
    $region108: #{tpu_custom_call.1} parent=1 // pred_region
      %229 = dma.done [#allocation15], 16
    $region109: #{tpu_custom_call.1} parent=1 // pred_fallthru
      _
    // Predicated region
    $region110: #{tpu_custom_call.1} parent=1 // pred_check
      _
    $region111: #{tpu_custom_call.1} parent=1 // pred_check_branch
      %231 = sbr.rel (0) target = $region113
    $region112: #{tpu_custom_call.1} parent=1 // pred_region
      %232 = dma.done [#allocation15], 1024
    $region113: #{tpu_custom_call.1} parent=1 // pred_fallthru
      _
    // Predicated region
    $region114: #{tpu_custom_call.1} parent=1 // pred_check
      _
    $region115: #{tpu_custom_call.1} parent=1 // pred_check_branch
      %234 = sbr.rel (0) target = $region117
    $region116: #{tpu_custom_call.1} parent=1 // pred_region
      %235 = dma.done [#allocation18], 1024
    $region117: #{tpu_custom_call.1} parent=1 // pred_fallthru
      _
    // Predicated region
    $region118: #{tpu_custom_call.1} parent=1 // pred_check
      _
    $region119: #{tpu_custom_call.1} parent=1 // pred_check_branch
      %237 = sbr.rel (0) target = $region121
    $region120: #{tpu_custom_call.1} parent=1 // pred_region
      %238 = dma.done [#allocation18], 16
    $region121: #{tpu_custom_call.1} parent=1 // pred_fallthru
      _
    // Predicated region
    $region122: #{tpu_custom_call.1} parent=1 // pred_check
      _
    $region123: #{tpu_custom_call.1} parent=1 // pred_check_branch
      %240 = sbr.rel (0) target = $region125
    $region124: #{tpu_custom_call.1} parent=1 // pred_region
      %241 = dma.done [#allocation21], 1024
    $region125: #{tpu_custom_call.1} parent=1 // pred_fallthru
      _
    // Predicated region
    $region126: #{tpu_custom_call.1} parent=1 // pred_check
      _
    $region127: #{tpu_custom_call.1} parent=1 // pred_check_branch
      %243 = sbr.rel (0) target = $region129
    $region128: #{tpu_custom_call.1} parent=1 // pred_region
      %244 = dma.done [#allocation21], 1024
    $region129: #{tpu_custom_call.1} parent=1 // pred_fallthru
      _
    // Predicated region
    $region130: #{tpu_custom_call.1} parent=1 // pred_check
      _
    $region131: #{tpu_custom_call.1} parent=1 // pred_check_branch
      %246 = sbr.rel (0) target = $region133
    $region132: #{tpu_custom_call.1} parent=1 // pred_region
      %247 = dma.done [#allocation24], 16
    $region133: #{tpu_custom_call.1} parent=1 // pred_fallthru
      _
    // Predicated region
    $region134: #{tpu_custom_call.1} parent=1 // pred_check
      _
    $region135: #{tpu_custom_call.1} parent=1 // pred_check_branch
      %249 = sbr.rel (0) target = $region137
    $region136: #{tpu_custom_call.1} parent=1 // pred_region
      %250 = dma.done [#allocation24], 1024
    $region137: #{tpu_custom_call.1} parent=1 // pred_fallthru
      _
    // Predicated region
    $region138: #{tpu_custom_call.1} parent=1 // pred_check
      _
    $region139: #{tpu_custom_call.1} parent=1 // pred_check_branch
      %252 = sbr.rel (0) target = $region141
    $region140: #{tpu_custom_call.1} parent=1 // pred_region
      %253 = dma.done [#allocation27], 1024
    $region141: #{tpu_custom_call.1} parent=1 // pred_fallthru
      _
    // Predicated region
    $region142: #{tpu_custom_call.1} parent=1 // pred_check
      _
    $region143: #{tpu_custom_call.1} parent=1 // pred_check_branch
      %255 = sbr.rel (0) target = $region145
    $region144: #{tpu_custom_call.1} parent=1 // pred_region
      %256 = dma.done [#allocation27], 1024
    $region145: #{tpu_custom_call.1} parent=1 // pred_fallthru
      _
    // Predicated region
    $region146: #{tpu_custom_call.1} parent=1 // pred_check
      _
    $region147: #{tpu_custom_call.1} parent=1 // pred_check_branch
      %258 = sbr.rel (0) target = $region149
    $region148: #{tpu_custom_call.1} parent=1 // pred_region
      %259 = dma.done [#allocation30], 1024
    $region149: #{tpu_custom_call.1} parent=1 // pred_fallthru
      _
    %v261 = vld [vmem:[#allocation11] sm:$0xf]
    %v262 = vld [vmem:[#allocation11 + $0x4] sm:$0xf]
    %v263 = vld [vmem:[#allocation11 + $0x8] sm:$0xf]
    %v264 = vld [vmem:[#allocation11 + $0xc] sm:$0xf]
    %v265 = vld [vmem:[#allocation11 + $0x10] sm:$0xf]
    %v266 = vld [vmem:[#allocation11 + $0x14] sm:$0xf]
    %v267 = vld [vmem:[#allocation11 + $0x18] sm:$0xf]
    %v268 = vld [vmem:[#allocation11 + $0x1c] sm:$0xf]
    %v269 = vld [vmem:[#allocation11 + $0x20] sm:$0xf]
    %v270 = vld [vmem:[#allocation11 + $0x24] sm:$0xf]
    %v271 = vld [vmem:[#allocation11 + $0x28] sm:$0xf]
    %v272 = vld [vmem:[#allocation11 + $0x2c] sm:$0xf]
    %v273 = vld [vmem:[#allocation11 + $0x30] sm:$0xf]
    %v274 = vld [vmem:[#allocation11 + $0x34] sm:$0xf]
    %v275 = vld [vmem:[#allocation11 + $0x38] sm:$0xf]
    %v276 = vld [vmem:[#allocation11 + $0x3c] sm:$0xf]
    %v277 = vld [vmem:[#allocation13] sm:$0xf]
    %v278 = vld [vmem:[#allocation13 + $0x4] sm:$0xf]
    %v279 = vld [vmem:[#allocation13 + $0x8] sm:$0xf]
    %v280 = vld [vmem:[#allocation13 + $0xc] sm:$0xf]
    %v281 = vld [vmem:[#allocation13 + $0x10] sm:$0xf]
    %v282 = vld [vmem:[#allocation13 + $0x14] sm:$0xf]
    %v283 = vld [vmem:[#allocation13 + $0x18] sm:$0xf]
    %v284 = vld [vmem:[#allocation13 + $0x1c] sm:$0xf]
    %v285 = vld [vmem:[#allocation13 + $0x20] sm:$0xf]
    %v286 = vld [vmem:[#allocation13 + $0x24] sm:$0xf]
    %v287 = vld [vmem:[#allocation13 + $0x28] sm:$0xf]
    %v288 = vld [vmem:[#allocation13 + $0x2c] sm:$0xf]
    %v289 = vld [vmem:[#allocation13 + $0x30] sm:$0xf]
    %v290 = vld [vmem:[#allocation13 + $0x34] sm:$0xf]
    %v291 = vld [vmem:[#allocation13 + $0x38] sm:$0xf]
    %v292 = vld [vmem:[#allocation13 + $0x3c] sm:$0xf]
    %v293 = vld [vmem:[#allocation14] sm:$0x1]
    %p295 = scmp.lt.u32.totalorder 64, 8
    %p296 = pneg %p295
    // Predicated region
    $region150: #{tpu_custom_call.1} parent=1 // pred_check
      _
    $region151: #{tpu_custom_call.1} parent=1 // pred_check_branch
      %298 = sbr.rel (%p295) target = $region153
    $region152: #{tpu_custom_call.1} parent=1 // pred_region
      %s314 = sand.u32 64, 7
      %p315 = scmp.eq.s32.totalorder %s314, 0
      // Predicated region
      $region165: #{tpu_custom_call.1} parent=152 // pred_check
        %p316 = pneg %p315
      $region166: #{tpu_custom_call.1} parent=152 // pred_check_branch
        %318 = sbr.rel (%p316) target = $region168
      $region167: #{tpu_custom_call.1} parent=152 // pred_region
        loop: start=0, step=1, limit=1
        $region169: #{tpu_custom_call.1} parent=167 // loop_pre_header
          _
        $region170: #{tpu_custom_call.1} parent=167 // loop_header
          %s320 = sphi 0, %s324
          %p321 = scmp.ge.s32.totalorder %s320, 1
          %s325 = sphi %s0, %s0
          %s326 = sphi [#allocation2], [#allocation2]
        $region171: #{tpu_custom_call.1} parent=167 // loop_header_branch
          %323 = sbr.rel (%p321) target = $region175
        $region172: #{tpu_custom_call.1} parent=167 // loop_body
          %v327 = vld [vmem:[%s325] sm:$0xff]
          %328 = vst [vmem:[%s326] sm:$0xff] %v327
          %v329 = vld [vmem:[%s325 + $0x8] sm:$0xff]
          %330 = vst [vmem:[%s326 + $0x8] sm:$0xff] %v329
          %v331 = vld [vmem:[%s325 + $0x10] sm:$0xff]
          %332 = vst [vmem:[%s326 + $0x10] sm:$0xff] %v331
          %v333 = vld [vmem:[%s325 + $0x18] sm:$0xff]
          %334 = vst [vmem:[%s326 + $0x18] sm:$0xff] %v333
          %v335 = vld [vmem:[%s325 + $0x20] sm:$0xff]
          %336 = vst [vmem:[%s326 + $0x20] sm:$0xff] %v335
          %v337 = vld [vmem:[%s325 + $0x28] sm:$0xff]
          %338 = vst [vmem:[%s326 + $0x28] sm:$0xff] %v337
          %v339 = vld [vmem:[%s325 + $0x30] sm:$0xff]
          %340 = vst [vmem:[%s326 + $0x30] sm:$0xff] %v339
          %v341 = vld [vmem:[%s325 + $0x38] sm:$0xff]
          %342 = vst [vmem:[%s326 + $0x38] sm:$0xff] %v341
        $region173: #{tpu_custom_call.1} parent=167 // loop_footer
          %s324 = sadd.s32 1, %s320
        $region174: #{tpu_custom_call.1} parent=167 // loop_footer_branch
          %319 = sbr.rel target = $region170
        $region175: #{tpu_custom_call.1} parent=167 // loop_exit
          _
      $region168: #{tpu_custom_call.1} parent=152 // pred_fallthru
        _
      %p343 = pneg %p315
      // Predicated region
      $region176: #{tpu_custom_call.1} parent=152 // pred_check
        _
      $region177: #{tpu_custom_call.1} parent=152 // pred_check_branch
        %345 = sbr.rel (%p315) target = $region179
      $region178: #{tpu_custom_call.1} parent=152 // pred_region
        %s346 = sand.u32 64, 7
      $region179: #{tpu_custom_call.1} parent=152 // pred_fallthru
        _
    $region153: #{tpu_custom_call.1} parent=1 // pred_fallthru
      _
    // Predicated region
    $region154: #{tpu_custom_call.1} parent=1 // pred_check
      %p299 = pneg %p295
    $region155: #{tpu_custom_call.1} parent=1 // pred_check_branch
      %301 = sbr.rel (%p299) target = $region157
    $region156: #{tpu_custom_call.1} parent=1 // pred_region
      %s302 = sshll.u32 1, 64
      %s303 = ssub.s32 %s302, 1
      loop: start=0, step=1, limit=1
      $region158: #{tpu_custom_call.1} parent=156 // loop_pre_header
        _
      $region159: #{tpu_custom_call.1} parent=156 // loop_header
        %s305 = sphi 0, %s309
        %p306 = scmp.ge.s32.totalorder %s305, 1
        %s310 = sphi %s0, %s0
        %s311 = sphi [#allocation2], [#allocation2]
      $region160: #{tpu_custom_call.1} parent=156 // loop_header_branch
        %308 = sbr.rel (%p306) target = $region164
      $region161: #{tpu_custom_call.1} parent=156 // loop_body
        %v312 = vld [vmem:[%s310] sm:%s303]
        %313 = vst [vmem:[%s311] sm:%s303] %v312
      $region162: #{tpu_custom_call.1} parent=156 // loop_footer
        %s309 = sadd.s32 1, %s305
      $region163: #{tpu_custom_call.1} parent=156 // loop_footer_branch
        %304 = sbr.rel target = $region159
      $region164: #{tpu_custom_call.1} parent=156 // loop_exit
        _
    $region157: #{tpu_custom_call.1} parent=1 // pred_fallthru
      _
    // Predicated region
    $region180: #{tpu_custom_call.1} parent=1 // pred_check
      _
    $region181: #{tpu_custom_call.1} parent=1 // pred_check_branch
      %349 = sbr.rel (0) target = $region183
    $region182: #{tpu_custom_call.1} parent=1 // pred_region
      %350 = vsyncadd [#allocation3], 1024
    $region183: #{tpu_custom_call.1} parent=1 // pred_fallthru
      _
    %s351 = smul.u32 4, 16
    %s352 = smul.u32 %s351, 1
    %s353 = sshll.u32 %s352, 4
    %354 = dma.done [#allocation3], %s353
    %v355 = vld [vmem:[%s1] sm:$0xf]
    %v356 = vld [vmem:[%s1 + $0x4] sm:$0xf]
    %v357 = vld [vmem:[%s1 + $0x8] sm:$0xf]
    %v358 = vld [vmem:[%s1 + $0xc] sm:$0xf]
    %v359 = vld [vmem:[%s1 + $0x10] sm:$0xf]
    %v360 = vld [vmem:[%s1 + $0x14] sm:$0xf]
    %v361 = vld [vmem:[%s1 + $0x18] sm:$0xf]
    %v362 = vld [vmem:[%s1 + $0x1c] sm:$0xf]
    %v363 = vld [vmem:[%s1 + $0x20] sm:$0xf]
    %v364 = vld [vmem:[%s1 + $0x24] sm:$0xf]
    %v365 = vld [vmem:[%s1 + $0x28] sm:$0xf]
    %v366 = vld [vmem:[%s1 + $0x2c] sm:$0xf]
    %v367 = vld [vmem:[%s1 + $0x30] sm:$0xf]
    %v368 = vld [vmem:[%s1 + $0x34] sm:$0xf]
    %v369 = vld [vmem:[%s1 + $0x38] sm:$0xf]
    %v370 = vld [vmem:[%s1 + $0x3c] sm:$0xf]
    %v371 = vld [vmem:[#allocation2] sm:$0xf]
    %v372 = vld [vmem:[#allocation2 + $0x4] sm:$0xf]
    %v373 = vld [vmem:[#allocation2 + $0x8] sm:$0xf]
    %v374 = vld [vmem:[#allocation2 + $0xc] sm:$0xf]
    %v375 = vld [vmem:[#allocation2 + $0x10] sm:$0xf]
    %v376 = vld [vmem:[#allocation2 + $0x14] sm:$0xf]
    %v377 = vld [vmem:[#allocation2 + $0x18] sm:$0xf]
    %v378 = vld [vmem:[#allocation2 + $0x1c] sm:$0xf]
    %v379 = vld [vmem:[#allocation2 + $0x20] sm:$0xf]
    %v380 = vld [vmem:[#allocation2 + $0x24] sm:$0xf]
    %v381 = vld [vmem:[#allocation2 + $0x28] sm:$0xf]
    %v382 = vld [vmem:[#allocation2 + $0x2c] sm:$0xf]
    %v383 = vld [vmem:[#allocation2 + $0x30] sm:$0xf]
    %v384 = vld [vmem:[#allocation2 + $0x34] sm:$0xf]
    %v385 = vld [vmem:[#allocation2 + $0x38] sm:$0xf]
    %v386 = vld [vmem:[#allocation2 + $0x3c] sm:$0xf]
    %v403 = vunpack.c.l.b16 %v371
    %v404 = vunpack.c.l.b16 %v372
    %v405 = vunpack.c.l.b16 %v373
    %v406 = vunpack.c.l.b16 %v374
    %v407 = vunpack.c.l.b16 %v375
    %v408 = vunpack.c.l.b16 %v376
    %v409 = vunpack.c.l.b16 %v377
    %v410 = vunpack.c.l.b16 %v378
    %v411 = vunpack.c.l.b16 %v379
    %v412 = vunpack.c.l.b16 %v380
    %v413 = vunpack.c.l.b16 %v381
    %v414 = vunpack.c.l.b16 %v382
    %v415 = vunpack.c.l.b16 %v383
    %v416 = vunpack.c.l.b16 %v384
    %v417 = vunpack.c.l.b16 %v385
    %v418 = vunpack.c.l.b16 %v386
    %v419 = vpack.c.b16 %v404, %v403
    %v420 = vpack.c.b16 %v406, %v405
    %v421 = vpack.c.b16 %v408, %v407
    %v422 = vpack.c.b16 %v410, %v409
    %v423 = vpack.c.b16 %v412, %v411
    %v424 = vpack.c.b16 %v414, %v413
    %v425 = vpack.c.b16 %v416, %v415
    %v426 = vpack.c.b16 %v418, %v417
    %v451 = vunpack.c.l.b16 %v355
    %v452 = vunpack.c.l.b16 %v356
    %v453 = vunpack.c.l.b16 %v357
    %v454 = vunpack.c.l.b16 %v358
    %v455 = vunpack.c.l.b16 %v359
    %v456 = vunpack.c.l.b16 %v360
    %v457 = vunpack.c.l.b16 %v361
    %v458 = vunpack.c.l.b16 %v362
    %v459 = vunpack.c.l.b16 %v363
    %v460 = vunpack.c.l.b16 %v364
    %v461 = vunpack.c.l.b16 %v365
    %v462 = vunpack.c.l.b16 %v366
    %v463 = vunpack.c.l.b16 %v367
    %v464 = vunpack.c.l.b16 %v368
    %v465 = vunpack.c.l.b16 %v369
    %v466 = vunpack.c.l.b16 %v370
    %v467 = vpack.c.b16 %v452, %v451
    %v468 = vpack.c.b16 %v454, %v453
    %v469 = vpack.c.b16 %v456, %v455
    %v470 = vpack.c.b16 %v458, %v457
    %v471 = vpack.c.b16 %v460, %v459
    %v472 = vpack.c.b16 %v462, %v461
    %v473 = vpack.c.b16 %v464, %v463
    %v474 = vpack.c.b16 %v466, %v465
    %483 = vmatprep.subr.bf16.mxu0 0
    %484 = vmatpush1.bf16.msra.mxu0 %v474
    %485 = vmatprep.subr.bf16.mxu0 0
    %486 = vmatpush1.bf16.msra.mxu0 %v473
    %487 = vmatprep.subr.bf16.mxu0 0
    %488 = vmatpush1.bf16.msra.mxu0 %v472
    %489 = vmatprep.subr.bf16.mxu0 0
    %490 = vmatpush1.bf16.msra.mxu0 %v471
    %491 = vmatprep.subr.bf16.mxu0 0
    %492 = vmatpush1.bf16.msra.mxu0 %v470
    %493 = vmatprep.subr.bf16.mxu0 0
    %494 = vmatpush1.bf16.msra.mxu0 %v469
    %495 = vmatprep.subr.bf16.mxu0 0
    %496 = vmatpush1.bf16.msra.mxu0 %v468
    %497 = vmatprep.subr.bf16.mxu0 0
    %498 = vmatpush1.bf16.msra.mxu0 %v467
    %499 = vmatprep.subr.bf16.mxu0 0
    %500 = vmatpush2.bf16.msra.mxu0 0
    %501 = vmatprep.subr.bf16.mxu0 0
    %502 = vmatpush2.bf16.msra.mxu0 0
    %503 = vmatprep.subr.bf16.mxu0 0
    %504 = vmatpush2.bf16.msra.mxu0 0
    %505 = vmatprep.subr.bf16.mxu0 0
    %506 = vmatpush2.bf16.msra.mxu0 0
    %507 = vmatprep.subr.bf16.mxu0 0
    %508 = vmatpush2.bf16.msra.mxu0 0
    %509 = vmatprep.subr.bf16.mxu0 0
    %510 = vmatpush2.bf16.msra.mxu0 0
    %511 = vmatprep.subr.bf16.mxu0 0
    %512 = vmatpush2.bf16.msra.mxu0 0
    %513 = vmatprep.subr.bf16.mxu0 0
    %514 = vmatpush2.bf16.msra.mxu0 0
    %515 = vmatprep.mubr.bf16.mxu0 0
    %516 = vmatmul.mubr.bf16.gmra.mxu0 %v419
    %v517 = vpop.f32.mrf.mxu0
    %v518 = vadd.f32 0.0, %v517
    %v519 = vpop.f32.mrf.mxu0
    %v520 = vpop.f32.mrf.mxu0
    %v521 = vadd.f32 0.0, %v520
    %v522 = vpop.f32.mrf.mxu0
    %523 = vmatprep.mubr.bf16.mxu0 0
    %524 = vmatmul.mubr.bf16.gmra.mxu0 %v420
    %v525 = vpop.f32.mrf.mxu0
    %v526 = vadd.f32 0.0, %v525
    %v527 = vpop.f32.mrf.mxu0
    %v528 = vpop.f32.mrf.mxu0
    %v529 = vadd.f32 0.0, %v528
    %v530 = vpop.f32.mrf.mxu0
    %531 = vmatprep.mubr.bf16.mxu0 0
    %532 = vmatmul.mubr.bf16.gmra.mxu0 %v421
    %v533 = vpop.f32.mrf.mxu0
    %v534 = vadd.f32 0.0, %v533
    %v535 = vpop.f32.mrf.mxu0
    %v536 = vpop.f32.mrf.mxu0
    %v537 = vadd.f32 0.0, %v536
    %v538 = vpop.f32.mrf.mxu0
    %539 = vmatprep.mubr.bf16.mxu0 0
    %540 = vmatmul.mubr.bf16.gmra.mxu0 %v422
    %v541 = vpop.f32.mrf.mxu0
    %v542 = vadd.f32 0.0, %v541
    %v543 = vpop.f32.mrf.mxu0
    %v544 = vpop.f32.mrf.mxu0
    %v545 = vadd.f32 0.0, %v544
    %v546 = vpop.f32.mrf.mxu0
    %547 = vmatprep.mubr.bf16.mxu0 0
    %548 = vmatmul.mubr.bf16.gmra.mxu0 %v423
    %v549 = vpop.f32.mrf.mxu0
    %v550 = vadd.f32 0.0, %v549
    %v551 = vpop.f32.mrf.mxu0
    %v552 = vpop.f32.mrf.mxu0
    %v553 = vadd.f32 0.0, %v552
    %v554 = vpop.f32.mrf.mxu0
    %555 = vmatprep.mubr.bf16.mxu0 0
    %556 = vmatmul.mubr.bf16.gmra.mxu0 %v424
    %v557 = vpop.f32.mrf.mxu0
    %v558 = vadd.f32 0.0, %v557
    %v559 = vpop.f32.mrf.mxu0
    %v560 = vpop.f32.mrf.mxu0
    %v561 = vadd.f32 0.0, %v560
    %v562 = vpop.f32.mrf.mxu0
    %563 = vmatprep.mubr.bf16.mxu0 0
    %564 = vmatmul.mubr.bf16.gmra.mxu0 %v425
    %v565 = vpop.f32.mrf.mxu0
    %v566 = vadd.f32 0.0, %v565
    %v567 = vpop.f32.mrf.mxu0
    %v568 = vpop.f32.mrf.mxu0
    %v569 = vadd.f32 0.0, %v568
    %v570 = vpop.f32.mrf.mxu0
    %571 = vmatprep.mubr.bf16.mxu0 0
    %572 = vmatmul.mubr.bf16.gmra.mxu0 %v426
    %v573 = vpop.f32.mrf.mxu0
    %v574 = vadd.f32 0.0, %v573
    %v575 = vpop.f32.mrf.mxu0
    %v576 = vpop.f32.mrf.mxu0
    %v577 = vadd.f32 0.0, %v576
    %v578 = vpop.f32.mrf.mxu0
    %579 = vdwg.mxu0
    %v580 = vpack.c.bf16 %v521, %v518
    %v581 = vpack.c.bf16 %v529, %v526
    %v582 = vpack.c.bf16 %v537, %v534
    %v583 = vpack.c.bf16 %v545, %v542
    %v584 = vpack.c.bf16 %v553, %v550
    %v585 = vpack.c.bf16 %v561, %v558
    %v586 = vpack.c.bf16 %v569, %v566
    %v587 = vpack.c.bf16 %v577, %v574
    %v604 = vunpack.c.l.b16 %v277
    %v605 = vunpack.c.l.b16 %v278
    %v606 = vunpack.c.l.b16 %v279
    %v607 = vunpack.c.l.b16 %v280
    %v608 = vunpack.c.l.b16 %v281
    %v609 = vunpack.c.l.b16 %v282
    %v610 = vunpack.c.l.b16 %v283
    %v611 = vunpack.c.l.b16 %v284
    %v612 = vunpack.c.l.b16 %v285
    %v613 = vunpack.c.l.b16 %v286
    %v614 = vunpack.c.l.b16 %v287
    %v615 = vunpack.c.l.b16 %v288
    %v616 = vunpack.c.l.b16 %v289
    %v617 = vunpack.c.l.b16 %v290
    %v618 = vunpack.c.l.b16 %v291
    %v619 = vunpack.c.l.b16 %v292
    %v620 = vpack.c.b16 %v605, %v604
    %v621 = vpack.c.b16 %v607, %v606
    %v622 = vpack.c.b16 %v609, %v608
    %v623 = vpack.c.b16 %v611, %v610
    %v624 = vpack.c.b16 %v613, %v612
    %v625 = vpack.c.b16 %v615, %v614
    %v626 = vpack.c.b16 %v617, %v616
    %v627 = vpack.c.b16 %v619, %v618
    %636 = vmatprep.subr.bf16.mxu0 0
    %637 = vmatpush1.bf16.msra.mxu0 %v627
    %638 = vmatprep.subr.bf16.mxu0 0
    %639 = vmatpush1.bf16.msra.mxu0 %v626
    %640 = vmatprep.subr.bf16.mxu0 0
    %641 = vmatpush1.bf16.msra.mxu0 %v625
    %642 = vmatprep.subr.bf16.mxu0 0
    %643 = vmatpush1.bf16.msra.mxu0 %v624
    %644 = vmatprep.subr.bf16.mxu0 0
    %645 = vmatpush1.bf16.msra.mxu0 %v623
    %646 = vmatprep.subr.bf16.mxu0 0
    %647 = vmatpush1.bf16.msra.mxu0 %v622
    %648 = vmatprep.subr.bf16.mxu0 0
    %649 = vmatpush1.bf16.msra.mxu0 %v621
    %650 = vmatprep.subr.bf16.mxu0 0
    %651 = vmatpush1.bf16.msra.mxu0 %v620
    %652 = vmatprep.subr.bf16.mxu0 0
    %653 = vmatpush2.bf16.msra.mxu0 0
    %654 = vmatprep.subr.bf16.mxu0 0
    %655 = vmatpush2.bf16.msra.mxu0 0
    %656 = vmatprep.subr.bf16.mxu0 0
    %657 = vmatpush2.bf16.msra.mxu0 0
    %658 = vmatprep.subr.bf16.mxu0 0
    %659 = vmatpush2.bf16.msra.mxu0 0
    %660 = vmatprep.subr.bf16.mxu0 0
    %661 = vmatpush2.bf16.msra.mxu0 0
    %662 = vmatprep.subr.bf16.mxu0 0
    %663 = vmatpush2.bf16.msra.mxu0 0
    %664 = vmatprep.subr.bf16.mxu0 0
    %665 = vmatpush2.bf16.msra.mxu0 0
    %666 = vmatprep.subr.bf16.mxu0 0
    %667 = vmatpush2.bf16.msra.mxu0 0
    %668 = vmatprep.mubr.bf16.mxu0 0
    %669 = vmatmul.mubr.bf16.gmra.mxu0 %v467
    %v670 = vpop.f32.mrf.mxu0
    %v671 = vadd.f32 0.0, %v670
    %v672 = vpop.f32.mrf.mxu0
    %v673 = vpop.f32.mrf.mxu0
    %v674 = vadd.f32 0.0, %v673
    %v675 = vpop.f32.mrf.mxu0
    %676 = vmatprep.mubr.bf16.mxu0 0
    %677 = vmatmul.mubr.bf16.gmra.mxu0 %v468
    %v678 = vpop.f32.mrf.mxu0
    %v679 = vadd.f32 0.0, %v678
    %v680 = vpop.f32.mrf.mxu0
    %v681 = vpop.f32.mrf.mxu0
    %v682 = vadd.f32 0.0, %v681
    %v683 = vpop.f32.mrf.mxu0
    %684 = vmatprep.mubr.bf16.mxu0 0
    %685 = vmatmul.mubr.bf16.gmra.mxu0 %v469
    %v686 = vpop.f32.mrf.mxu0
    %v687 = vadd.f32 0.0, %v686
    %v688 = vpop.f32.mrf.mxu0
    %v689 = vpop.f32.mrf.mxu0
    %v690 = vadd.f32 0.0, %v689
    %v691 = vpop.f32.mrf.mxu0
    %692 = vmatprep.mubr.bf16.mxu0 0
    %693 = vmatmul.mubr.bf16.gmra.mxu0 %v470
    %v694 = vpop.f32.mrf.mxu0
    %v695 = vadd.f32 0.0, %v694
    %v696 = vpop.f32.mrf.mxu0
    %v697 = vpop.f32.mrf.mxu0
    %v698 = vadd.f32 0.0, %v697
    %v699 = vpop.f32.mrf.mxu0
    %700 = vmatprep.mubr.bf16.mxu0 0
    %701 = vmatmul.mubr.bf16.gmra.mxu0 %v471
    %v702 = vpop.f32.mrf.mxu0
    %v703 = vadd.f32 0.0, %v702
    %v704 = vpop.f32.mrf.mxu0
    %v705 = vpop.f32.mrf.mxu0
    %v706 = vadd.f32 0.0, %v705
    %v707 = vpop.f32.mrf.mxu0
    %708 = vmatprep.mubr.bf16.mxu0 0
    %709 = vmatmul.mubr.bf16.gmra.mxu0 %v472
    %v710 = vpop.f32.mrf.mxu0
    %v711 = vadd.f32 0.0, %v710
    %v712 = vpop.f32.mrf.mxu0
    %v713 = vpop.f32.mrf.mxu0
    %v714 = vadd.f32 0.0, %v713
    %v715 = vpop.f32.mrf.mxu0
    %716 = vmatprep.mubr.bf16.mxu0 0
    %717 = vmatmul.mubr.bf16.gmra.mxu0 %v473
    %v718 = vpop.f32.mrf.mxu0
    %v719 = vadd.f32 0.0, %v718
    %v720 = vpop.f32.mrf.mxu0
    %v721 = vpop.f32.mrf.mxu0
    %v722 = vadd.f32 0.0, %v721
    %v723 = vpop.f32.mrf.mxu0
    %724 = vmatprep.mubr.bf16.mxu0 0
    %725 = vmatmul.mubr.bf16.gmra.mxu0 %v474
    %v726 = vpop.f32.mrf.mxu0
    %v727 = vadd.f32 0.0, %v726
    %v728 = vpop.f32.mrf.mxu0
    %v729 = vpop.f32.mrf.mxu0
    %v730 = vadd.f32 0.0, %v729
    %v731 = vpop.f32.mrf.mxu0
    %732 = vdwg.mxu0
    %v749 = vunpack.c.l.b16 %v261
    %v750 = vunpack.c.l.b16 %v262
    %v751 = vunpack.c.l.b16 %v263
    %v752 = vunpack.c.l.b16 %v264
    %v753 = vunpack.c.l.b16 %v265
    %v754 = vunpack.c.l.b16 %v266
    %v755 = vunpack.c.l.b16 %v267
    %v756 = vunpack.c.l.b16 %v268
    %v757 = vunpack.c.l.b16 %v269
    %v758 = vunpack.c.l.b16 %v270
    %v759 = vunpack.c.l.b16 %v271
    %v760 = vunpack.c.l.b16 %v272
    %v761 = vunpack.c.l.b16 %v273
    %v762 = vunpack.c.l.b16 %v274
    %v763 = vunpack.c.l.b16 %v275
    %v764 = vunpack.c.l.b16 %v276
    %v765 = vpack.c.b16 %v750, %v749
    %v766 = vpack.c.b16 %v752, %v751
    %v767 = vpack.c.b16 %v754, %v753
    %v768 = vpack.c.b16 %v756, %v755
    %v769 = vpack.c.b16 %v758, %v757
    %v770 = vpack.c.b16 %v760, %v759
    %v771 = vpack.c.b16 %v762, %v761
    %v772 = vpack.c.b16 %v764, %v763
    %781 = vmatprep.subr.bf16.mxu0 0
    %782 = vmatpush1.bf16.msra.mxu0 %v772
    %783 = vmatprep.subr.bf16.mxu0 0
    %784 = vmatpush1.bf16.msra.mxu0 %v771
    %785 = vmatprep.subr.bf16.mxu0 0
    %786 = vmatpush1.bf16.msra.mxu0 %v770
    %787 = vmatprep.subr.bf16.mxu0 0
    %788 = vmatpush1.bf16.msra.mxu0 %v769
    %789 = vmatprep.subr.bf16.mxu0 0
    %790 = vmatpush1.bf16.msra.mxu0 %v768
    %791 = vmatprep.subr.bf16.mxu0 0
    %792 = vmatpush1.bf16.msra.mxu0 %v767
    %793 = vmatprep.subr.bf16.mxu0 0
    %794 = vmatpush1.bf16.msra.mxu0 %v766
    %795 = vmatprep.subr.bf16.mxu0 0
    %796 = vmatpush1.bf16.msra.mxu0 %v765
    %797 = vmatprep.subr.bf16.mxu0 0
    %798 = vmatpush2.bf16.msra.mxu0 0
    %799 = vmatprep.subr.bf16.mxu0 0
    %800 = vmatpush2.bf16.msra.mxu0 0
    %801 = vmatprep.subr.bf16.mxu0 0
    %802 = vmatpush2.bf16.msra.mxu0 0
    %803 = vmatprep.subr.bf16.mxu0 0
    %804 = vmatpush2.bf16.msra.mxu0 0
    %805 = vmatprep.subr.bf16.mxu0 0
    %806 = vmatpush2.bf16.msra.mxu0 0
    %807 = vmatprep.subr.bf16.mxu0 0
    %808 = vmatpush2.bf16.msra.mxu0 0
    %809 = vmatprep.subr.bf16.mxu0 0
    %810 = vmatpush2.bf16.msra.mxu0 0
    %811 = vmatprep.subr.bf16.mxu0 0
    %812 = vmatpush2.bf16.msra.mxu0 0
    %813 = vmatprep.mubr.bf16.mxu0 0
    %814 = vmatmul.mubr.bf16.gmra.mxu0 %v580
    %v815 = vpop.f32.mrf.mxu0
    %v816 = vadd.f32 %v671, %v815
    %v817 = vpop.f32.mrf.mxu0
    %v818 = vpop.f32.mrf.mxu0
    %v819 = vadd.f32 %v674, %v818
    %v820 = vpop.f32.mrf.mxu0
    %821 = vmatprep.mubr.bf16.mxu0 0
    %822 = vmatmul.mubr.bf16.gmra.mxu0 %v581
    %v823 = vpop.f32.mrf.mxu0
    %v824 = vadd.f32 %v679, %v823
    %v825 = vpop.f32.mrf.mxu0
    %v826 = vpop.f32.mrf.mxu0
    %v827 = vadd.f32 %v682, %v826
    %v828 = vpop.f32.mrf.mxu0
    %829 = vmatprep.mubr.bf16.mxu0 0
    %830 = vmatmul.mubr.bf16.gmra.mxu0 %v582
    %v831 = vpop.f32.mrf.mxu0
    %v832 = vadd.f32 %v687, %v831
    %v833 = vpop.f32.mrf.mxu0
    %v834 = vpop.f32.mrf.mxu0
    %v835 = vadd.f32 %v690, %v834
    %v836 = vpop.f32.mrf.mxu0
    %837 = vmatprep.mubr.bf16.mxu0 0
    %838 = vmatmul.mubr.bf16.gmra.mxu0 %v583
    %v839 = vpop.f32.mrf.mxu0
    %v840 = vadd.f32 %v695, %v839
    %v841 = vpop.f32.mrf.mxu0
    %v842 = vpop.f32.mrf.mxu0
    %v843 = vadd.f32 %v698, %v842
    %v844 = vpop.f32.mrf.mxu0
    %845 = vmatprep.mubr.bf16.mxu0 0
    %846 = vmatmul.mubr.bf16.gmra.mxu0 %v584
    %v847 = vpop.f32.mrf.mxu0
    %v848 = vadd.f32 %v703, %v847
    %v849 = vpop.f32.mrf.mxu0
    %v850 = vpop.f32.mrf.mxu0
    %v851 = vadd.f32 %v706, %v850
    %v852 = vpop.f32.mrf.mxu0
    %853 = vmatprep.mubr.bf16.mxu0 0
    %854 = vmatmul.mubr.bf16.gmra.mxu0 %v585
    %v855 = vpop.f32.mrf.mxu0
    %v856 = vadd.f32 %v711, %v855
    %v857 = vpop.f32.mrf.mxu0
    %v858 = vpop.f32.mrf.mxu0
    %v859 = vadd.f32 %v714, %v858
    %v860 = vpop.f32.mrf.mxu0
    %861 = vmatprep.mubr.bf16.mxu0 0
    %862 = vmatmul.mubr.bf16.gmra.mxu0 %v586
    %v863 = vpop.f32.mrf.mxu0
    %v864 = vadd.f32 %v719, %v863
    %v865 = vpop.f32.mrf.mxu0
    %v866 = vpop.f32.mrf.mxu0
    %v867 = vadd.f32 %v722, %v866
    %v868 = vpop.f32.mrf.mxu0
    %869 = vmatprep.mubr.bf16.mxu0 0
    %870 = vmatmul.mubr.bf16.gmra.mxu0 %v587
    %v871 = vpop.f32.mrf.mxu0
    %v872 = vadd.f32 %v727, %v871
    %v873 = vpop.f32.mrf.mxu0
    %v874 = vpop.f32.mrf.mxu0
    %v875 = vadd.f32 %v730, %v874
    %v876 = vpop.f32.mrf.mxu0
    %877 = vdwg.mxu0
    %v879 = vlaneseq
    %v880 = vshrl.u32 %v879, 7
    %v881 = vsub.s32 0, %v880
    %v882 = vrot.slane %v293, %v881
    %v884 = vadd.f32 %v816, %v882
    %v885 = vadd.f32 %v819, %v882
    %v886 = vadd.f32 %v824, %v882
    %v887 = vadd.f32 %v827, %v882
    %v888 = vadd.f32 %v832, %v882
    %v889 = vadd.f32 %v835, %v882
    %v890 = vadd.f32 %v840, %v882
    %v891 = vadd.f32 %v843, %v882
    %v892 = vadd.f32 %v848, %v882
    %v893 = vadd.f32 %v851, %v882
    %v894 = vadd.f32 %v856, %v882
    %v895 = vadd.f32 %v859, %v882
    %v896 = vadd.f32 %v864, %v882
    %v897 = vadd.f32 %v867, %v882
    %v898 = vadd.f32 %v872, %v882
    %v899 = vadd.f32 %v875, %v882
    %v900 = vmax.f32 %v884, 0.0
    %v901 = vmax.f32 %v885, 0.0
    %v902 = vmax.f32 %v886, 0.0
    %v903 = vmax.f32 %v887, 0.0
    %v904 = vmax.f32 %v888, 0.0
    %v905 = vmax.f32 %v889, 0.0
    %v906 = vmax.f32 %v890, 0.0
    %v907 = vmax.f32 %v891, 0.0
    %v908 = vmax.f32 %v892, 0.0
    %v909 = vmax.f32 %v893, 0.0
    %v910 = vmax.f32 %v894, 0.0
    %v911 = vmax.f32 %v895, 0.0
    %v912 = vmax.f32 %v896, 0.0
    %v913 = vmax.f32 %v897, 0.0
    %v914 = vmax.f32 %v898, 0.0
    %v915 = vmax.f32 %v899, 0.0
    %v916 = vpack.c.bf16 %v901, %v900
    %v917 = vpack.c.bf16 %v903, %v902
    %v918 = vpack.c.bf16 %v905, %v904
    %v919 = vpack.c.bf16 %v907, %v906
    %v920 = vpack.c.bf16 %v909, %v908
    %v921 = vpack.c.bf16 %v911, %v910
    %v922 = vpack.c.bf16 %v913, %v912
    %v923 = vpack.c.bf16 %v915, %v914
    %v932 = vunpack.c.l.b16 %v916
    %v933 = vunpack.c.h.b16 %v916
    %v934 = vunpack.c.l.b16 %v917
    %v935 = vunpack.c.h.b16 %v917
    %v936 = vunpack.c.l.b16 %v918
    %v937 = vunpack.c.h.b16 %v918
    %v938 = vunpack.c.l.b16 %v919
    %v939 = vunpack.c.h.b16 %v919
    %v940 = vunpack.c.l.b16 %v920
    %v941 = vunpack.c.h.b16 %v920
    %v942 = vunpack.c.l.b16 %v921
    %v943 = vunpack.c.h.b16 %v921
    %v944 = vunpack.c.l.b16 %v922
    %v945 = vunpack.c.h.b16 %v922
    %v946 = vunpack.c.l.b16 %v923
    %v947 = vunpack.c.h.b16 %v923
    %v948 = vpack.c.b16 %v932, %v932
    %v949 = vpack.c.b16 %v933, %v933
    %v950 = vpack.c.b16 %v934, %v934
    %v951 = vpack.c.b16 %v935, %v935
    %v952 = vpack.c.b16 %v936, %v936
    %v953 = vpack.c.b16 %v937, %v937
    %v954 = vpack.c.b16 %v938, %v938
    %v955 = vpack.c.b16 %v939, %v939
    %v956 = vpack.c.b16 %v940, %v940
    %v957 = vpack.c.b16 %v941, %v941
    %v958 = vpack.c.b16 %v942, %v942
    %v959 = vpack.c.b16 %v943, %v943
    %v960 = vpack.c.b16 %v944, %v944
    %v961 = vpack.c.b16 %v945, %v945
    %v962 = vpack.c.b16 %v946, %v946
    %v963 = vpack.c.b16 %v947, %v947
    %980 = vst [vmem:[#allocation4] sm:$0xf] %v948
    %981 = vst [vmem:[#allocation4 + $0x4] sm:$0xf] %v949
    %982 = vst [vmem:[#allocation4 + $0x8] sm:$0xf] %v950
    %983 = vst [vmem:[#allocation4 + $0xc] sm:$0xf] %v951
    %984 = vst [vmem:[#allocation4 + $0x10] sm:$0xf] %v952
    %985 = vst [vmem:[#allocation4 + $0x14] sm:$0xf] %v953
    %986 = vst [vmem:[#allocation4 + $0x18] sm:$0xf] %v954
    %987 = vst [vmem:[#allocation4 + $0x1c] sm:$0xf] %v955
    %988 = vst [vmem:[#allocation4 + $0x20] sm:$0xf] %v956
    %989 = vst [vmem:[#allocation4 + $0x24] sm:$0xf] %v957
    %990 = vst [vmem:[#allocation4 + $0x28] sm:$0xf] %v958
    %991 = vst [vmem:[#allocation4 + $0x2c] sm:$0xf] %v959
    %992 = vst [vmem:[#allocation4 + $0x30] sm:$0xf] %v960
    %993 = vst [vmem:[#allocation4 + $0x34] sm:$0xf] %v961
    %994 = vst [vmem:[#allocation4 + $0x38] sm:$0xf] %v962
    %995 = vst [vmem:[#allocation4 + $0x3c] sm:$0xf] %v963
    %v996 = vld [vmem:[#allocation16] sm:$0xf]
    %v997 = vld [vmem:[#allocation16 + $0x4] sm:$0xf]
    %v998 = vld [vmem:[#allocation16 + $0x8] sm:$0xf]
    %v999 = vld [vmem:[#allocation16 + $0xc] sm:$0xf]
    %v1000 = vld [vmem:[#allocation16 + $0x10] sm:$0xf]
    %v1001 = vld [vmem:[#allocation16 + $0x14] sm:$0xf]
    %v1002 = vld [vmem:[#allocation16 + $0x18] sm:$0xf]
    %v1003 = vld [vmem:[#allocation16 + $0x1c] sm:$0xf]
    %v1004 = vld [vmem:[#allocation16 + $0x20] sm:$0xf]
    %v1005 = vld [vmem:[#allocation16 + $0x24] sm:$0xf]
    %v1006 = vld [vmem:[#allocation16 + $0x28] sm:$0xf]
    %v1007 = vld [vmem:[#allocation16 + $0x2c] sm:$0xf]
    %v1008 = vld [vmem:[#allocation16 + $0x30] sm:$0xf]
    %v1009 = vld [vmem:[#allocation16 + $0x34] sm:$0xf]
    %v1010 = vld [vmem:[#allocation16 + $0x38] sm:$0xf]
    %v1011 = vld [vmem:[#allocation16 + $0x3c] sm:$0xf]
    %v1012 = vld [vmem:[#allocation17] sm:$0xf]
    %v1013 = vld [vmem:[#allocation17 + $0x4] sm:$0xf]
    %v1014 = vld [vmem:[#allocation17 + $0x8] sm:$0xf]
    %v1015 = vld [vmem:[#allocation17 + $0xc] sm:$0xf]
    %v1016 = vld [vmem:[#allocation17 + $0x10] sm:$0xf]
    %v1017 = vld [vmem:[#allocation17 + $0x14] sm:$0xf]
    %v1018 = vld [vmem:[#allocation17 + $0x18] sm:$0xf]
    %v1019 = vld [vmem:[#allocation17 + $0x1c] sm:$0xf]
    %v1020 = vld [vmem:[#allocation17 + $0x20] sm:$0xf]
    %v1021 = vld [vmem:[#allocation17 + $0x24] sm:$0xf]
    %v1022 = vld [vmem:[#allocation17 + $0x28] sm:$0xf]
    %v1023 = vld [vmem:[#allocation17 + $0x2c] sm:$0xf]
    %v1024 = vld [vmem:[#allocation17 + $0x30] sm:$0xf]
    %v1025 = vld [vmem:[#allocation17 + $0x34] sm:$0xf]
    %v1026 = vld [vmem:[#allocation17 + $0x38] sm:$0xf]
    %v1027 = vld [vmem:[#allocation17 + $0x3c] sm:$0xf]
    %v1028 = vld [vmem:[#allocation19] sm:$0x1]
    %p1030 = scmp.lt.u32.totalorder 64, 8
    %p1031 = pneg %p1030
    // Predicated region
    $region184: #{tpu_custom_call.1} parent=1 // pred_check
      _
    $region185: #{tpu_custom_call.1} parent=1 // pred_check_branch
      %1033 = sbr.rel (%p1030) target = $region187
    $region186: #{tpu_custom_call.1} parent=1 // pred_region
      %s1049 = sand.u32 64, 7
      %p1050 = scmp.eq.s32.totalorder %s1049, 0
      // Predicated region
      $region199: #{tpu_custom_call.1} parent=186 // pred_check
        %p1051 = pneg %p1050
      $region200: #{tpu_custom_call.1} parent=186 // pred_check_branch
        %1053 = sbr.rel (%p1051) target = $region202
      $region201: #{tpu_custom_call.1} parent=186 // pred_region
        loop: start=0, step=1, limit=1
        $region203: #{tpu_custom_call.1} parent=201 // loop_pre_header
          _
        $region204: #{tpu_custom_call.1} parent=201 // loop_header
          %s1055 = sphi 0, %s1059
          %p1056 = scmp.ge.s32.totalorder %s1055, 1
          %s1060 = sphi %s0, %s0
          %s1061 = sphi [#allocation2], [#allocation2]
        $region205: #{tpu_custom_call.1} parent=201 // loop_header_branch
          %1058 = sbr.rel (%p1056) target = $region209
        $region206: #{tpu_custom_call.1} parent=201 // loop_body
          %v1062 = vld [vmem:[%s1060] sm:$0xff]
          %1063 = vst [vmem:[%s1061] sm:$0xff] %v1062
          %v1064 = vld [vmem:[%s1060 + $0x8] sm:$0xff]
          %1065 = vst [vmem:[%s1061 + $0x8] sm:$0xff] %v1064
          %v1066 = vld [vmem:[%s1060 + $0x10] sm:$0xff]
          %1067 = vst [vmem:[%s1061 + $0x10] sm:$0xff] %v1066
          %v1068 = vld [vmem:[%s1060 + $0x18] sm:$0xff]
          %1069 = vst [vmem:[%s1061 + $0x18] sm:$0xff] %v1068
          %v1070 = vld [vmem:[%s1060 + $0x20] sm:$0xff]
          %1071 = vst [vmem:[%s1061 + $0x20] sm:$0xff] %v1070
          %v1072 = vld [vmem:[%s1060 + $0x28] sm:$0xff]
          %1073 = vst [vmem:[%s1061 + $0x28] sm:$0xff] %v1072
          %v1074 = vld [vmem:[%s1060 + $0x30] sm:$0xff]
          %1075 = vst [vmem:[%s1061 + $0x30] sm:$0xff] %v1074
          %v1076 = vld [vmem:[%s1060 + $0x38] sm:$0xff]
          %1077 = vst [vmem:[%s1061 + $0x38] sm:$0xff] %v1076
        $region207: #{tpu_custom_call.1} parent=201 // loop_footer
          %s1059 = sadd.s32 1, %s1055
        $region208: #{tpu_custom_call.1} parent=201 // loop_footer_branch
          %1054 = sbr.rel target = $region204
        $region209: #{tpu_custom_call.1} parent=201 // loop_exit
          _
      $region202: #{tpu_custom_call.1} parent=186 // pred_fallthru
        _
      %p1078 = pneg %p1050
      // Predicated region
      $region210: #{tpu_custom_call.1} parent=186 // pred_check
        _
      $region211: #{tpu_custom_call.1} parent=186 // pred_check_branch
        %1080 = sbr.rel (%p1050) target = $region213
      $region212: #{tpu_custom_call.1} parent=186 // pred_region
        %s1081 = sand.u32 64, 7
      $region213: #{tpu_custom_call.1} parent=186 // pred_fallthru
        _
    $region187: #{tpu_custom_call.1} parent=1 // pred_fallthru
      _
    // Predicated region
    $region188: #{tpu_custom_call.1} parent=1 // pred_check
      %p1034 = pneg %p1030
    $region189: #{tpu_custom_call.1} parent=1 // pred_check_branch
      %1036 = sbr.rel (%p1034) target = $region191
    $region190: #{tpu_custom_call.1} parent=1 // pred_region
      %s1037 = sshll.u32 1, 64
      %s1038 = ssub.s32 %s1037, 1
      loop: start=0, step=1, limit=1
      $region192: #{tpu_custom_call.1} parent=190 // loop_pre_header
        _
      $region193: #{tpu_custom_call.1} parent=190 // loop_header
        %s1040 = sphi 0, %s1044
        %p1041 = scmp.ge.s32.totalorder %s1040, 1
        %s1045 = sphi %s0, %s0
        %s1046 = sphi [#allocation2], [#allocation2]
      $region194: #{tpu_custom_call.1} parent=190 // loop_header_branch
        %1043 = sbr.rel (%p1041) target = $region198
      $region195: #{tpu_custom_call.1} parent=190 // loop_body
        %v1047 = vld [vmem:[%s1045] sm:%s1038]
        %1048 = vst [vmem:[%s1046] sm:%s1038] %v1047
      $region196: #{tpu_custom_call.1} parent=190 // loop_footer
        %s1044 = sadd.s32 1, %s1040
      $region197: #{tpu_custom_call.1} parent=190 // loop_footer_branch
        %1039 = sbr.rel target = $region193
      $region198: #{tpu_custom_call.1} parent=190 // loop_exit
        _
    $region191: #{tpu_custom_call.1} parent=1 // pred_fallthru
      _
    // Predicated region
    $region214: #{tpu_custom_call.1} parent=1 // pred_check
      _
    $region215: #{tpu_custom_call.1} parent=1 // pred_check_branch
      %1084 = sbr.rel (0) target = $region217
    $region216: #{tpu_custom_call.1} parent=1 // pred_region
      %1085 = vsyncadd [#allocation3], 1024
    $region217: #{tpu_custom_call.1} parent=1 // pred_fallthru
      _
    %s1086 = sshll.u32 %s352, 4
    %1087 = dma.done [#allocation3], %s1086
    %v1088 = vld [vmem:[#allocation4] sm:$0xf]
    %v1089 = vld [vmem:[#allocation4 + $0x4] sm:$0xf]
    %v1090 = vld [vmem:[#allocation4 + $0x8] sm:$0xf]
    %v1091 = vld [vmem:[#allocation4 + $0xc] sm:$0xf]
    %v1092 = vld [vmem:[#allocation4 + $0x10] sm:$0xf]
    %v1093 = vld [vmem:[#allocation4 + $0x14] sm:$0xf]
    %v1094 = vld [vmem:[#allocation4 + $0x18] sm:$0xf]
    %v1095 = vld [vmem:[#allocation4 + $0x1c] sm:$0xf]
    %v1096 = vld [vmem:[#allocation4 + $0x20] sm:$0xf]
    %v1097 = vld [vmem:[#allocation4 + $0x24] sm:$0xf]
    %v1098 = vld [vmem:[#allocation4 + $0x28] sm:$0xf]
    %v1099 = vld [vmem:[#allocation4 + $0x2c] sm:$0xf]
    %v1100 = vld [vmem:[#allocation4 + $0x30] sm:$0xf]
    %v1101 = vld [vmem:[#allocation4 + $0x34] sm:$0xf]
    %v1102 = vld [vmem:[#allocation4 + $0x38] sm:$0xf]
    %v1103 = vld [vmem:[#allocation4 + $0x3c] sm:$0xf]
    %v1104 = vld [vmem:[#allocation2] sm:$0xf]
    %v1105 = vld [vmem:[#allocation2 + $0x4] sm:$0xf]
    %v1106 = vld [vmem:[#allocation2 + $0x8] sm:$0xf]
    %v1107 = vld [vmem:[#allocation2 + $0xc] sm:$0xf]
    %v1108 = vld [vmem:[#allocation2 + $0x10] sm:$0xf]
    %v1109 = vld [vmem:[#allocation2 + $0x14] sm:$0xf]
    %v1110 = vld [vmem:[#allocation2 + $0x18] sm:$0xf]
    %v1111 = vld [vmem:[#allocation2 + $0x1c] sm:$0xf]
    %v1112 = vld [vmem:[#allocation2 + $0x20] sm:$0xf]
    %v1113 = vld [vmem:[#allocation2 + $0x24] sm:$0xf]
    %v1114 = vld [vmem:[#allocation2 + $0x28] sm:$0xf]
    %v1115 = vld [vmem:[#allocation2 + $0x2c] sm:$0xf]
    %v1116 = vld [vmem:[#allocation2 + $0x30] sm:$0xf]
    %v1117 = vld [vmem:[#allocation2 + $0x34] sm:$0xf]
    %v1118 = vld [vmem:[#allocation2 + $0x38] sm:$0xf]
    %v1119 = vld [vmem:[#allocation2 + $0x3c] sm:$0xf]
    %v1136 = vunpack.c.l.b16 %v1104
    %v1137 = vunpack.c.l.b16 %v1105
    %v1138 = vunpack.c.l.b16 %v1106
    %v1139 = vunpack.c.l.b16 %v1107
    %v1140 = vunpack.c.l.b16 %v1108
    %v1141 = vunpack.c.l.b16 %v1109
    %v1142 = vunpack.c.l.b16 %v1110
    %v1143 = vunpack.c.l.b16 %v1111
    %v1144 = vunpack.c.l.b16 %v1112
    %v1145 = vunpack.c.l.b16 %v1113
    %v1146 = vunpack.c.l.b16 %v1114
    %v1147 = vunpack.c.l.b16 %v1115
    %v1148 = vunpack.c.l.b16 %v1116
    %v1149 = vunpack.c.l.b16 %v1117
    %v1150 = vunpack.c.l.b16 %v1118
    %v1151 = vunpack.c.l.b16 %v1119
    %v1152 = vpack.c.b16 %v1137, %v1136
    %v1153 = vpack.c.b16 %v1139, %v1138
    %v1154 = vpack.c.b16 %v1141, %v1140
    %v1155 = vpack.c.b16 %v1143, %v1142
    %v1156 = vpack.c.b16 %v1145, %v1144
    %v1157 = vpack.c.b16 %v1147, %v1146
    %v1158 = vpack.c.b16 %v1149, %v1148
    %v1159 = vpack.c.b16 %v1151, %v1150
    %v1184 = vunpack.c.l.b16 %v1088
    %v1185 = vunpack.c.l.b16 %v1089
    %v1186 = vunpack.c.l.b16 %v1090
    %v1187 = vunpack.c.l.b16 %v1091
    %v1188 = vunpack.c.l.b16 %v1092
    %v1189 = vunpack.c.l.b16 %v1093
    %v1190 = vunpack.c.l.b16 %v1094
    %v1191 = vunpack.c.l.b16 %v1095
    %v1192 = vunpack.c.l.b16 %v1096
    %v1193 = vunpack.c.l.b16 %v1097
    %v1194 = vunpack.c.l.b16 %v1098
    %v1195 = vunpack.c.l.b16 %v1099
    %v1196 = vunpack.c.l.b16 %v1100
    %v1197 = vunpack.c.l.b16 %v1101
    %v1198 = vunpack.c.l.b16 %v1102
    %v1199 = vunpack.c.l.b16 %v1103
    %v1200 = vpack.c.b16 %v1185, %v1184
    %v1201 = vpack.c.b16 %v1187, %v1186
    %v1202 = vpack.c.b16 %v1189, %v1188
    %v1203 = vpack.c.b16 %v1191, %v1190
    %v1204 = vpack.c.b16 %v1193, %v1192
    %v1205 = vpack.c.b16 %v1195, %v1194
    %v1206 = vpack.c.b16 %v1197, %v1196
    %v1207 = vpack.c.b16 %v1199, %v1198
    %1216 = vmatprep.subr.bf16.mxu0 0
    %1217 = vmatpush1.bf16.msra.mxu0 %v1207
    %1218 = vmatprep.subr.bf16.mxu0 0
    %1219 = vmatpush1.bf16.msra.mxu0 %v1206
    %1220 = vmatprep.subr.bf16.mxu0 0
    %1221 = vmatpush1.bf16.msra.mxu0 %v1205
    %1222 = vmatprep.subr.bf16.mxu0 0
    %1223 = vmatpush1.bf16.msra.mxu0 %v1204
    %1224 = vmatprep.subr.bf16.mxu0 0
    %1225 = vmatpush1.bf16.msra.mxu0 %v1203
    %1226 = vmatprep.subr.bf16.mxu0 0
    %1227 = vmatpush1.bf16.msra.mxu0 %v1202
    %1228 = vmatprep.subr.bf16.mxu0 0
    %1229 = vmatpush1.bf16.msra.mxu0 %v1201
    %1230 = vmatprep.subr.bf16.mxu0 0
    %1231 = vmatpush1.bf16.msra.mxu0 %v1200
    %1232 = vmatprep.subr.bf16.mxu0 0
    %1233 = vmatpush2.bf16.msra.mxu0 0
    %1234 = vmatprep.subr.bf16.mxu0 0
    %1235 = vmatpush2.bf16.msra.mxu0 0
    %1236 = vmatprep.subr.bf16.mxu0 0
    %1237 = vmatpush2.bf16.msra.mxu0 0
    %1238 = vmatprep.subr.bf16.mxu0 0
    %1239 = vmatpush2.bf16.msra.mxu0 0
    %1240 = vmatprep.subr.bf16.mxu0 0
    %1241 = vmatpush2.bf16.msra.mxu0 0
    %1242 = vmatprep.subr.bf16.mxu0 0
    %1243 = vmatpush2.bf16.msra.mxu0 0
    %1244 = vmatprep.subr.bf16.mxu0 0
    %1245 = vmatpush2.bf16.msra.mxu0 0
    %1246 = vmatprep.subr.bf16.mxu0 0
    %1247 = vmatpush2.bf16.msra.mxu0 0
    %1248 = vmatprep.mubr.bf16.mxu0 0
    %1249 = vmatmul.mubr.bf16.gmra.mxu0 %v1152
    %v1250 = vpop.f32.mrf.mxu0
    %v1251 = vadd.f32 0.0, %v1250
    %v1252 = vpop.f32.mrf.mxu0
    %v1253 = vpop.f32.mrf.mxu0
    %v1254 = vadd.f32 0.0, %v1253
    %v1255 = vpop.f32.mrf.mxu0
    %1256 = vmatprep.mubr.bf16.mxu0 0
    %1257 = vmatmul.mubr.bf16.gmra.mxu0 %v1153
    %v1258 = vpop.f32.mrf.mxu0
    %v1259 = vadd.f32 0.0, %v1258
    %v1260 = vpop.f32.mrf.mxu0
    %v1261 = vpop.f32.mrf.mxu0
    %v1262 = vadd.f32 0.0, %v1261
    %v1263 = vpop.f32.mrf.mxu0
    %1264 = vmatprep.mubr.bf16.mxu0 0
    %1265 = vmatmul.mubr.bf16.gmra.mxu0 %v1154
    %v1266 = vpop.f32.mrf.mxu0
    %v1267 = vadd.f32 0.0, %v1266
    %v1268 = vpop.f32.mrf.mxu0
    %v1269 = vpop.f32.mrf.mxu0
    %v1270 = vadd.f32 0.0, %v1269
    %v1271 = vpop.f32.mrf.mxu0
    %1272 = vmatprep.mubr.bf16.mxu0 0
    %1273 = vmatmul.mubr.bf16.gmra.mxu0 %v1155
    %v1274 = vpop.f32.mrf.mxu0
    %v1275 = vadd.f32 0.0, %v1274
    %v1276 = vpop.f32.mrf.mxu0
    %v1277 = vpop.f32.mrf.mxu0
    %v1278 = vadd.f32 0.0, %v1277
    %v1279 = vpop.f32.mrf.mxu0
    %1280 = vmatprep.mubr.bf16.mxu0 0
    %1281 = vmatmul.mubr.bf16.gmra.mxu0 %v1156
    %v1282 = vpop.f32.mrf.mxu0
    %v1283 = vadd.f32 0.0, %v1282
    %v1284 = vpop.f32.mrf.mxu0
    %v1285 = vpop.f32.mrf.mxu0
    %v1286 = vadd.f32 0.0, %v1285
    %v1287 = vpop.f32.mrf.mxu0
    %1288 = vmatprep.mubr.bf16.mxu0 0
    %1289 = vmatmul.mubr.bf16.gmra.mxu0 %v1157
    %v1290 = vpop.f32.mrf.mxu0
    %v1291 = vadd.f32 0.0, %v1290
    %v1292 = vpop.f32.mrf.mxu0
    %v1293 = vpop.f32.mrf.mxu0
    %v1294 = vadd.f32 0.0, %v1293
    %v1295 = vpop.f32.mrf.mxu0
    %1296 = vmatprep.mubr.bf16.mxu0 0
    %1297 = vmatmul.mubr.bf16.gmra.mxu0 %v1158
    %v1298 = vpop.f32.mrf.mxu0
    %v1299 = vadd.f32 0.0, %v1298
    %v1300 = vpop.f32.mrf.mxu0
    %v1301 = vpop.f32.mrf.mxu0
    %v1302 = vadd.f32 0.0, %v1301
    %v1303 = vpop.f32.mrf.mxu0
    %1304 = vmatprep.mubr.bf16.mxu0 0
    %1305 = vmatmul.mubr.bf16.gmra.mxu0 %v1159
    %v1306 = vpop.f32.mrf.mxu0
    %v1307 = vadd.f32 0.0, %v1306
    %v1308 = vpop.f32.mrf.mxu0
    %v1309 = vpop.f32.mrf.mxu0
    %v1310 = vadd.f32 0.0, %v1309
    %v1311 = vpop.f32.mrf.mxu0
    %1312 = vdwg.mxu0
    %v1313 = vpack.c.bf16 %v1254, %v1251
    %v1314 = vpack.c.bf16 %v1262, %v1259
    %v1315 = vpack.c.bf16 %v1270, %v1267
    %v1316 = vpack.c.bf16 %v1278, %v1275
    %v1317 = vpack.c.bf16 %v1286, %v1283
    %v1318 = vpack.c.bf16 %v1294, %v1291
    %v1319 = vpack.c.bf16 %v1302, %v1299
    %v1320 = vpack.c.bf16 %v1310, %v1307
    %v1337 = vunpack.c.l.b16 %v1012
    %v1338 = vunpack.c.l.b16 %v1013
    %v1339 = vunpack.c.l.b16 %v1014
    %v1340 = vunpack.c.l.b16 %v1015
    %v1341 = vunpack.c.l.b16 %v1016
    %v1342 = vunpack.c.l.b16 %v1017
    %v1343 = vunpack.c.l.b16 %v1018
    %v1344 = vunpack.c.l.b16 %v1019
    %v1345 = vunpack.c.l.b16 %v1020
    %v1346 = vunpack.c.l.b16 %v1021
    %v1347 = vunpack.c.l.b16 %v1022
    %v1348 = vunpack.c.l.b16 %v1023
    %v1349 = vunpack.c.l.b16 %v1024
    %v1350 = vunpack.c.l.b16 %v1025
    %v1351 = vunpack.c.l.b16 %v1026
    %v1352 = vunpack.c.l.b16 %v1027
    %v1353 = vpack.c.b16 %v1338, %v1337
    %v1354 = vpack.c.b16 %v1340, %v1339
    %v1355 = vpack.c.b16 %v1342, %v1341
    %v1356 = vpack.c.b16 %v1344, %v1343
    %v1357 = vpack.c.b16 %v1346, %v1345
    %v1358 = vpack.c.b16 %v1348, %v1347
    %v1359 = vpack.c.b16 %v1350, %v1349
    %v1360 = vpack.c.b16 %v1352, %v1351
    %1369 = vmatprep.subr.bf16.mxu0 0
    %1370 = vmatpush1.bf16.msra.mxu0 %v1360
    %1371 = vmatprep.subr.bf16.mxu0 0
    %1372 = vmatpush1.bf16.msra.mxu0 %v1359
    %1373 = vmatprep.subr.bf16.mxu0 0
    %1374 = vmatpush1.bf16.msra.mxu0 %v1358
    %1375 = vmatprep.subr.bf16.mxu0 0
    %1376 = vmatpush1.bf16.msra.mxu0 %v1357
    %1377 = vmatprep.subr.bf16.mxu0 0
    %1378 = vmatpush1.bf16.msra.mxu0 %v1356
    %1379 = vmatprep.subr.bf16.mxu0 0
    %1380 = vmatpush1.bf16.msra.mxu0 %v1355
    %1381 = vmatprep.subr.bf16.mxu0 0
    %1382 = vmatpush1.bf16.msra.mxu0 %v1354
    %1383 = vmatprep.subr.bf16.mxu0 0
    %1384 = vmatpush1.bf16.msra.mxu0 %v1353
    %1385 = vmatprep.subr.bf16.mxu0 0
    %1386 = vmatpush2.bf16.msra.mxu0 0
    %1387 = vmatprep.subr.bf16.mxu0 0
    %1388 = vmatpush2.bf16.msra.mxu0 0
    %1389 = vmatprep.subr.bf16.mxu0 0
    %1390 = vmatpush2.bf16.msra.mxu0 0
    %1391 = vmatprep.subr.bf16.mxu0 0
    %1392 = vmatpush2.bf16.msra.mxu0 0
    %1393 = vmatprep.subr.bf16.mxu0 0
    %1394 = vmatpush2.bf16.msra.mxu0 0
    %1395 = vmatprep.subr.bf16.mxu0 0
    %1396 = vmatpush2.bf16.msra.mxu0 0
    %1397 = vmatprep.subr.bf16.mxu0 0
    %1398 = vmatpush2.bf16.msra.mxu0 0
    %1399 = vmatprep.subr.bf16.mxu0 0
    %1400 = vmatpush2.bf16.msra.mxu0 0
    %1401 = vmatprep.mubr.bf16.mxu0 0
    %1402 = vmatmul.mubr.bf16.gmra.mxu0 %v1200
    %v1403 = vpop.f32.mrf.mxu0
    %v1404 = vadd.f32 0.0, %v1403
    %v1405 = vpop.f32.mrf.mxu0
    %v1406 = vpop.f32.mrf.mxu0
    %v1407 = vadd.f32 0.0, %v1406
    %v1408 = vpop.f32.mrf.mxu0
    %1409 = vmatprep.mubr.bf16.mxu0 0
    %1410 = vmatmul.mubr.bf16.gmra.mxu0 %v1201
    %v1411 = vpop.f32.mrf.mxu0
    %v1412 = vadd.f32 0.0, %v1411
    %v1413 = vpop.f32.mrf.mxu0
    %v1414 = vpop.f32.mrf.mxu0
    %v1415 = vadd.f32 0.0, %v1414
    %v1416 = vpop.f32.mrf.mxu0
    %1417 = vmatprep.mubr.bf16.mxu0 0
    %1418 = vmatmul.mubr.bf16.gmra.mxu0 %v1202
    %v1419 = vpop.f32.mrf.mxu0
    %v1420 = vadd.f32 0.0, %v1419
    %v1421 = vpop.f32.mrf.mxu0
    %v1422 = vpop.f32.mrf.mxu0
    %v1423 = vadd.f32 0.0, %v1422
    %v1424 = vpop.f32.mrf.mxu0
    %1425 = vmatprep.mubr.bf16.mxu0 0
    %1426 = vmatmul.mubr.bf16.gmra.mxu0 %v1203
    %v1427 = vpop.f32.mrf.mxu0
    %v1428 = vadd.f32 0.0, %v1427
    %v1429 = vpop.f32.mrf.mxu0
    %v1430 = vpop.f32.mrf.mxu0
    %v1431 = vadd.f32 0.0, %v1430
    %v1432 = vpop.f32.mrf.mxu0
    %1433 = vmatprep.mubr.bf16.mxu0 0
    %1434 = vmatmul.mubr.bf16.gmra.mxu0 %v1204
    %v1435 = vpop.f32.mrf.mxu0
    %v1436 = vadd.f32 0.0, %v1435
    %v1437 = vpop.f32.mrf.mxu0
    %v1438 = vpop.f32.mrf.mxu0
    %v1439 = vadd.f32 0.0, %v1438
    %v1440 = vpop.f32.mrf.mxu0
    %1441 = vmatprep.mubr.bf16.mxu0 0
    %1442 = vmatmul.mubr.bf16.gmra.mxu0 %v1205
    %v1443 = vpop.f32.mrf.mxu0
    %v1444 = vadd.f32 0.0, %v1443
    %v1445 = vpop.f32.mrf.mxu0
    %v1446 = vpop.f32.mrf.mxu0
    %v1447 = vadd.f32 0.0, %v1446
    %v1448 = vpop.f32.mrf.mxu0
    %1449 = vmatprep.mubr.bf16.mxu0 0
    %1450 = vmatmul.mubr.bf16.gmra.mxu0 %v1206
    %v1451 = vpop.f32.mrf.mxu0
    %v1452 = vadd.f32 0.0, %v1451
    %v1453 = vpop.f32.mrf.mxu0
    %v1454 = vpop.f32.mrf.mxu0
    %v1455 = vadd.f32 0.0, %v1454
    %v1456 = vpop.f32.mrf.mxu0
    %1457 = vmatprep.mubr.bf16.mxu0 0
    %1458 = vmatmul.mubr.bf16.gmra.mxu0 %v1207
    %v1459 = vpop.f32.mrf.mxu0
    %v1460 = vadd.f32 0.0, %v1459
    %v1461 = vpop.f32.mrf.mxu0
    %v1462 = vpop.f32.mrf.mxu0
    %v1463 = vadd.f32 0.0, %v1462
    %v1464 = vpop.f32.mrf.mxu0
    %1465 = vdwg.mxu0
    %v1482 = vunpack.c.l.b16 %v996
    %v1483 = vunpack.c.l.b16 %v997
    %v1484 = vunpack.c.l.b16 %v998
    %v1485 = vunpack.c.l.b16 %v999
    %v1486 = vunpack.c.l.b16 %v1000
    %v1487 = vunpack.c.l.b16 %v1001
    %v1488 = vunpack.c.l.b16 %v1002
    %v1489 = vunpack.c.l.b16 %v1003
    %v1490 = vunpack.c.l.b16 %v1004
    %v1491 = vunpack.c.l.b16 %v1005
    %v1492 = vunpack.c.l.b16 %v1006
    %v1493 = vunpack.c.l.b16 %v1007
    %v1494 = vunpack.c.l.b16 %v1008
    %v1495 = vunpack.c.l.b16 %v1009
    %v1496 = vunpack.c.l.b16 %v1010
    %v1497 = vunpack.c.l.b16 %v1011
    %v1498 = vpack.c.b16 %v1483, %v1482
    %v1499 = vpack.c.b16 %v1485, %v1484
    %v1500 = vpack.c.b16 %v1487, %v1486
    %v1501 = vpack.c.b16 %v1489, %v1488
    %v1502 = vpack.c.b16 %v1491, %v1490
    %v1503 = vpack.c.b16 %v1493, %v1492
    %v1504 = vpack.c.b16 %v1495, %v1494
    %v1505 = vpack.c.b16 %v1497, %v1496
    %1514 = vmatprep.subr.bf16.mxu0 0
    %1515 = vmatpush1.bf16.msra.mxu0 %v1505
    %1516 = vmatprep.subr.bf16.mxu0 0
    %1517 = vmatpush1.bf16.msra.mxu0 %v1504
    %1518 = vmatprep.subr.bf16.mxu0 0
    %1519 = vmatpush1.bf16.msra.mxu0 %v1503
    %1520 = vmatprep.subr.bf16.mxu0 0
    %1521 = vmatpush1.bf16.msra.mxu0 %v1502
    %1522 = vmatprep.subr.bf16.mxu0 0
    %1523 = vmatpush1.bf16.msra.mxu0 %v1501
    %1524 = vmatprep.subr.bf16.mxu0 0
    %1525 = vmatpush1.bf16.msra.mxu0 %v1500
    %1526 = vmatprep.subr.bf16.mxu0 0
    %1527 = vmatpush1.bf16.msra.mxu0 %v1499
    %1528 = vmatprep.subr.bf16.mxu0 0
    %1529 = vmatpush1.bf16.msra.mxu0 %v1498
    %1530 = vmatprep.subr.bf16.mxu0 0
    %1531 = vmatpush2.bf16.msra.mxu0 0
    %1532 = vmatprep.subr.bf16.mxu0 0
    %1533 = vmatpush2.bf16.msra.mxu0 0
    %1534 = vmatprep.subr.bf16.mxu0 0
    %1535 = vmatpush2.bf16.msra.mxu0 0
    %1536 = vmatprep.subr.bf16.mxu0 0
    %1537 = vmatpush2.bf16.msra.mxu0 0
    %1538 = vmatprep.subr.bf16.mxu0 0
    %1539 = vmatpush2.bf16.msra.mxu0 0
    %1540 = vmatprep.subr.bf16.mxu0 0
    %1541 = vmatpush2.bf16.msra.mxu0 0
    %1542 = vmatprep.subr.bf16.mxu0 0
    %1543 = vmatpush2.bf16.msra.mxu0 0
    %1544 = vmatprep.subr.bf16.mxu0 0
    %1545 = vmatpush2.bf16.msra.mxu0 0
    %1546 = vmatprep.mubr.bf16.mxu0 0
    %1547 = vmatmul.mubr.bf16.gmra.mxu0 %v1313
    %v1548 = vpop.f32.mrf.mxu0
    %v1549 = vadd.f32 %v1404, %v1548
    %v1550 = vpop.f32.mrf.mxu0
    %v1551 = vpop.f32.mrf.mxu0
    %v1552 = vadd.f32 %v1407, %v1551
    %v1553 = vpop.f32.mrf.mxu0
    %1554 = vmatprep.mubr.bf16.mxu0 0
    %1555 = vmatmul.mubr.bf16.gmra.mxu0 %v1314
    %v1556 = vpop.f32.mrf.mxu0
    %v1557 = vadd.f32 %v1412, %v1556
    %v1558 = vpop.f32.mrf.mxu0
    %v1559 = vpop.f32.mrf.mxu0
    %v1560 = vadd.f32 %v1415, %v1559
    %v1561 = vpop.f32.mrf.mxu0
    %1562 = vmatprep.mubr.bf16.mxu0 0
    %1563 = vmatmul.mubr.bf16.gmra.mxu0 %v1315
    %v1564 = vpop.f32.mrf.mxu0
    %v1565 = vadd.f32 %v1420, %v1564
    %v1566 = vpop.f32.mrf.mxu0
    %v1567 = vpop.f32.mrf.mxu0
    %v1568 = vadd.f32 %v1423, %v1567
    %v1569 = vpop.f32.mrf.mxu0
    %1570 = vmatprep.mubr.bf16.mxu0 0
    %1571 = vmatmul.mubr.bf16.gmra.mxu0 %v1316
    %v1572 = vpop.f32.mrf.mxu0
    %v1573 = vadd.f32 %v1428, %v1572
    %v1574 = vpop.f32.mrf.mxu0
    %v1575 = vpop.f32.mrf.mxu0
    %v1576 = vadd.f32 %v1431, %v1575
    %v1577 = vpop.f32.mrf.mxu0
    %1578 = vmatprep.mubr.bf16.mxu0 0
    %1579 = vmatmul.mubr.bf16.gmra.mxu0 %v1317
    %v1580 = vpop.f32.mrf.mxu0
    %v1581 = vadd.f32 %v1436, %v1580
    %v1582 = vpop.f32.mrf.mxu0
    %v1583 = vpop.f32.mrf.mxu0
    %v1584 = vadd.f32 %v1439, %v1583
    %v1585 = vpop.f32.mrf.mxu0
    %1586 = vmatprep.mubr.bf16.mxu0 0
    %1587 = vmatmul.mubr.bf16.gmra.mxu0 %v1318
    %v1588 = vpop.f32.mrf.mxu0
    %v1589 = vadd.f32 %v1444, %v1588
    %v1590 = vpop.f32.mrf.mxu0
    %v1591 = vpop.f32.mrf.mxu0
    %v1592 = vadd.f32 %v1447, %v1591
    %v1593 = vpop.f32.mrf.mxu0
    %1594 = vmatprep.mubr.bf16.mxu0 0
    %1595 = vmatmul.mubr.bf16.gmra.mxu0 %v1319
    %v1596 = vpop.f32.mrf.mxu0
    %v1597 = vadd.f32 %v1452, %v1596
    %v1598 = vpop.f32.mrf.mxu0
    %v1599 = vpop.f32.mrf.mxu0
    %v1600 = vadd.f32 %v1455, %v1599
    %v1601 = vpop.f32.mrf.mxu0
    %1602 = vmatprep.mubr.bf16.mxu0 0
    %1603 = vmatmul.mubr.bf16.gmra.mxu0 %v1320
    %v1604 = vpop.f32.mrf.mxu0
    %v1605 = vadd.f32 %v1460, %v1604
    %v1606 = vpop.f32.mrf.mxu0
    %v1607 = vpop.f32.mrf.mxu0
    %v1608 = vadd.f32 %v1463, %v1607
    %v1609 = vpop.f32.mrf.mxu0
    %1610 = vdwg.mxu0
    %v1612 = vlaneseq
    %v1613 = vshrl.u32 %v1612, 7
    %v1614 = vsub.s32 0, %v1613
    %v1615 = vrot.slane %v1028, %v1614
    %v1617 = vadd.f32 %v1549, %v1615
    %v1618 = vadd.f32 %v1552, %v1615
    %v1619 = vadd.f32 %v1557, %v1615
    %v1620 = vadd.f32 %v1560, %v1615
    %v1621 = vadd.f32 %v1565, %v1615
    %v1622 = vadd.f32 %v1568, %v1615
    %v1623 = vadd.f32 %v1573, %v1615
    %v1624 = vadd.f32 %v1576, %v1615
    %v1625 = vadd.f32 %v1581, %v1615
    %v1626 = vadd.f32 %v1584, %v1615
    %v1627 = vadd.f32 %v1589, %v1615
    %v1628 = vadd.f32 %v1592, %v1615
    %v1629 = vadd.f32 %v1597, %v1615
    %v1630 = vadd.f32 %v1600, %v1615
    %v1631 = vadd.f32 %v1605, %v1615
    %v1632 = vadd.f32 %v1608, %v1615
    %v1633 = vmax.f32 %v1617, 0.0
    %v1634 = vmax.f32 %v1618, 0.0
    %v1635 = vmax.f32 %v1619, 0.0
    %v1636 = vmax.f32 %v1620, 0.0
    %v1637 = vmax.f32 %v1621, 0.0
    %v1638 = vmax.f32 %v1622, 0.0
    %v1639 = vmax.f32 %v1623, 0.0
    %v1640 = vmax.f32 %v1624, 0.0
    %v1641 = vmax.f32 %v1625, 0.0
    %v1642 = vmax.f32 %v1626, 0.0
    %v1643 = vmax.f32 %v1627, 0.0
    %v1644 = vmax.f32 %v1628, 0.0
    %v1645 = vmax.f32 %v1629, 0.0
    %v1646 = vmax.f32 %v1630, 0.0
    %v1647 = vmax.f32 %v1631, 0.0
    %v1648 = vmax.f32 %v1632, 0.0
    %v1649 = vpack.c.bf16 %v1634, %v1633
    %v1650 = vpack.c.bf16 %v1636, %v1635
    %v1651 = vpack.c.bf16 %v1638, %v1637
    %v1652 = vpack.c.bf16 %v1640, %v1639
    %v1653 = vpack.c.bf16 %v1642, %v1641
    %v1654 = vpack.c.bf16 %v1644, %v1643
    %v1655 = vpack.c.bf16 %v1646, %v1645
    %v1656 = vpack.c.bf16 %v1648, %v1647
    %v1665 = vunpack.c.l.b16 %v1649
    %v1666 = vunpack.c.h.b16 %v1649
    %v1667 = vunpack.c.l.b16 %v1650
    %v1668 = vunpack.c.h.b16 %v1650
    %v1669 = vunpack.c.l.b16 %v1651
    %v1670 = vunpack.c.h.b16 %v1651
    %v1671 = vunpack.c.l.b16 %v1652
    %v1672 = vunpack.c.h.b16 %v1652
    %v1673 = vunpack.c.l.b16 %v1653
    %v1674 = vunpack.c.h.b16 %v1653
    %v1675 = vunpack.c.l.b16 %v1654
    %v1676 = vunpack.c.h.b16 %v1654
    %v1677 = vunpack.c.l.b16 %v1655
    %v1678 = vunpack.c.h.b16 %v1655
    %v1679 = vunpack.c.l.b16 %v1656
    %v1680 = vunpack.c.h.b16 %v1656
    %v1681 = vpack.c.b16 %v1665, %v1665
    %v1682 = vpack.c.b16 %v1666, %v1666
    %v1683 = vpack.c.b16 %v1667, %v1667
    %v1684 = vpack.c.b16 %v1668, %v1668
    %v1685 = vpack.c.b16 %v1669, %v1669
    %v1686 = vpack.c.b16 %v1670, %v1670
    %v1687 = vpack.c.b16 %v1671, %v1671
    %v1688 = vpack.c.b16 %v1672, %v1672
    %v1689 = vpack.c.b16 %v1673, %v1673
    %v1690 = vpack.c.b16 %v1674, %v1674
    %v1691 = vpack.c.b16 %v1675, %v1675
    %v1692 = vpack.c.b16 %v1676, %v1676
    %v1693 = vpack.c.b16 %v1677, %v1677
    %v1694 = vpack.c.b16 %v1678, %v1678
    %v1695 = vpack.c.b16 %v1679, %v1679
    %v1696 = vpack.c.b16 %v1680, %v1680
    %1713 = vst [vmem:[#allocation5] sm:$0xf] %v1681
    %1714 = vst [vmem:[#allocation5 + $0x4] sm:$0xf] %v1682
    %1715 = vst [vmem:[#allocation5 + $0x8] sm:$0xf] %v1683
    %1716 = vst [vmem:[#allocation5 + $0xc] sm:$0xf] %v1684
    %1717 = vst [vmem:[#allocation5 + $0x10] sm:$0xf] %v1685
    %1718 = vst [vmem:[#allocation5 + $0x14] sm:$0xf] %v1686
    %1719 = vst [vmem:[#allocation5 + $0x18] sm:$0xf] %v1687
    %1720 = vst [vmem:[#allocation5 + $0x1c] sm:$0xf] %v1688
    %1721 = vst [vmem:[#allocation5 + $0x20] sm:$0xf] %v1689
    %1722 = vst [vmem:[#allocation5 + $0x24] sm:$0xf] %v1690
    %1723 = vst [vmem:[#allocation5 + $0x28] sm:$0xf] %v1691
    %1724 = vst [vmem:[#allocation5 + $0x2c] sm:$0xf] %v1692
    %1725 = vst [vmem:[#allocation5 + $0x30] sm:$0xf] %v1693
    %1726 = vst [vmem:[#allocation5 + $0x34] sm:$0xf] %v1694
    %1727 = vst [vmem:[#allocation5 + $0x38] sm:$0xf] %v1695
    %1728 = vst [vmem:[#allocation5 + $0x3c] sm:$0xf] %v1696
    %v1729 = vld [vmem:[#allocation20] sm:$0xf]
    %v1730 = vld [vmem:[#allocation20 + $0x4] sm:$0xf]
    %v1731 = vld [vmem:[#allocation20 + $0x8] sm:$0xf]
    %v1732 = vld [vmem:[#allocation20 + $0xc] sm:$0xf]
    %v1733 = vld [vmem:[#allocation20 + $0x10] sm:$0xf]
    %v1734 = vld [vmem:[#allocation20 + $0x14] sm:$0xf]
    %v1735 = vld [vmem:[#allocation20 + $0x18] sm:$0xf]
    %v1736 = vld [vmem:[#allocation20 + $0x1c] sm:$0xf]
    %v1737 = vld [vmem:[#allocation20 + $0x20] sm:$0xf]
    %v1738 = vld [vmem:[#allocation20 + $0x24] sm:$0xf]
    %v1739 = vld [vmem:[#allocation20 + $0x28] sm:$0xf]
    %v1740 = vld [vmem:[#allocation20 + $0x2c] sm:$0xf]
    %v1741 = vld [vmem:[#allocation20 + $0x30] sm:$0xf]
    %v1742 = vld [vmem:[#allocation20 + $0x34] sm:$0xf]
    %v1743 = vld [vmem:[#allocation20 + $0x38] sm:$0xf]
    %v1744 = vld [vmem:[#allocation20 + $0x3c] sm:$0xf]
    %v1745 = vld [vmem:[#allocation22] sm:$0xf]
    %v1746 = vld [vmem:[#allocation22 + $0x4] sm:$0xf]
    %v1747 = vld [vmem:[#allocation22 + $0x8] sm:$0xf]
    %v1748 = vld [vmem:[#allocation22 + $0xc] sm:$0xf]
    %v1749 = vld [vmem:[#allocation22 + $0x10] sm:$0xf]
    %v1750 = vld [vmem:[#allocation22 + $0x14] sm:$0xf]
    %v1751 = vld [vmem:[#allocation22 + $0x18] sm:$0xf]
    %v1752 = vld [vmem:[#allocation22 + $0x1c] sm:$0xf]
    %v1753 = vld [vmem:[#allocation22 + $0x20] sm:$0xf]
    %v1754 = vld [vmem:[#allocation22 + $0x24] sm:$0xf]
    %v1755 = vld [vmem:[#allocation22 + $0x28] sm:$0xf]
    %v1756 = vld [vmem:[#allocation22 + $0x2c] sm:$0xf]
    %v1757 = vld [vmem:[#allocation22 + $0x30] sm:$0xf]
    %v1758 = vld [vmem:[#allocation22 + $0x34] sm:$0xf]
    %v1759 = vld [vmem:[#allocation22 + $0x38] sm:$0xf]
    %v1760 = vld [vmem:[#allocation22 + $0x3c] sm:$0xf]
    %v1761 = vld [vmem:[#allocation23] sm:$0x1]
    %p1763 = scmp.lt.u32.totalorder 64, 8
    %p1764 = pneg %p1763
    // Predicated region
    $region218: #{tpu_custom_call.1} parent=1 // pred_check
      _
    $region219: #{tpu_custom_call.1} parent=1 // pred_check_branch
      %1766 = sbr.rel (%p1763) target = $region221
    $region220: #{tpu_custom_call.1} parent=1 // pred_region
      %s1782 = sand.u32 64, 7
      %p1783 = scmp.eq.s32.totalorder %s1782, 0
      // Predicated region
      $region233: #{tpu_custom_call.1} parent=220 // pred_check
        %p1784 = pneg %p1783
      $region234: #{tpu_custom_call.1} parent=220 // pred_check_branch
        %1786 = sbr.rel (%p1784) target = $region236
      $region235: #{tpu_custom_call.1} parent=220 // pred_region
        loop: start=0, step=1, limit=1
        $region237: #{tpu_custom_call.1} parent=235 // loop_pre_header
          _
        $region238: #{tpu_custom_call.1} parent=235 // loop_header
          %s1788 = sphi 0, %s1792
          %p1789 = scmp.ge.s32.totalorder %s1788, 1
          %s1793 = sphi %s0, %s0
          %s1794 = sphi [#allocation2], [#allocation2]
        $region239: #{tpu_custom_call.1} parent=235 // loop_header_branch
          %1791 = sbr.rel (%p1789) target = $region243
        $region240: #{tpu_custom_call.1} parent=235 // loop_body
          %v1795 = vld [vmem:[%s1793] sm:$0xff]
          %1796 = vst [vmem:[%s1794] sm:$0xff] %v1795
          %v1797 = vld [vmem:[%s1793 + $0x8] sm:$0xff]
          %1798 = vst [vmem:[%s1794 + $0x8] sm:$0xff] %v1797
          %v1799 = vld [vmem:[%s1793 + $0x10] sm:$0xff]
          %1800 = vst [vmem:[%s1794 + $0x10] sm:$0xff] %v1799
          %v1801 = vld [vmem:[%s1793 + $0x18] sm:$0xff]
          %1802 = vst [vmem:[%s1794 + $0x18] sm:$0xff] %v1801
          %v1803 = vld [vmem:[%s1793 + $0x20] sm:$0xff]
          %1804 = vst [vmem:[%s1794 + $0x20] sm:$0xff] %v1803
          %v1805 = vld [vmem:[%s1793 + $0x28] sm:$0xff]
          %1806 = vst [vmem:[%s1794 + $0x28] sm:$0xff] %v1805
          %v1807 = vld [vmem:[%s1793 + $0x30] sm:$0xff]
          %1808 = vst [vmem:[%s1794 + $0x30] sm:$0xff] %v1807
          %v1809 = vld [vmem:[%s1793 + $0x38] sm:$0xff]
          %1810 = vst [vmem:[%s1794 + $0x38] sm:$0xff] %v1809
        $region241: #{tpu_custom_call.1} parent=235 // loop_footer
          %s1792 = sadd.s32 1, %s1788
        $region242: #{tpu_custom_call.1} parent=235 // loop_footer_branch
          %1787 = sbr.rel target = $region238
        $region243: #{tpu_custom_call.1} parent=235 // loop_exit
          _
      $region236: #{tpu_custom_call.1} parent=220 // pred_fallthru
        _
      %p1811 = pneg %p1783
      // Predicated region
      $region244: #{tpu_custom_call.1} parent=220 // pred_check
        _
      $region245: #{tpu_custom_call.1} parent=220 // pred_check_branch
        %1813 = sbr.rel (%p1783) target = $region247
      $region246: #{tpu_custom_call.1} parent=220 // pred_region
        %s1814 = sand.u32 64, 7
      $region247: #{tpu_custom_call.1} parent=220 // pred_fallthru
        _
    $region221: #{tpu_custom_call.1} parent=1 // pred_fallthru
      _
    // Predicated region
    $region222: #{tpu_custom_call.1} parent=1 // pred_check
      %p1767 = pneg %p1763
    $region223: #{tpu_custom_call.1} parent=1 // pred_check_branch
      %1769 = sbr.rel (%p1767) target = $region225
    $region224: #{tpu_custom_call.1} parent=1 // pred_region
      %s1770 = sshll.u32 1, 64
      %s1771 = ssub.s32 %s1770, 1
      loop: start=0, step=1, limit=1
      $region226: #{tpu_custom_call.1} parent=224 // loop_pre_header
        _
      $region227: #{tpu_custom_call.1} parent=224 // loop_header
        %s1773 = sphi 0, %s1777
        %p1774 = scmp.ge.s32.totalorder %s1773, 1
        %s1778 = sphi %s0, %s0
        %s1779 = sphi [#allocation2], [#allocation2]
      $region228: #{tpu_custom_call.1} parent=224 // loop_header_branch
        %1776 = sbr.rel (%p1774) target = $region232
      $region229: #{tpu_custom_call.1} parent=224 // loop_body
        %v1780 = vld [vmem:[%s1778] sm:%s1771]
        %1781 = vst [vmem:[%s1779] sm:%s1771] %v1780
      $region230: #{tpu_custom_call.1} parent=224 // loop_footer
        %s1777 = sadd.s32 1, %s1773
      $region231: #{tpu_custom_call.1} parent=224 // loop_footer_branch
        %1772 = sbr.rel target = $region227
      $region232: #{tpu_custom_call.1} parent=224 // loop_exit
        _
    $region225: #{tpu_custom_call.1} parent=1 // pred_fallthru
      _
    // Predicated region
    $region248: #{tpu_custom_call.1} parent=1 // pred_check
      _
    $region249: #{tpu_custom_call.1} parent=1 // pred_check_branch
      %1817 = sbr.rel (0) target = $region251
    $region250: #{tpu_custom_call.1} parent=1 // pred_region
      %1818 = vsyncadd [#allocation3], 1024
    $region251: #{tpu_custom_call.1} parent=1 // pred_fallthru
      _
    %s1819 = sshll.u32 %s352, 4
    %1820 = dma.done [#allocation3], %s1819
    %v1821 = vld [vmem:[#allocation5] sm:$0xf]
    %v1822 = vld [vmem:[#allocation5 + $0x4] sm:$0xf]
    %v1823 = vld [vmem:[#allocation5 + $0x8] sm:$0xf]
    %v1824 = vld [vmem:[#allocation5 + $0xc] sm:$0xf]
    %v1825 = vld [vmem:[#allocation5 + $0x10] sm:$0xf]
    %v1826 = vld [vmem:[#allocation5 + $0x14] sm:$0xf]
    %v1827 = vld [vmem:[#allocation5 + $0x18] sm:$0xf]
    %v1828 = vld [vmem:[#allocation5 + $0x1c] sm:$0xf]
    %v1829 = vld [vmem:[#allocation5 + $0x20] sm:$0xf]
    %v1830 = vld [vmem:[#allocation5 + $0x24] sm:$0xf]
    %v1831 = vld [vmem:[#allocation5 + $0x28] sm:$0xf]
    %v1832 = vld [vmem:[#allocation5 + $0x2c] sm:$0xf]
    %v1833 = vld [vmem:[#allocation5 + $0x30] sm:$0xf]
    %v1834 = vld [vmem:[#allocation5 + $0x34] sm:$0xf]
    %v1835 = vld [vmem:[#allocation5 + $0x38] sm:$0xf]
    %v1836 = vld [vmem:[#allocation5 + $0x3c] sm:$0xf]
    %v1837 = vld [vmem:[#allocation2] sm:$0xf]
    %v1838 = vld [vmem:[#allocation2 + $0x4] sm:$0xf]
    %v1839 = vld [vmem:[#allocation2 + $0x8] sm:$0xf]
    %v1840 = vld [vmem:[#allocation2 + $0xc] sm:$0xf]
    %v1841 = vld [vmem:[#allocation2 + $0x10] sm:$0xf]
    %v1842 = vld [vmem:[#allocation2 + $0x14] sm:$0xf]
    %v1843 = vld [vmem:[#allocation2 + $0x18] sm:$0xf]
    %v1844 = vld [vmem:[#allocation2 + $0x1c] sm:$0xf]
    %v1845 = vld [vmem:[#allocation2 + $0x20] sm:$0xf]
    %v1846 = vld [vmem:[#allocation2 + $0x24] sm:$0xf]
    %v1847 = vld [vmem:[#allocation2 + $0x28] sm:$0xf]
    %v1848 = vld [vmem:[#allocation2 + $0x2c] sm:$0xf]
    %v1849 = vld [vmem:[#allocation2 + $0x30] sm:$0xf]
    %v1850 = vld [vmem:[#allocation2 + $0x34] sm:$0xf]
    %v1851 = vld [vmem:[#allocation2 + $0x38] sm:$0xf]
    %v1852 = vld [vmem:[#allocation2 + $0x3c] sm:$0xf]
    %v1869 = vunpack.c.l.b16 %v1837
    %v1870 = vunpack.c.l.b16 %v1838
    %v1871 = vunpack.c.l.b16 %v1839
    %v1872 = vunpack.c.l.b16 %v1840
    %v1873 = vunpack.c.l.b16 %v1841
    %v1874 = vunpack.c.l.b16 %v1842
    %v1875 = vunpack.c.l.b16 %v1843
    %v1876 = vunpack.c.l.b16 %v1844
    %v1877 = vunpack.c.l.b16 %v1845
    %v1878 = vunpack.c.l.b16 %v1846
    %v1879 = vunpack.c.l.b16 %v1847
    %v1880 = vunpack.c.l.b16 %v1848
    %v1881 = vunpack.c.l.b16 %v1849
    %v1882 = vunpack.c.l.b16 %v1850
    %v1883 = vunpack.c.l.b16 %v1851
    %v1884 = vunpack.c.l.b16 %v1852
    %v1885 = vpack.c.b16 %v1870, %v1869
    %v1886 = vpack.c.b16 %v1872, %v1871
    %v1887 = vpack.c.b16 %v1874, %v1873
    %v1888 = vpack.c.b16 %v1876, %v1875
    %v1889 = vpack.c.b16 %v1878, %v1877
    %v1890 = vpack.c.b16 %v1880, %v1879
    %v1891 = vpack.c.b16 %v1882, %v1881
    %v1892 = vpack.c.b16 %v1884, %v1883
    %v1917 = vunpack.c.l.b16 %v1821
    %v1918 = vunpack.c.l.b16 %v1822
    %v1919 = vunpack.c.l.b16 %v1823
    %v1920 = vunpack.c.l.b16 %v1824
    %v1921 = vunpack.c.l.b16 %v1825
    %v1922 = vunpack.c.l.b16 %v1826
    %v1923 = vunpack.c.l.b16 %v1827
    %v1924 = vunpack.c.l.b16 %v1828
    %v1925 = vunpack.c.l.b16 %v1829
    %v1926 = vunpack.c.l.b16 %v1830
    %v1927 = vunpack.c.l.b16 %v1831
    %v1928 = vunpack.c.l.b16 %v1832
    %v1929 = vunpack.c.l.b16 %v1833
    %v1930 = vunpack.c.l.b16 %v1834
    %v1931 = vunpack.c.l.b16 %v1835
    %v1932 = vunpack.c.l.b16 %v1836
    %v1933 = vpack.c.b16 %v1918, %v1917
    %v1934 = vpack.c.b16 %v1920, %v1919
    %v1935 = vpack.c.b16 %v1922, %v1921
    %v1936 = vpack.c.b16 %v1924, %v1923
    %v1937 = vpack.c.b16 %v1926, %v1925
    %v1938 = vpack.c.b16 %v1928, %v1927
    %v1939 = vpack.c.b16 %v1930, %v1929
    %v1940 = vpack.c.b16 %v1932, %v1931
    %1949 = vmatprep.subr.bf16.mxu0 0
    %1950 = vmatpush1.bf16.msra.mxu0 %v1940
    %1951 = vmatprep.subr.bf16.mxu0 0
    %1952 = vmatpush1.bf16.msra.mxu0 %v1939
    %1953 = vmatprep.subr.bf16.mxu0 0
    %1954 = vmatpush1.bf16.msra.mxu0 %v1938
    %1955 = vmatprep.subr.bf16.mxu0 0
    %1956 = vmatpush1.bf16.msra.mxu0 %v1937
    %1957 = vmatprep.subr.bf16.mxu0 0
    %1958 = vmatpush1.bf16.msra.mxu0 %v1936
    %1959 = vmatprep.subr.bf16.mxu0 0
    %1960 = vmatpush1.bf16.msra.mxu0 %v1935
    %1961 = vmatprep.subr.bf16.mxu0 0
    %1962 = vmatpush1.bf16.msra.mxu0 %v1934
    %1963 = vmatprep.subr.bf16.mxu0 0
    %1964 = vmatpush1.bf16.msra.mxu0 %v1933
    %1965 = vmatprep.subr.bf16.mxu0 0
    %1966 = vmatpush2.bf16.msra.mxu0 0
    %1967 = vmatprep.subr.bf16.mxu0 0
    %1968 = vmatpush2.bf16.msra.mxu0 0
    %1969 = vmatprep.subr.bf16.mxu0 0
    %1970 = vmatpush2.bf16.msra.mxu0 0
    %1971 = vmatprep.subr.bf16.mxu0 0
    %1972 = vmatpush2.bf16.msra.mxu0 0
    %1973 = vmatprep.subr.bf16.mxu0 0
    %1974 = vmatpush2.bf16.msra.mxu0 0
    %1975 = vmatprep.subr.bf16.mxu0 0
    %1976 = vmatpush2.bf16.msra.mxu0 0
    %1977 = vmatprep.subr.bf16.mxu0 0
    %1978 = vmatpush2.bf16.msra.mxu0 0
    %1979 = vmatprep.subr.bf16.mxu0 0
    %1980 = vmatpush2.bf16.msra.mxu0 0
    %1981 = vmatprep.mubr.bf16.mxu0 0
    %1982 = vmatmul.mubr.bf16.gmra.mxu0 %v1885
    %v1983 = vpop.f32.mrf.mxu0
    %v1984 = vadd.f32 0.0, %v1983
    %v1985 = vpop.f32.mrf.mxu0
    %v1986 = vpop.f32.mrf.mxu0
    %v1987 = vadd.f32 0.0, %v1986
    %v1988 = vpop.f32.mrf.mxu0
    %1989 = vmatprep.mubr.bf16.mxu0 0
    %1990 = vmatmul.mubr.bf16.gmra.mxu0 %v1886
    %v1991 = vpop.f32.mrf.mxu0
    %v1992 = vadd.f32 0.0, %v1991
    %v1993 = vpop.f32.mrf.mxu0
    %v1994 = vpop.f32.mrf.mxu0
    %v1995 = vadd.f32 0.0, %v1994
    %v1996 = vpop.f32.mrf.mxu0
    %1997 = vmatprep.mubr.bf16.mxu0 0
    %1998 = vmatmul.mubr.bf16.gmra.mxu0 %v1887
    %v1999 = vpop.f32.mrf.mxu0
    %v2000 = vadd.f32 0.0, %v1999
    %v2001 = vpop.f32.mrf.mxu0
    %v2002 = vpop.f32.mrf.mxu0
    %v2003 = vadd.f32 0.0, %v2002
    %v2004 = vpop.f32.mrf.mxu0
    %2005 = vmatprep.mubr.bf16.mxu0 0
    %2006 = vmatmul.mubr.bf16.gmra.mxu0 %v1888
    %v2007 = vpop.f32.mrf.mxu0
    %v2008 = vadd.f32 0.0, %v2007
    %v2009 = vpop.f32.mrf.mxu0
    %v2010 = vpop.f32.mrf.mxu0
    %v2011 = vadd.f32 0.0, %v2010
    %v2012 = vpop.f32.mrf.mxu0
    %2013 = vmatprep.mubr.bf16.mxu0 0
    %2014 = vmatmul.mubr.bf16.gmra.mxu0 %v1889
    %v2015 = vpop.f32.mrf.mxu0
    %v2016 = vadd.f32 0.0, %v2015
    %v2017 = vpop.f32.mrf.mxu0
    %v2018 = vpop.f32.mrf.mxu0
    %v2019 = vadd.f32 0.0, %v2018
    %v2020 = vpop.f32.mrf.mxu0
    %2021 = vmatprep.mubr.bf16.mxu0 0
    %2022 = vmatmul.mubr.bf16.gmra.mxu0 %v1890
    %v2023 = vpop.f32.mrf.mxu0
    %v2024 = vadd.f32 0.0, %v2023
    %v2025 = vpop.f32.mrf.mxu0
    %v2026 = vpop.f32.mrf.mxu0
    %v2027 = vadd.f32 0.0, %v2026
    %v2028 = vpop.f32.mrf.mxu0
    %2029 = vmatprep.mubr.bf16.mxu0 0
    %2030 = vmatmul.mubr.bf16.gmra.mxu0 %v1891
    %v2031 = vpop.f32.mrf.mxu0
    %v2032 = vadd.f32 0.0, %v2031
    %v2033 = vpop.f32.mrf.mxu0
    %v2034 = vpop.f32.mrf.mxu0
    %v2035 = vadd.f32 0.0, %v2034
    %v2036 = vpop.f32.mrf.mxu0
    %2037 = vmatprep.mubr.bf16.mxu0 0
    %2038 = vmatmul.mubr.bf16.gmra.mxu0 %v1892
    %v2039 = vpop.f32.mrf.mxu0
    %v2040 = vadd.f32 0.0, %v2039
    %v2041 = vpop.f32.mrf.mxu0
    %v2042 = vpop.f32.mrf.mxu0
    %v2043 = vadd.f32 0.0, %v2042
    %v2044 = vpop.f32.mrf.mxu0
    %2045 = vdwg.mxu0
    %v2046 = vpack.c.bf16 %v1987, %v1984
    %v2047 = vpack.c.bf16 %v1995, %v1992
    %v2048 = vpack.c.bf16 %v2003, %v2000
    %v2049 = vpack.c.bf16 %v2011, %v2008
    %v2050 = vpack.c.bf16 %v2019, %v2016
    %v2051 = vpack.c.bf16 %v2027, %v2024
    %v2052 = vpack.c.bf16 %v2035, %v2032
    %v2053 = vpack.c.bf16 %v2043, %v2040
    %v2070 = vunpack.c.l.b16 %v1745
    %v2071 = vunpack.c.l.b16 %v1746
    %v2072 = vunpack.c.l.b16 %v1747
    %v2073 = vunpack.c.l.b16 %v1748
    %v2074 = vunpack.c.l.b16 %v1749
    %v2075 = vunpack.c.l.b16 %v1750
    %v2076 = vunpack.c.l.b16 %v1751
    %v2077 = vunpack.c.l.b16 %v1752
    %v2078 = vunpack.c.l.b16 %v1753
    %v2079 = vunpack.c.l.b16 %v1754
    %v2080 = vunpack.c.l.b16 %v1755
    %v2081 = vunpack.c.l.b16 %v1756
    %v2082 = vunpack.c.l.b16 %v1757
    %v2083 = vunpack.c.l.b16 %v1758
    %v2084 = vunpack.c.l.b16 %v1759
    %v2085 = vunpack.c.l.b16 %v1760
    %v2086 = vpack.c.b16 %v2071, %v2070
    %v2087 = vpack.c.b16 %v2073, %v2072
    %v2088 = vpack.c.b16 %v2075, %v2074
    %v2089 = vpack.c.b16 %v2077, %v2076
    %v2090 = vpack.c.b16 %v2079, %v2078
    %v2091 = vpack.c.b16 %v2081, %v2080
    %v2092 = vpack.c.b16 %v2083, %v2082
    %v2093 = vpack.c.b16 %v2085, %v2084
    %2102 = vmatprep.subr.bf16.mxu0 0
    %2103 = vmatpush1.bf16.msra.mxu0 %v2093
    %2104 = vmatprep.subr.bf16.mxu0 0
    %2105 = vmatpush1.bf16.msra.mxu0 %v2092
    %2106 = vmatprep.subr.bf16.mxu0 0
    %2107 = vmatpush1.bf16.msra.mxu0 %v2091
    %2108 = vmatprep.subr.bf16.mxu0 0
    %2109 = vmatpush1.bf16.msra.mxu0 %v2090
    %2110 = vmatprep.subr.bf16.mxu0 0
    %2111 = vmatpush1.bf16.msra.mxu0 %v2089
    %2112 = vmatprep.subr.bf16.mxu0 0
    %2113 = vmatpush1.bf16.msra.mxu0 %v2088
    %2114 = vmatprep.subr.bf16.mxu0 0
    %2115 = vmatpush1.bf16.msra.mxu0 %v2087
    %2116 = vmatprep.subr.bf16.mxu0 0
    %2117 = vmatpush1.bf16.msra.mxu0 %v2086
    %2118 = vmatprep.subr.bf16.mxu0 0
    %2119 = vmatpush2.bf16.msra.mxu0 0
    %2120 = vmatprep.subr.bf16.mxu0 0
    %2121 = vmatpush2.bf16.msra.mxu0 0
    %2122 = vmatprep.subr.bf16.mxu0 0
    %2123 = vmatpush2.bf16.msra.mxu0 0
    %2124 = vmatprep.subr.bf16.mxu0 0
    %2125 = vmatpush2.bf16.msra.mxu0 0
    %2126 = vmatprep.subr.bf16.mxu0 0
    %2127 = vmatpush2.bf16.msra.mxu0 0
    %2128 = vmatprep.subr.bf16.mxu0 0
    %2129 = vmatpush2.bf16.msra.mxu0 0
    %2130 = vmatprep.subr.bf16.mxu0 0
    %2131 = vmatpush2.bf16.msra.mxu0 0
    %2132 = vmatprep.subr.bf16.mxu0 0
    %2133 = vmatpush2.bf16.msra.mxu0 0
    %2134 = vmatprep.mubr.bf16.mxu0 0
    %2135 = vmatmul.mubr.bf16.gmra.mxu0 %v1933
    %v2136 = vpop.f32.mrf.mxu0
    %v2137 = vadd.f32 0.0, %v2136
    %v2138 = vpop.f32.mrf.mxu0
    %v2139 = vpop.f32.mrf.mxu0
    %v2140 = vadd.f32 0.0, %v2139
    %v2141 = vpop.f32.mrf.mxu0
    %2142 = vmatprep.mubr.bf16.mxu0 0
    %2143 = vmatmul.mubr.bf16.gmra.mxu0 %v1934
    %v2144 = vpop.f32.mrf.mxu0
    %v2145 = vadd.f32 0.0, %v2144
    %v2146 = vpop.f32.mrf.mxu0
    %v2147 = vpop.f32.mrf.mxu0
    %v2148 = vadd.f32 0.0, %v2147
    %v2149 = vpop.f32.mrf.mxu0
    %2150 = vmatprep.mubr.bf16.mxu0 0
    %2151 = vmatmul.mubr.bf16.gmra.mxu0 %v1935
    %v2152 = vpop.f32.mrf.mxu0
    %v2153 = vadd.f32 0.0, %v2152
    %v2154 = vpop.f32.mrf.mxu0
    %v2155 = vpop.f32.mrf.mxu0
    %v2156 = vadd.f32 0.0, %v2155
    %v2157 = vpop.f32.mrf.mxu0
    %2158 = vmatprep.mubr.bf16.mxu0 0
    %2159 = vmatmul.mubr.bf16.gmra.mxu0 %v1936
    %v2160 = vpop.f32.mrf.mxu0
    %v2161 = vadd.f32 0.0, %v2160
    %v2162 = vpop.f32.mrf.mxu0
    %v2163 = vpop.f32.mrf.mxu0
    %v2164 = vadd.f32 0.0, %v2163
    %v2165 = vpop.f32.mrf.mxu0
    %2166 = vmatprep.mubr.bf16.mxu0 0
    %2167 = vmatmul.mubr.bf16.gmra.mxu0 %v1937
    %v2168 = vpop.f32.mrf.mxu0
    %v2169 = vadd.f32 0.0, %v2168
    %v2170 = vpop.f32.mrf.mxu0
    %v2171 = vpop.f32.mrf.mxu0
    %v2172 = vadd.f32 0.0, %v2171
    %v2173 = vpop.f32.mrf.mxu0
    %2174 = vmatprep.mubr.bf16.mxu0 0
    %2175 = vmatmul.mubr.bf16.gmra.mxu0 %v1938
    %v2176 = vpop.f32.mrf.mxu0
    %v2177 = vadd.f32 0.0, %v2176
    %v2178 = vpop.f32.mrf.mxu0
    %v2179 = vpop.f32.mrf.mxu0
    %v2180 = vadd.f32 0.0, %v2179
    %v2181 = vpop.f32.mrf.mxu0
    %2182 = vmatprep.mubr.bf16.mxu0 0
    %2183 = vmatmul.mubr.bf16.gmra.mxu0 %v1939
    %v2184 = vpop.f32.mrf.mxu0
    %v2185 = vadd.f32 0.0, %v2184
    %v2186 = vpop.f32.mrf.mxu0
    %v2187 = vpop.f32.mrf.mxu0
    %v2188 = vadd.f32 0.0, %v2187
    %v2189 = vpop.f32.mrf.mxu0
    %2190 = vmatprep.mubr.bf16.mxu0 0
    %2191 = vmatmul.mubr.bf16.gmra.mxu0 %v1940
    %v2192 = vpop.f32.mrf.mxu0
    %v2193 = vadd.f32 0.0, %v2192
    %v2194 = vpop.f32.mrf.mxu0
    %v2195 = vpop.f32.mrf.mxu0
    %v2196 = vadd.f32 0.0, %v2195
    %v2197 = vpop.f32.mrf.mxu0
    %2198 = vdwg.mxu0
    %v2215 = vunpack.c.l.b16 %v1729
    %v2216 = vunpack.c.l.b16 %v1730
    %v2217 = vunpack.c.l.b16 %v1731
    %v2218 = vunpack.c.l.b16 %v1732
    %v2219 = vunpack.c.l.b16 %v1733
    %v2220 = vunpack.c.l.b16 %v1734
    %v2221 = vunpack.c.l.b16 %v1735
    %v2222 = vunpack.c.l.b16 %v1736
    %v2223 = vunpack.c.l.b16 %v1737
    %v2224 = vunpack.c.l.b16 %v1738
    %v2225 = vunpack.c.l.b16 %v1739
    %v2226 = vunpack.c.l.b16 %v1740
    %v2227 = vunpack.c.l.b16 %v1741
    %v2228 = vunpack.c.l.b16 %v1742
    %v2229 = vunpack.c.l.b16 %v1743
    %v2230 = vunpack.c.l.b16 %v1744
    %v2231 = vpack.c.b16 %v2216, %v2215
    %v2232 = vpack.c.b16 %v2218, %v2217
    %v2233 = vpack.c.b16 %v2220, %v2219
    %v2234 = vpack.c.b16 %v2222, %v2221
    %v2235 = vpack.c.b16 %v2224, %v2223
    %v2236 = vpack.c.b16 %v2226, %v2225
    %v2237 = vpack.c.b16 %v2228, %v2227
    %v2238 = vpack.c.b16 %v2230, %v2229
    %2247 = vmatprep.subr.bf16.mxu0 0
    %2248 = vmatpush1.bf16.msra.mxu0 %v2238
    %2249 = vmatprep.subr.bf16.mxu0 0
    %2250 = vmatpush1.bf16.msra.mxu0 %v2237
    %2251 = vmatprep.subr.bf16.mxu0 0
    %2252 = vmatpush1.bf16.msra.mxu0 %v2236
    %2253 = vmatprep.subr.bf16.mxu0 0
    %2254 = vmatpush1.bf16.msra.mxu0 %v2235
    %2255 = vmatprep.subr.bf16.mxu0 0
    %2256 = vmatpush1.bf16.msra.mxu0 %v2234
    %2257 = vmatprep.subr.bf16.mxu0 0
    %2258 = vmatpush1.bf16.msra.mxu0 %v2233
    %2259 = vmatprep.subr.bf16.mxu0 0
    %2260 = vmatpush1.bf16.msra.mxu0 %v2232
    %2261 = vmatprep.subr.bf16.mxu0 0
    %2262 = vmatpush1.bf16.msra.mxu0 %v2231
    %2263 = vmatprep.subr.bf16.mxu0 0
    %2264 = vmatpush2.bf16.msra.mxu0 0
    %2265 = vmatprep.subr.bf16.mxu0 0
    %2266 = vmatpush2.bf16.msra.mxu0 0
    %2267 = vmatprep.subr.bf16.mxu0 0
    %2268 = vmatpush2.bf16.msra.mxu0 0
    %2269 = vmatprep.subr.bf16.mxu0 0
    %2270 = vmatpush2.bf16.msra.mxu0 0
    %2271 = vmatprep.subr.bf16.mxu0 0
    %2272 = vmatpush2.bf16.msra.mxu0 0
    %2273 = vmatprep.subr.bf16.mxu0 0
    %2274 = vmatpush2.bf16.msra.mxu0 0
    %2275 = vmatprep.subr.bf16.mxu0 0
    %2276 = vmatpush2.bf16.msra.mxu0 0
    %2277 = vmatprep.subr.bf16.mxu0 0
    %2278 = vmatpush2.bf16.msra.mxu0 0
    %2279 = vmatprep.mubr.bf16.mxu0 0
    %2280 = vmatmul.mubr.bf16.gmra.mxu0 %v2046
    %v2281 = vpop.f32.mrf.mxu0
    %v2282 = vadd.f32 %v2137, %v2281
    %v2283 = vpop.f32.mrf.mxu0
    %v2284 = vpop.f32.mrf.mxu0
    %v2285 = vadd.f32 %v2140, %v2284
    %v2286 = vpop.f32.mrf.mxu0
    %2287 = vmatprep.mubr.bf16.mxu0 0
    %2288 = vmatmul.mubr.bf16.gmra.mxu0 %v2047
    %v2289 = vpop.f32.mrf.mxu0
    %v2290 = vadd.f32 %v2145, %v2289
    %v2291 = vpop.f32.mrf.mxu0
    %v2292 = vpop.f32.mrf.mxu0
    %v2293 = vadd.f32 %v2148, %v2292
    %v2294 = vpop.f32.mrf.mxu0
    %2295 = vmatprep.mubr.bf16.mxu0 0
    %2296 = vmatmul.mubr.bf16.gmra.mxu0 %v2048
    %v2297 = vpop.f32.mrf.mxu0
    %v2298 = vadd.f32 %v2153, %v2297
    %v2299 = vpop.f32.mrf.mxu0
    %v2300 = vpop.f32.mrf.mxu0
    %v2301 = vadd.f32 %v2156, %v2300
    %v2302 = vpop.f32.mrf.mxu0
    %2303 = vmatprep.mubr.bf16.mxu0 0
    %2304 = vmatmul.mubr.bf16.gmra.mxu0 %v2049
    %v2305 = vpop.f32.mrf.mxu0
    %v2306 = vadd.f32 %v2161, %v2305
    %v2307 = vpop.f32.mrf.mxu0
    %v2308 = vpop.f32.mrf.mxu0
    %v2309 = vadd.f32 %v2164, %v2308
    %v2310 = vpop.f32.mrf.mxu0
    %2311 = vmatprep.mubr.bf16.mxu0 0
    %2312 = vmatmul.mubr.bf16.gmra.mxu0 %v2050
    %v2313 = vpop.f32.mrf.mxu0
    %v2314 = vadd.f32 %v2169, %v2313
    %v2315 = vpop.f32.mrf.mxu0
    %v2316 = vpop.f32.mrf.mxu0
    %v2317 = vadd.f32 %v2172, %v2316
    %v2318 = vpop.f32.mrf.mxu0
    %2319 = vmatprep.mubr.bf16.mxu0 0
    %2320 = vmatmul.mubr.bf16.gmra.mxu0 %v2051
    %v2321 = vpop.f32.mrf.mxu0
    %v2322 = vadd.f32 %v2177, %v2321
    %v2323 = vpop.f32.mrf.mxu0
    %v2324 = vpop.f32.mrf.mxu0
    %v2325 = vadd.f32 %v2180, %v2324
    %v2326 = vpop.f32.mrf.mxu0
    %2327 = vmatprep.mubr.bf16.mxu0 0
    %2328 = vmatmul.mubr.bf16.gmra.mxu0 %v2052
    %v2329 = vpop.f32.mrf.mxu0
    %v2330 = vadd.f32 %v2185, %v2329
    %v2331 = vpop.f32.mrf.mxu0
    %v2332 = vpop.f32.mrf.mxu0
    %v2333 = vadd.f32 %v2188, %v2332
    %v2334 = vpop.f32.mrf.mxu0
    %2335 = vmatprep.mubr.bf16.mxu0 0
    %2336 = vmatmul.mubr.bf16.gmra.mxu0 %v2053
    %v2337 = vpop.f32.mrf.mxu0
    %v2338 = vadd.f32 %v2193, %v2337
    %v2339 = vpop.f32.mrf.mxu0
    %v2340 = vpop.f32.mrf.mxu0
    %v2341 = vadd.f32 %v2196, %v2340
    %v2342 = vpop.f32.mrf.mxu0
    %2343 = vdwg.mxu0
    %v2345 = vlaneseq
    %v2346 = vshrl.u32 %v2345, 7
    %v2347 = vsub.s32 0, %v2346
    %v2348 = vrot.slane %v1761, %v2347
    %v2350 = vadd.f32 %v2282, %v2348
    %v2351 = vadd.f32 %v2285, %v2348
    %v2352 = vadd.f32 %v2290, %v2348
    %v2353 = vadd.f32 %v2293, %v2348
    %v2354 = vadd.f32 %v2298, %v2348
    %v2355 = vadd.f32 %v2301, %v2348
    %v2356 = vadd.f32 %v2306, %v2348
    %v2357 = vadd.f32 %v2309, %v2348
    %v2358 = vadd.f32 %v2314, %v2348
    %v2359 = vadd.f32 %v2317, %v2348
    %v2360 = vadd.f32 %v2322, %v2348
    %v2361 = vadd.f32 %v2325, %v2348
    %v2362 = vadd.f32 %v2330, %v2348
    %v2363 = vadd.f32 %v2333, %v2348
    %v2364 = vadd.f32 %v2338, %v2348
    %v2365 = vadd.f32 %v2341, %v2348
    %2366 = vst [vmem:[#allocation6] sm:$0xff] %v2350
    %2367 = vst [vmem:[#allocation6 + $0x8] sm:$0xff] %v2351
    %2368 = vst [vmem:[#allocation6 + $0x10] sm:$0xff] %v2352
    %2369 = vst [vmem:[#allocation6 + $0x18] sm:$0xff] %v2353
    %2370 = vst [vmem:[#allocation6 + $0x20] sm:$0xff] %v2354
    %2371 = vst [vmem:[#allocation6 + $0x28] sm:$0xff] %v2355
    %2372 = vst [vmem:[#allocation6 + $0x30] sm:$0xff] %v2356
    %2373 = vst [vmem:[#allocation6 + $0x38] sm:$0xff] %v2357
    %2374 = vst [vmem:[#allocation6 + $0x40] sm:$0xff] %v2358
    %2375 = vst [vmem:[#allocation6 + $0x48] sm:$0xff] %v2359
    %2376 = vst [vmem:[#allocation6 + $0x50] sm:$0xff] %v2360
    %2377 = vst [vmem:[#allocation6 + $0x58] sm:$0xff] %v2361
    %2378 = vst [vmem:[#allocation6 + $0x60] sm:$0xff] %v2362
    %2379 = vst [vmem:[#allocation6 + $0x68] sm:$0xff] %v2363
    %2380 = vst [vmem:[#allocation6 + $0x70] sm:$0xff] %v2364
    %2381 = vst [vmem:[#allocation6 + $0x78] sm:$0xff] %v2365
    %v2382 = vld [vmem:[#allocation6] sm:$0xff]
    %v2383 = vld [vmem:[#allocation6 + $0x8] sm:$0xff]
    %v2384 = vld [vmem:[#allocation6 + $0x10] sm:$0xff]
    %v2385 = vld [vmem:[#allocation6 + $0x18] sm:$0xff]
    %v2386 = vld [vmem:[#allocation6 + $0x20] sm:$0xff]
    %v2387 = vld [vmem:[#allocation6 + $0x28] sm:$0xff]
    %v2388 = vld [vmem:[#allocation6 + $0x30] sm:$0xff]
    %v2389 = vld [vmem:[#allocation6 + $0x38] sm:$0xff]
    %v2390 = vld [vmem:[#allocation6 + $0x40] sm:$0xff]
    %v2391 = vld [vmem:[#allocation6 + $0x48] sm:$0xff]
    %v2392 = vld [vmem:[#allocation6 + $0x50] sm:$0xff]
    %v2393 = vld [vmem:[#allocation6 + $0x58] sm:$0xff]
    %v2394 = vld [vmem:[#allocation6 + $0x60] sm:$0xff]
    %v2395 = vld [vmem:[#allocation6 + $0x68] sm:$0xff]
    %v2396 = vld [vmem:[#allocation6 + $0x70] sm:$0xff]
    %v2397 = vld [vmem:[#allocation6 + $0x78] sm:$0xff]
    %v2398 = vpack.c.bf16 %v2383, %v2382
    %v2399 = vpack.c.bf16 %v2385, %v2384
    %v2400 = vpack.c.bf16 %v2387, %v2386
    %v2401 = vpack.c.bf16 %v2389, %v2388
    %v2402 = vpack.c.bf16 %v2391, %v2390
    %v2403 = vpack.c.bf16 %v2393, %v2392
    %v2404 = vpack.c.bf16 %v2395, %v2394
    %v2405 = vpack.c.bf16 %v2397, %v2396
    %v2406 = vld [vmem:[#allocation8] sm:$0xf]
    %v2407 = vld [vmem:[#allocation8 + $0x4] sm:$0xf]
    %v2410 = vunpack.c.l.b16 %v2406
    %v2411 = vunpack.c.l.b16 %v2407
    %v2412 = vpack.c.b16 %v2411, %v2410
    %2414 = vmatprep.subr.bf16.mxu0 0
    %2415 = vmatpush1.bf16.msra.mxu0 %v2405
    %2416 = vmatprep.subr.bf16.mxu0 0
    %2417 = vmatpush1.bf16.msra.mxu0 %v2404
    %2418 = vmatprep.subr.bf16.mxu0 0
    %2419 = vmatpush1.bf16.msra.mxu0 %v2403
    %2420 = vmatprep.subr.bf16.mxu0 0
    %2421 = vmatpush1.bf16.msra.mxu0 %v2402
    %2422 = vmatprep.subr.bf16.mxu0 0
    %2423 = vmatpush1.bf16.msra.mxu0 %v2401
    %2424 = vmatprep.subr.bf16.mxu0 0
    %2425 = vmatpush1.bf16.msra.mxu0 %v2400
    %2426 = vmatprep.subr.bf16.mxu0 0
    %2427 = vmatpush1.bf16.msra.mxu0 %v2399
    %2428 = vmatprep.subr.bf16.mxu0 0
    %2429 = vmatpush1.bf16.msra.mxu0 %v2398
    %2430 = vmatprep.subr.bf16.mxu0 0
    %2431 = vmatpush2.bf16.msra.mxu0 0
    %2432 = vmatprep.subr.bf16.mxu0 0
    %2433 = vmatpush2.bf16.msra.mxu0 0
    %2434 = vmatprep.subr.bf16.mxu0 0
    %2435 = vmatpush2.bf16.msra.mxu0 0
    %2436 = vmatprep.subr.bf16.mxu0 0
    %2437 = vmatpush2.bf16.msra.mxu0 0
    %2438 = vmatprep.subr.bf16.mxu0 0
    %2439 = vmatpush2.bf16.msra.mxu0 0
    %2440 = vmatprep.subr.bf16.mxu0 0
    %2441 = vmatpush2.bf16.msra.mxu0 0
    %2442 = vmatprep.subr.bf16.mxu0 0
    %2443 = vmatpush2.bf16.msra.mxu0 0
    %2444 = vmatprep.subr.bf16.mxu0 0
    %2445 = vmatpush2.bf16.msra.mxu0 0
    %2446 = vmatprep.mubr.bf16.mxu0 0
    %2447 = vmatmul.mubr.bf16.gmra.mxu0 %v2412
    %v2448 = vpop.f32.mrf.mxu0
    %v2449 = vadd.f32 0.0, %v2448
    %v2450 = vpop.f32.mrf.mxu0
    %v2451 = vpop.f32.mrf.mxu0
    %v2452 = vadd.f32 0.0, %v2451
    %v2453 = vpop.f32.mrf.mxu0
    %2454 = vdwg.mxu0
    %v2455 = vld [vmem:[%s4] sm:$0xff]
    %v2456 = vld [vmem:[%s4 + $0x8] sm:$0xff]
    %2458 = vset.pattern.permute.xlu0 0
    %2459 = vperm.xlu0 %2458, %v2455
    %v2460 = vpop.permute.xlu0 %2459
    %2463 = vset.pattern.permute.xlu0 0
    %2464 = vperm.xlu0 %2463, %v2456
    %v2465 = vpop.permute.xlu0 %2464
    %v2467 = vmul.f32 %v2449, %v2460
    %v2468 = vmul.f32 %v2452, %v2465
    %2469 = vst [vmem:[#allocation7] sm:$0xff] 0.0
    %2470 = vst [vmem:[#allocation7 + $0x8] sm:$0xff] 0.0
    loop: start=0, step=1, limit=2
    $region252: #{tpu_custom_call.1} parent=1 // loop_pre_header
      _
    $region253: #{tpu_custom_call.1} parent=1 // loop_header
      %s2472 = sphi 0, %s2476
      %p2473 = scmp.ge.s32.totalorder %s2472, 2
    $region254: #{tpu_custom_call.1} parent=1 // loop_header_branch
      %2475 = sbr.rel (%p2473) target = $region258
    $region255: #{tpu_custom_call.1} parent=1 // loop_body
      %v2477 = vld [vmem:[%s3] sm:$0xff]
      %v2478 = vld [vmem:[%s3 + $0x8] sm:$0xff]
      %v2479 = vld [vmem:[%s3 + $0x10] sm:$0xff]
      %v2480 = vld [vmem:[%s3 + $0x18] sm:$0xff]
      %v2481 = vld [vmem:[%s3 + $0x20] sm:$0xff]
      %v2482 = vld [vmem:[%s3 + $0x28] sm:$0xff]
      %v2483 = vld [vmem:[%s3 + $0x30] sm:$0xff]
      %v2484 = vld [vmem:[%s3 + $0x38] sm:$0xff]
      %v2485 = vld [vmem:[%s3 + $0x40] sm:$0xff]
      %v2486 = vld [vmem:[%s3 + $0x48] sm:$0xff]
      %v2487 = vld [vmem:[%s3 + $0x50] sm:$0xff]
      %v2488 = vld [vmem:[%s3 + $0x58] sm:$0xff]
      %v2489 = vld [vmem:[%s3 + $0x60] sm:$0xff]
      %v2490 = vld [vmem:[%s3 + $0x68] sm:$0xff]
      %v2491 = vld [vmem:[%s3 + $0x70] sm:$0xff]
      %v2492 = vld [vmem:[%s3 + $0x78] sm:$0xff]
      %v2493 = vstv %s2472
      %vm2494 = vcmp.eq.s32.totalorder %v2477, %v2493
      %vm2495 = vcmp.eq.s32.totalorder %v2478, %v2493
      %vm2496 = vcmp.eq.s32.totalorder %v2479, %v2493
      %vm2497 = vcmp.eq.s32.totalorder %v2480, %v2493
      %vm2498 = vcmp.eq.s32.totalorder %v2481, %v2493
      %vm2499 = vcmp.eq.s32.totalorder %v2482, %v2493
      %vm2500 = vcmp.eq.s32.totalorder %v2483, %v2493
      %vm2501 = vcmp.eq.s32.totalorder %v2484, %v2493
      %vm2502 = vcmp.eq.s32.totalorder %v2485, %v2493
      %vm2503 = vcmp.eq.s32.totalorder %v2486, %v2493
      %vm2504 = vcmp.eq.s32.totalorder %v2487, %v2493
      %vm2505 = vcmp.eq.s32.totalorder %v2488, %v2493
      %vm2506 = vcmp.eq.s32.totalorder %v2489, %v2493
      %vm2507 = vcmp.eq.s32.totalorder %v2490, %v2493
      %vm2508 = vcmp.eq.s32.totalorder %v2491, %v2493
      %vm2509 = vcmp.eq.s32.totalorder %v2492, %v2493
      %v2510 = vld [vmem:[#allocation6] sm:$0xff]
      %v2511 = vld [vmem:[#allocation6 + $0x8] sm:$0xff]
      %v2512 = vld [vmem:[#allocation6 + $0x10] sm:$0xff]
      %v2513 = vld [vmem:[#allocation6 + $0x18] sm:$0xff]
      %v2514 = vld [vmem:[#allocation6 + $0x20] sm:$0xff]
      %v2515 = vld [vmem:[#allocation6 + $0x28] sm:$0xff]
      %v2516 = vld [vmem:[#allocation6 + $0x30] sm:$0xff]
      %v2517 = vld [vmem:[#allocation6 + $0x38] sm:$0xff]
      %v2518 = vld [vmem:[#allocation6 + $0x40] sm:$0xff]
      %v2519 = vld [vmem:[#allocation6 + $0x48] sm:$0xff]
      %v2520 = vld [vmem:[#allocation6 + $0x50] sm:$0xff]
      %v2521 = vld [vmem:[#allocation6 + $0x58] sm:$0xff]
      %v2522 = vld [vmem:[#allocation6 + $0x60] sm:$0xff]
      %v2523 = vld [vmem:[#allocation6 + $0x68] sm:$0xff]
      %v2524 = vld [vmem:[#allocation6 + $0x70] sm:$0xff]
      %v2525 = vld [vmem:[#allocation6 + $0x78] sm:$0xff]
      %v2526 = vsel %vm2494, 1, 0
      %v2527 = vsel %vm2495, 1, 0
      %v2528 = vsel %vm2496, 1, 0
      %v2529 = vsel %vm2497, 1, 0
      %v2530 = vsel %vm2498, 1, 0
      %v2531 = vsel %vm2499, 1, 0
      %v2532 = vsel %vm2500, 1, 0
      %v2533 = vsel %vm2501, 1, 0
      %v2534 = vsel %vm2502, 1, 0
      %v2535 = vsel %vm2503, 1, 0
      %v2536 = vsel %vm2504, 1, 0
      %v2537 = vsel %vm2505, 1, 0
      %v2538 = vsel %vm2506, 1, 0
      %v2539 = vsel %vm2507, 1, 0
      %v2540 = vsel %vm2508, 1, 0
      %v2541 = vsel %vm2509, 1, 0
      %2542 = vset.pattern.permute.xlu0 0
      %2543 = vperm.xlu0 %2542, %v2526
      %v2544 = vpop.permute.xlu0 %2543
      %2545 = vset.pattern.permute.xlu0 0
      %2546 = vperm.xlu0 %2545, %v2527
      %v2547 = vpop.permute.xlu0 %2546
      %2548 = vset.pattern.permute.xlu0 0
      %2549 = vperm.xlu0 %2548, %v2528
      %v2550 = vpop.permute.xlu0 %2549
      %2551 = vset.pattern.permute.xlu0 0
      %2552 = vperm.xlu0 %2551, %v2529
      %v2553 = vpop.permute.xlu0 %2552
      %2554 = vset.pattern.permute.xlu0 0
      %2555 = vperm.xlu0 %2554, %v2530
      %v2556 = vpop.permute.xlu0 %2555
      %2557 = vset.pattern.permute.xlu0 0
      %2558 = vperm.xlu0 %2557, %v2531
      %v2559 = vpop.permute.xlu0 %2558
      %2560 = vset.pattern.permute.xlu0 0
      %2561 = vperm.xlu0 %2560, %v2532
      %v2562 = vpop.permute.xlu0 %2561
      %2563 = vset.pattern.permute.xlu0 0
      %2564 = vperm.xlu0 %2563, %v2533
      %v2565 = vpop.permute.xlu0 %2564
      %2566 = vset.pattern.permute.xlu0 0
      %2567 = vperm.xlu0 %2566, %v2534
      %v2568 = vpop.permute.xlu0 %2567
      %2569 = vset.pattern.permute.xlu0 0
      %2570 = vperm.xlu0 %2569, %v2535
      %v2571 = vpop.permute.xlu0 %2570
      %2572 = vset.pattern.permute.xlu0 0
      %2573 = vperm.xlu0 %2572, %v2536
      %v2574 = vpop.permute.xlu0 %2573
      %2575 = vset.pattern.permute.xlu0 0
      %2576 = vperm.xlu0 %2575, %v2537
      %v2577 = vpop.permute.xlu0 %2576
      %2578 = vset.pattern.permute.xlu0 0
      %2579 = vperm.xlu0 %2578, %v2538
      %v2580 = vpop.permute.xlu0 %2579
      %2581 = vset.pattern.permute.xlu0 0
      %2582 = vperm.xlu0 %2581, %v2539
      %v2583 = vpop.permute.xlu0 %2582
      %2584 = vset.pattern.permute.xlu0 0
      %2585 = vperm.xlu0 %2584, %v2540
      %v2586 = vpop.permute.xlu0 %2585
      %2587 = vset.pattern.permute.xlu0 0
      %2588 = vperm.xlu0 %2587, %v2541
      %v2589 = vpop.permute.xlu0 %2588
      %vm2590 = vcmp.eq.s32.totalorder %v2544, 1
      %vm2591 = vcmp.eq.s32.totalorder %v2547, 1
      %vm2592 = vcmp.eq.s32.totalorder %v2550, 1
      %vm2593 = vcmp.eq.s32.totalorder %v2553, 1
      %vm2594 = vcmp.eq.s32.totalorder %v2556, 1
      %vm2595 = vcmp.eq.s32.totalorder %v2559, 1
      %vm2596 = vcmp.eq.s32.totalorder %v2562, 1
      %vm2597 = vcmp.eq.s32.totalorder %v2565, 1
      %vm2598 = vcmp.eq.s32.totalorder %v2568, 1
      %vm2599 = vcmp.eq.s32.totalorder %v2571, 1
      %vm2600 = vcmp.eq.s32.totalorder %v2574, 1
      %vm2601 = vcmp.eq.s32.totalorder %v2577, 1
      %vm2602 = vcmp.eq.s32.totalorder %v2580, 1
      %vm2603 = vcmp.eq.s32.totalorder %v2583, 1
      %vm2604 = vcmp.eq.s32.totalorder %v2586, 1
      %vm2605 = vcmp.eq.s32.totalorder %v2589, 1
      %v2606 = vsel %vm2590, %v2510, -3e+38
      %v2607 = vsel %vm2591, %v2511, -3e+38
      %v2608 = vsel %vm2592, %v2512, -3e+38
      %v2609 = vsel %vm2593, %v2513, -3e+38
      %v2610 = vsel %vm2594, %v2514, -3e+38
      %v2611 = vsel %vm2595, %v2515, -3e+38
      %v2612 = vsel %vm2596, %v2516, -3e+38
      %v2613 = vsel %vm2597, %v2517, -3e+38
      %v2614 = vsel %vm2598, %v2518, -3e+38
      %v2615 = vsel %vm2599, %v2519, -3e+38
      %v2616 = vsel %vm2600, %v2520, -3e+38
      %v2617 = vsel %vm2601, %v2521, -3e+38
      %v2618 = vsel %vm2602, %v2522, -3e+38
      %v2619 = vsel %vm2603, %v2523, -3e+38
      %v2620 = vsel %vm2604, %v2524, -3e+38
      %v2621 = vsel %vm2605, %v2525, -3e+38
      %v2622 = vmax.f32 %v2606, %v2610
      %v2623 = vmax.f32 %v2607, %v2611
      %v2624 = vmax.f32 %v2608, %v2612
      %v2625 = vmax.f32 %v2609, %v2613
      %v2626 = vmax.f32 %v2622, %v2614
      %v2627 = vmax.f32 %v2623, %v2615
      %v2628 = vmax.f32 %v2624, %v2616
      %v2629 = vmax.f32 %v2625, %v2617
      %v2630 = vmax.f32 %v2626, %v2618
      %v2631 = vmax.f32 %v2627, %v2619
      %v2632 = vmax.f32 %v2628, %v2620
      %v2633 = vmax.f32 %v2629, %v2621
      %v2634 = vmax.f32 %v2630, %v2631
      %v2635 = vmax.f32 %v2632, %v2633
      %v2636 = vmax.f32 %v2634, %v2635
      %v2637 = vrot.slane %v2636, 4
      %v2638 = vmax.f32 %v2636, %v2637
      %v2639 = vrot.slane %v2638, 2
      %v2640 = vmax.f32 %v2638, %v2639
      %v2641 = vrot.slane %v2640, 1
      %v2642 = vmax.f32 %v2640, %v2641
      %s2643 = scalar_lea.vmem [#allocation7], %s2472
      %2644 = vst [vmem:[%s2643] sm:$0x1] %v2642
    $region256: #{tpu_custom_call.1} parent=1 // loop_footer
      %s2476 = sadd.s32 1, %s2472
    $region257: #{tpu_custom_call.1} parent=1 // loop_footer_branch
      %2471 = sbr.rel target = $region253
    $region258: #{tpu_custom_call.1} parent=1 // loop_exit
      _
    %v2645 = vld [vmem:[#allocation7] sm:$0xff]
    %v2646 = vld [vmem:[#allocation7 + $0x8] sm:$0xff]
    %v2647 = vpack.c.bf16 %v2646, %v2645
    %v2648 = vld [vmem:[#allocation25] sm:$0xf]
    %v2649 = vld [vmem:[#allocation25 + $0x4] sm:$0xf]
    %v2650 = vld [vmem:[#allocation25 + $0x8] sm:$0xf]
    %v2651 = vld [vmem:[#allocation25 + $0xc] sm:$0xf]
    %v2652 = vld [vmem:[#allocation25 + $0x10] sm:$0xf]
    %v2653 = vld [vmem:[#allocation25 + $0x14] sm:$0xf]
    %v2654 = vld [vmem:[#allocation25 + $0x18] sm:$0xf]
    %v2655 = vld [vmem:[#allocation25 + $0x1c] sm:$0xf]
    %v2656 = vld [vmem:[#allocation25 + $0x20] sm:$0xf]
    %v2657 = vld [vmem:[#allocation25 + $0x24] sm:$0xf]
    %v2658 = vld [vmem:[#allocation25 + $0x28] sm:$0xf]
    %v2659 = vld [vmem:[#allocation25 + $0x2c] sm:$0xf]
    %v2660 = vld [vmem:[#allocation25 + $0x30] sm:$0xf]
    %v2661 = vld [vmem:[#allocation25 + $0x34] sm:$0xf]
    %v2662 = vld [vmem:[#allocation25 + $0x38] sm:$0xf]
    %v2663 = vld [vmem:[#allocation25 + $0x3c] sm:$0xf]
    %v2664 = vpack.c.bf16 %v2468, %v2467
    %v2665 = vld [vmem:[%s16] sm:$0xf]
    %v2666 = vld [vmem:[%s16 + $0x4] sm:$0xf]
    %v2667 = vld [vmem:[%s16 + $0x8] sm:$0xf]
    %v2668 = vld [vmem:[%s16 + $0xc] sm:$0xf]
    %v2669 = vld [vmem:[%s16 + $0x10] sm:$0xf]
    %v2670 = vld [vmem:[%s16 + $0x14] sm:$0xf]
    %v2671 = vld [vmem:[%s16 + $0x18] sm:$0xf]
    %v2672 = vld [vmem:[%s16 + $0x1c] sm:$0xf]
    %v2673 = vld [vmem:[%s16 + $0x20] sm:$0xf]
    %v2674 = vld [vmem:[%s16 + $0x24] sm:$0xf]
    %v2675 = vld [vmem:[%s16 + $0x28] sm:$0xf]
    %v2676 = vld [vmem:[%s16 + $0x2c] sm:$0xf]
    %v2677 = vld [vmem:[%s16 + $0x30] sm:$0xf]
    %v2678 = vld [vmem:[%s16 + $0x34] sm:$0xf]
    %v2679 = vld [vmem:[%s16 + $0x38] sm:$0xf]
    %v2680 = vld [vmem:[%s16 + $0x3c] sm:$0xf]
    %v2697 = vunpack.c.l.b16 %v2665
    %v2698 = vunpack.c.l.b16 %v2666
    %v2699 = vunpack.c.l.b16 %v2667
    %v2700 = vunpack.c.l.b16 %v2668
    %v2701 = vunpack.c.l.b16 %v2669
    %v2702 = vunpack.c.l.b16 %v2670
    %v2703 = vunpack.c.l.b16 %v2671
    %v2704 = vunpack.c.l.b16 %v2672
    %v2705 = vunpack.c.l.b16 %v2673
    %v2706 = vunpack.c.l.b16 %v2674
    %v2707 = vunpack.c.l.b16 %v2675
    %v2708 = vunpack.c.l.b16 %v2676
    %v2709 = vunpack.c.l.b16 %v2677
    %v2710 = vunpack.c.l.b16 %v2678
    %v2711 = vunpack.c.l.b16 %v2679
    %v2712 = vunpack.c.l.b16 %v2680
    %v2713 = vpack.c.b16 %v2698, %v2697
    %v2714 = vpack.c.b16 %v2700, %v2699
    %v2715 = vpack.c.b16 %v2702, %v2701
    %v2716 = vpack.c.b16 %v2704, %v2703
    %v2717 = vpack.c.b16 %v2706, %v2705
    %v2718 = vpack.c.b16 %v2708, %v2707
    %v2719 = vpack.c.b16 %v2710, %v2709
    %v2720 = vpack.c.b16 %v2712, %v2711
    %2729 = vmatprep.subr.bf16.mxu0 0
    %2730 = vmatpush1.bf16.msra.mxu0 %v2720
    %2731 = vmatprep.subr.bf16.mxu0 0
    %2732 = vmatpush1.bf16.msra.mxu0 %v2719
    %2733 = vmatprep.subr.bf16.mxu0 0
    %2734 = vmatpush1.bf16.msra.mxu0 %v2718
    %2735 = vmatprep.subr.bf16.mxu0 0
    %2736 = vmatpush1.bf16.msra.mxu0 %v2717
    %2737 = vmatprep.subr.bf16.mxu0 0
    %2738 = vmatpush1.bf16.msra.mxu0 %v2716
    %2739 = vmatprep.subr.bf16.mxu0 0
    %2740 = vmatpush1.bf16.msra.mxu0 %v2715
    %2741 = vmatprep.subr.bf16.mxu0 0
    %2742 = vmatpush1.bf16.msra.mxu0 %v2714
    %2743 = vmatprep.subr.bf16.mxu0 0
    %2744 = vmatpush1.bf16.msra.mxu0 %v2713
    %2745 = vmatprep.subr.bf16.mxu0 0
    %2746 = vmatpush2.bf16.msra.mxu0 0
    %2747 = vmatprep.subr.bf16.mxu0 0
    %2748 = vmatpush2.bf16.msra.mxu0 0
    %2749 = vmatprep.subr.bf16.mxu0 0
    %2750 = vmatpush2.bf16.msra.mxu0 0
    %2751 = vmatprep.subr.bf16.mxu0 0
    %2752 = vmatpush2.bf16.msra.mxu0 0
    %2753 = vmatprep.subr.bf16.mxu0 0
    %2754 = vmatpush2.bf16.msra.mxu0 0
    %2755 = vmatprep.subr.bf16.mxu0 0
    %2756 = vmatpush2.bf16.msra.mxu0 0
    %2757 = vmatprep.subr.bf16.mxu0 0
    %2758 = vmatpush2.bf16.msra.mxu0 0
    %2759 = vmatprep.subr.bf16.mxu0 0
    %2760 = vmatpush2.bf16.msra.mxu0 0
    %2761 = vmatprep.mubr.bf16.mxu0 0
    %2762 = vmatmul.mubr.bf16.gmra.mxu0 %v2664
    %v2763 = vpop.f32.mrf.mxu0
    %v2764 = vadd.f32 0.0, %v2763
    %v2765 = vpop.f32.mrf.mxu0
    %v2766 = vpop.f32.mrf.mxu0
    %v2767 = vadd.f32 0.0, %v2766
    %v2768 = vpop.f32.mrf.mxu0
    %2769 = vdwg.mxu0
    %v2786 = vunpack.c.l.b16 %v2648
    %v2787 = vunpack.c.l.b16 %v2649
    %v2788 = vunpack.c.l.b16 %v2650
    %v2789 = vunpack.c.l.b16 %v2651
    %v2790 = vunpack.c.l.b16 %v2652
    %v2791 = vunpack.c.l.b16 %v2653
    %v2792 = vunpack.c.l.b16 %v2654
    %v2793 = vunpack.c.l.b16 %v2655
    %v2794 = vunpack.c.l.b16 %v2656
    %v2795 = vunpack.c.l.b16 %v2657
    %v2796 = vunpack.c.l.b16 %v2658
    %v2797 = vunpack.c.l.b16 %v2659
    %v2798 = vunpack.c.l.b16 %v2660
    %v2799 = vunpack.c.l.b16 %v2661
    %v2800 = vunpack.c.l.b16 %v2662
    %v2801 = vunpack.c.l.b16 %v2663
    %v2802 = vpack.c.b16 %v2787, %v2786
    %v2803 = vpack.c.b16 %v2789, %v2788
    %v2804 = vpack.c.b16 %v2791, %v2790
    %v2805 = vpack.c.b16 %v2793, %v2792
    %v2806 = vpack.c.b16 %v2795, %v2794
    %v2807 = vpack.c.b16 %v2797, %v2796
    %v2808 = vpack.c.b16 %v2799, %v2798
    %v2809 = vpack.c.b16 %v2801, %v2800
    %2818 = vmatprep.subr.bf16.mxu0 0
    %2819 = vmatpush1.bf16.msra.mxu0 %v2809
    %2820 = vmatprep.subr.bf16.mxu0 0
    %2821 = vmatpush1.bf16.msra.mxu0 %v2808
    %2822 = vmatprep.subr.bf16.mxu0 0
    %2823 = vmatpush1.bf16.msra.mxu0 %v2807
    %2824 = vmatprep.subr.bf16.mxu0 0
    %2825 = vmatpush1.bf16.msra.mxu0 %v2806
    %2826 = vmatprep.subr.bf16.mxu0 0
    %2827 = vmatpush1.bf16.msra.mxu0 %v2805
    %2828 = vmatprep.subr.bf16.mxu0 0
    %2829 = vmatpush1.bf16.msra.mxu0 %v2804
    %2830 = vmatprep.subr.bf16.mxu0 0
    %2831 = vmatpush1.bf16.msra.mxu0 %v2803
    %2832 = vmatprep.subr.bf16.mxu0 0
    %2833 = vmatpush1.bf16.msra.mxu0 %v2802
    %2834 = vmatprep.subr.bf16.mxu0 0
    %2835 = vmatpush2.bf16.msra.mxu0 0
    %2836 = vmatprep.subr.bf16.mxu0 0
    %2837 = vmatpush2.bf16.msra.mxu0 0
    %2838 = vmatprep.subr.bf16.mxu0 0
    %2839 = vmatpush2.bf16.msra.mxu0 0
    %2840 = vmatprep.subr.bf16.mxu0 0
    %2841 = vmatpush2.bf16.msra.mxu0 0
    %2842 = vmatprep.subr.bf16.mxu0 0
    %2843 = vmatpush2.bf16.msra.mxu0 0
    %2844 = vmatprep.subr.bf16.mxu0 0
    %2845 = vmatpush2.bf16.msra.mxu0 0
    %2846 = vmatprep.subr.bf16.mxu0 0
    %2847 = vmatpush2.bf16.msra.mxu0 0
    %2848 = vmatprep.subr.bf16.mxu0 0
    %2849 = vmatpush2.bf16.msra.mxu0 0
    %2850 = vmatprep.mubr.bf16.mxu0 0
    %2851 = vmatmul.mubr.bf16.gmra.mxu0 %v2647
    %v2852 = vpop.f32.mrf.mxu0
    %v2853 = vadd.f32 %v2764, %v2852
    %v2854 = vpop.f32.mrf.mxu0
    %v2855 = vpop.f32.mrf.mxu0
    %v2856 = vadd.f32 %v2767, %v2855
    %v2857 = vpop.f32.mrf.mxu0
    %2858 = vdwg.mxu0
    %v2859 = vpack.c.bf16 %v2452, %v2449
    %v2860 = vld [vmem:[#allocation26] sm:$0xf]
    %v2861 = vld [vmem:[#allocation26 + $0x4] sm:$0xf]
    %v2862 = vld [vmem:[#allocation26 + $0x8] sm:$0xf]
    %v2863 = vld [vmem:[#allocation26 + $0xc] sm:$0xf]
    %v2864 = vld [vmem:[#allocation26 + $0x10] sm:$0xf]
    %v2865 = vld [vmem:[#allocation26 + $0x14] sm:$0xf]
    %v2866 = vld [vmem:[#allocation26 + $0x18] sm:$0xf]
    %v2867 = vld [vmem:[#allocation26 + $0x1c] sm:$0xf]
    %v2868 = vld [vmem:[#allocation26 + $0x20] sm:$0xf]
    %v2869 = vld [vmem:[#allocation26 + $0x24] sm:$0xf]
    %v2870 = vld [vmem:[#allocation26 + $0x28] sm:$0xf]
    %v2871 = vld [vmem:[#allocation26 + $0x2c] sm:$0xf]
    %v2872 = vld [vmem:[#allocation26 + $0x30] sm:$0xf]
    %v2873 = vld [vmem:[#allocation26 + $0x34] sm:$0xf]
    %v2874 = vld [vmem:[#allocation26 + $0x38] sm:$0xf]
    %v2875 = vld [vmem:[#allocation26 + $0x3c] sm:$0xf]
    %v2892 = vunpack.c.l.b16 %v2860
    %v2893 = vunpack.c.l.b16 %v2861
    %v2894 = vunpack.c.l.b16 %v2862
    %v2895 = vunpack.c.l.b16 %v2863
    %v2896 = vunpack.c.l.b16 %v2864
    %v2897 = vunpack.c.l.b16 %v2865
    %v2898 = vunpack.c.l.b16 %v2866
    %v2899 = vunpack.c.l.b16 %v2867
    %v2900 = vunpack.c.l.b16 %v2868
    %v2901 = vunpack.c.l.b16 %v2869
    %v2902 = vunpack.c.l.b16 %v2870
    %v2903 = vunpack.c.l.b16 %v2871
    %v2904 = vunpack.c.l.b16 %v2872
    %v2905 = vunpack.c.l.b16 %v2873
    %v2906 = vunpack.c.l.b16 %v2874
    %v2907 = vunpack.c.l.b16 %v2875
    %v2908 = vpack.c.b16 %v2893, %v2892
    %v2909 = vpack.c.b16 %v2895, %v2894
    %v2910 = vpack.c.b16 %v2897, %v2896
    %v2911 = vpack.c.b16 %v2899, %v2898
    %v2912 = vpack.c.b16 %v2901, %v2900
    %v2913 = vpack.c.b16 %v2903, %v2902
    %v2914 = vpack.c.b16 %v2905, %v2904
    %v2915 = vpack.c.b16 %v2907, %v2906
    %2924 = vmatprep.subr.bf16.mxu0 0
    %2925 = vmatpush1.bf16.msra.mxu0 %v2915
    %2926 = vmatprep.subr.bf16.mxu0 0
    %2927 = vmatpush1.bf16.msra.mxu0 %v2914
    %2928 = vmatprep.subr.bf16.mxu0 0
    %2929 = vmatpush1.bf16.msra.mxu0 %v2913
    %2930 = vmatprep.subr.bf16.mxu0 0
    %2931 = vmatpush1.bf16.msra.mxu0 %v2912
    %2932 = vmatprep.subr.bf16.mxu0 0
    %2933 = vmatpush1.bf16.msra.mxu0 %v2911
    %2934 = vmatprep.subr.bf16.mxu0 0
    %2935 = vmatpush1.bf16.msra.mxu0 %v2910
    %2936 = vmatprep.subr.bf16.mxu0 0
    %2937 = vmatpush1.bf16.msra.mxu0 %v2909
    %2938 = vmatprep.subr.bf16.mxu0 0
    %2939 = vmatpush1.bf16.msra.mxu0 %v2908
    %2940 = vmatprep.subr.bf16.mxu0 0
    %2941 = vmatpush2.bf16.msra.mxu0 0
    %2942 = vmatprep.subr.bf16.mxu0 0
    %2943 = vmatpush2.bf16.msra.mxu0 0
    %2944 = vmatprep.subr.bf16.mxu0 0
    %2945 = vmatpush2.bf16.msra.mxu0 0
    %2946 = vmatprep.subr.bf16.mxu0 0
    %2947 = vmatpush2.bf16.msra.mxu0 0
    %2948 = vmatprep.subr.bf16.mxu0 0
    %2949 = vmatpush2.bf16.msra.mxu0 0
    %2950 = vmatprep.subr.bf16.mxu0 0
    %2951 = vmatpush2.bf16.msra.mxu0 0
    %2952 = vmatprep.subr.bf16.mxu0 0
    %2953 = vmatpush2.bf16.msra.mxu0 0
    %2954 = vmatprep.subr.bf16.mxu0 0
    %2955 = vmatpush2.bf16.msra.mxu0 0
    %2956 = vmatprep.mubr.bf16.mxu0 0
    %2957 = vmatmul.mubr.bf16.gmra.mxu0 %v2859
    %v2958 = vpop.f32.mrf.mxu0
    %v2959 = vadd.f32 0.0, %v2958
    %v2960 = vpop.f32.mrf.mxu0
    %v2961 = vpop.f32.mrf.mxu0
    %v2962 = vadd.f32 0.0, %v2961
    %v2963 = vpop.f32.mrf.mxu0
    %2964 = vdwg.mxu0
    %v2965 = vadd.f32 %v2853, %v2959
    %v2966 = vadd.f32 %v2856, %v2962
    %v2967 = vld [vmem:[%s5] sm:$0xff]
    %v2968 = vld [vmem:[%s5 + $0x8] sm:$0xff]
    %v2969 = vld [vmem:[%s18] sm:$0x1]
    %2971 = vset.pattern.permute.xlu0 0
    %2972 = vperm.xlu0 %2971, %v2967
    %v2973 = vpop.permute.xlu0 %2972
    %2976 = vset.pattern.permute.xlu0 0
    %2977 = vperm.xlu0 %2976, %v2968
    %v2978 = vpop.permute.xlu0 %2977
    %v2981 = vlaneseq
    %v2982 = vshrl.u32 %v2981, 7
    %v2983 = vsub.s32 0, %v2982
    %v2984 = vrot.slane %v2969, %v2983
    %v2986 = vmul.f32 %v2973, %v2984
    %v2987 = vmul.f32 %v2978, %v2984
    %v2988 = vadd.f32 %v2965, %v2986
    %v2989 = vadd.f32 %v2966, %v2987
    %v2990 = vld [vmem:[%s19] sm:$0x1]
    %v2992 = vlaneseq
    %v2993 = vshrl.u32 %v2992, 7
    %v2994 = vsub.s32 0, %v2993
    %v2995 = vrot.slane %v2990, %v2994
    %v2997 = vadd.f32 %v2988, %v2995
    %v2998 = vadd.f32 %v2989, %v2995
    %v2999 = vmax.f32 %v2997, 0.0
    %v3000 = vmax.f32 %v2998, 0.0
    %v3001 = vpack.c.bf16 %v3000, %v2999
    %v3002 = vld [vmem:[#allocation28] sm:$0xf]
    %v3003 = vld [vmem:[#allocation28 + $0x4] sm:$0xf]
    %v3004 = vld [vmem:[#allocation28 + $0x8] sm:$0xf]
    %v3005 = vld [vmem:[#allocation28 + $0xc] sm:$0xf]
    %v3006 = vld [vmem:[#allocation28 + $0x10] sm:$0xf]
    %v3007 = vld [vmem:[#allocation28 + $0x14] sm:$0xf]
    %v3008 = vld [vmem:[#allocation28 + $0x18] sm:$0xf]
    %v3009 = vld [vmem:[#allocation28 + $0x1c] sm:$0xf]
    %v3010 = vld [vmem:[#allocation28 + $0x20] sm:$0xf]
    %v3011 = vld [vmem:[#allocation28 + $0x24] sm:$0xf]
    %v3012 = vld [vmem:[#allocation28 + $0x28] sm:$0xf]
    %v3013 = vld [vmem:[#allocation28 + $0x2c] sm:$0xf]
    %v3014 = vld [vmem:[#allocation28 + $0x30] sm:$0xf]
    %v3015 = vld [vmem:[#allocation28 + $0x34] sm:$0xf]
    %v3016 = vld [vmem:[#allocation28 + $0x38] sm:$0xf]
    %v3017 = vld [vmem:[#allocation28 + $0x3c] sm:$0xf]
    %v3018 = vld [vmem:[%s21] sm:$0x1]
    %v3020 = vlaneseq
    %v3021 = vshrl.u32 %v3020, 7
    %v3022 = vsub.s32 0, %v3021
    %v3023 = vrot.slane %v3018, %v3022
    %v3041 = vunpack.c.l.b16 %v3002
    %v3042 = vunpack.c.l.b16 %v3003
    %v3043 = vunpack.c.l.b16 %v3004
    %v3044 = vunpack.c.l.b16 %v3005
    %v3045 = vunpack.c.l.b16 %v3006
    %v3046 = vunpack.c.l.b16 %v3007
    %v3047 = vunpack.c.l.b16 %v3008
    %v3048 = vunpack.c.l.b16 %v3009
    %v3049 = vunpack.c.l.b16 %v3010
    %v3050 = vunpack.c.l.b16 %v3011
    %v3051 = vunpack.c.l.b16 %v3012
    %v3052 = vunpack.c.l.b16 %v3013
    %v3053 = vunpack.c.l.b16 %v3014
    %v3054 = vunpack.c.l.b16 %v3015
    %v3055 = vunpack.c.l.b16 %v3016
    %v3056 = vunpack.c.l.b16 %v3017
    %v3057 = vpack.c.b16 %v3042, %v3041
    %v3058 = vpack.c.b16 %v3044, %v3043
    %v3059 = vpack.c.b16 %v3046, %v3045
    %v3060 = vpack.c.b16 %v3048, %v3047
    %v3061 = vpack.c.b16 %v3050, %v3049
    %v3062 = vpack.c.b16 %v3052, %v3051
    %v3063 = vpack.c.b16 %v3054, %v3053
    %v3064 = vpack.c.b16 %v3056, %v3055
    %3073 = vmatprep.subr.bf16.mxu0 0
    %3074 = vmatpush1.bf16.msra.mxu0 %v3064
    %3075 = vmatprep.subr.bf16.mxu0 0
    %3076 = vmatpush1.bf16.msra.mxu0 %v3063
    %3077 = vmatprep.subr.bf16.mxu0 0
    %3078 = vmatpush1.bf16.msra.mxu0 %v3062
    %3079 = vmatprep.subr.bf16.mxu0 0
    %3080 = vmatpush1.bf16.msra.mxu0 %v3061
    %3081 = vmatprep.subr.bf16.mxu0 0
    %3082 = vmatpush1.bf16.msra.mxu0 %v3060
    %3083 = vmatprep.subr.bf16.mxu0 0
    %3084 = vmatpush1.bf16.msra.mxu0 %v3059
    %3085 = vmatprep.subr.bf16.mxu0 0
    %3086 = vmatpush1.bf16.msra.mxu0 %v3058
    %3087 = vmatprep.subr.bf16.mxu0 0
    %3088 = vmatpush1.bf16.msra.mxu0 %v3057
    %3089 = vmatprep.subr.bf16.mxu0 0
    %3090 = vmatpush2.bf16.msra.mxu0 0
    %3091 = vmatprep.subr.bf16.mxu0 0
    %3092 = vmatpush2.bf16.msra.mxu0 0
    %3093 = vmatprep.subr.bf16.mxu0 0
    %3094 = vmatpush2.bf16.msra.mxu0 0
    %3095 = vmatprep.subr.bf16.mxu0 0
    %3096 = vmatpush2.bf16.msra.mxu0 0
    %3097 = vmatprep.subr.bf16.mxu0 0
    %3098 = vmatpush2.bf16.msra.mxu0 0
    %3099 = vmatprep.subr.bf16.mxu0 0
    %3100 = vmatpush2.bf16.msra.mxu0 0
    %3101 = vmatprep.subr.bf16.mxu0 0
    %3102 = vmatpush2.bf16.msra.mxu0 0
    %3103 = vmatprep.subr.bf16.mxu0 0
    %3104 = vmatpush2.bf16.msra.mxu0 0
    %3105 = vmatprep.mubr.bf16.mxu0 0
    %3106 = vmatmul.mubr.bf16.gmra.mxu0 %v3001
    %v3107 = vpop.f32.mrf.mxu0
    %v3108 = vadd.f32 %v3023, %v3107
    %v3109 = vpop.f32.mrf.mxu0
    %v3110 = vpop.f32.mrf.mxu0
    %v3111 = vadd.f32 %v3023, %v3110
    %v3112 = vpop.f32.mrf.mxu0
    %3113 = vdwg.mxu0
    %v3114 = vmax.f32 %v3108, 0.0
    %v3115 = vmax.f32 %v3111, 0.0
    %v3116 = vpack.c.bf16 %v3115, %v3114
    %v3117 = vld [vmem:[#allocation29] sm:$0xf]
    %v3118 = vld [vmem:[#allocation29 + $0x4] sm:$0xf]
    %v3119 = vld [vmem:[#allocation29 + $0x8] sm:$0xf]
    %v3120 = vld [vmem:[#allocation29 + $0xc] sm:$0xf]
    %v3121 = vld [vmem:[#allocation29 + $0x10] sm:$0xf]
    %v3122 = vld [vmem:[#allocation29 + $0x14] sm:$0xf]
    %v3123 = vld [vmem:[#allocation29 + $0x18] sm:$0xf]
    %v3124 = vld [vmem:[#allocation29 + $0x1c] sm:$0xf]
    %v3125 = vld [vmem:[#allocation29 + $0x20] sm:$0xf]
    %v3126 = vld [vmem:[#allocation29 + $0x24] sm:$0xf]
    %v3127 = vld [vmem:[#allocation29 + $0x28] sm:$0xf]
    %v3128 = vld [vmem:[#allocation29 + $0x2c] sm:$0xf]
    %v3129 = vld [vmem:[#allocation29 + $0x30] sm:$0xf]
    %v3130 = vld [vmem:[#allocation29 + $0x34] sm:$0xf]
    %v3131 = vld [vmem:[#allocation29 + $0x38] sm:$0xf]
    %v3132 = vld [vmem:[#allocation29 + $0x3c] sm:$0xf]
    %v3133 = vld [vmem:[%s23] sm:$0x1]
    %v3135 = vlaneseq
    %v3136 = vshrl.u32 %v3135, 7
    %v3137 = vsub.s32 0, %v3136
    %v3138 = vrot.slane %v3133, %v3137
    %v3156 = vunpack.c.l.b16 %v3117
    %v3157 = vunpack.c.l.b16 %v3118
    %v3158 = vunpack.c.l.b16 %v3119
    %v3159 = vunpack.c.l.b16 %v3120
    %v3160 = vunpack.c.l.b16 %v3121
    %v3161 = vunpack.c.l.b16 %v3122
    %v3162 = vunpack.c.l.b16 %v3123
    %v3163 = vunpack.c.l.b16 %v3124
    %v3164 = vunpack.c.l.b16 %v3125
    %v3165 = vunpack.c.l.b16 %v3126
    %v3166 = vunpack.c.l.b16 %v3127
    %v3167 = vunpack.c.l.b16 %v3128
    %v3168 = vunpack.c.l.b16 %v3129
    %v3169 = vunpack.c.l.b16 %v3130
    %v3170 = vunpack.c.l.b16 %v3131
    %v3171 = vunpack.c.l.b16 %v3132
    %v3172 = vpack.c.b16 %v3157, %v3156
    %v3173 = vpack.c.b16 %v3159, %v3158
    %v3174 = vpack.c.b16 %v3161, %v3160
    %v3175 = vpack.c.b16 %v3163, %v3162
    %v3176 = vpack.c.b16 %v3165, %v3164
    %v3177 = vpack.c.b16 %v3167, %v3166
    %v3178 = vpack.c.b16 %v3169, %v3168
    %v3179 = vpack.c.b16 %v3171, %v3170
    %3188 = vmatprep.subr.bf16.mxu0 0
    %3189 = vmatpush1.bf16.msra.mxu0 %v3179
    %3190 = vmatprep.subr.bf16.mxu0 0
    %3191 = vmatpush1.bf16.msra.mxu0 %v3178
    %3192 = vmatprep.subr.bf16.mxu0 0
    %3193 = vmatpush1.bf16.msra.mxu0 %v3177
    %3194 = vmatprep.subr.bf16.mxu0 0
    %3195 = vmatpush1.bf16.msra.mxu0 %v3176
    %3196 = vmatprep.subr.bf16.mxu0 0
    %3197 = vmatpush1.bf16.msra.mxu0 %v3175
    %3198 = vmatprep.subr.bf16.mxu0 0
    %3199 = vmatpush1.bf16.msra.mxu0 %v3174
    %3200 = vmatprep.subr.bf16.mxu0 0
    %3201 = vmatpush1.bf16.msra.mxu0 %v3173
    %3202 = vmatprep.subr.bf16.mxu0 0
    %3203 = vmatpush1.bf16.msra.mxu0 %v3172
    %3204 = vmatprep.subr.bf16.mxu0 0
    %3205 = vmatpush2.bf16.msra.mxu0 0
    %3206 = vmatprep.subr.bf16.mxu0 0
    %3207 = vmatpush2.bf16.msra.mxu0 0
    %3208 = vmatprep.subr.bf16.mxu0 0
    %3209 = vmatpush2.bf16.msra.mxu0 0
    %3210 = vmatprep.subr.bf16.mxu0 0
    %3211 = vmatpush2.bf16.msra.mxu0 0
    %3212 = vmatprep.subr.bf16.mxu0 0
    %3213 = vmatpush2.bf16.msra.mxu0 0
    %3214 = vmatprep.subr.bf16.mxu0 0
    %3215 = vmatpush2.bf16.msra.mxu0 0
    %3216 = vmatprep.subr.bf16.mxu0 0
    %3217 = vmatpush2.bf16.msra.mxu0 0
    %3218 = vmatprep.subr.bf16.mxu0 0
    %3219 = vmatpush2.bf16.msra.mxu0 0
    %3220 = vmatprep.mubr.bf16.mxu0 0
    %3221 = vmatmul.mubr.bf16.gmra.mxu0 %v3116
    %v3222 = vpop.f32.mrf.mxu0
    %v3223 = vadd.f32 %v3138, %v3222
    %v3224 = vpop.f32.mrf.mxu0
    %v3225 = vpop.f32.mrf.mxu0
    %v3226 = vadd.f32 %v3138, %v3225
    %v3227 = vpop.f32.mrf.mxu0
    %3228 = vdwg.mxu0
    %3229 = vst [vmem:[#allocation31] sm:$0xff] %v3223
    %3230 = vst [vmem:[#allocation31 + $0x8] sm:$0xff] %v3226
    // Predicated region
    $region259: #{tpu_custom_call.1} parent=1 // pred_check
      _
    $region260: #{tpu_custom_call.1} parent=1 // pred_check_branch
      %3232 = sbr.rel (0) target = $region262
    $region261: #{tpu_custom_call.1} parent=1 // pred_region
      %s3234 = ssub.s32 256, 256
      %3235 = vsyncadd [#allocation10], %s3234
      %s3236 = sshll.u32 [#allocation31], 4
      %s3237 = int_to_ptr.vmem [resolvable:$true] %s3236
      %3242 = dma.vmem_to_hbm [thread:$0]  %s3237, 256, %s24, [#allocation10], 128, 128, 8
    $region262: #{tpu_custom_call.1} parent=1 // pred_fallthru
      _
    // Predicated region
    $region263: #{tpu_custom_call.1} parent=1 // pred_check
      _
    $region264: #{tpu_custom_call.1} parent=1 // pred_check_branch
      %3244 = sbr.rel (0) target = $region266
    $region265: #{tpu_custom_call.1} parent=1 // pred_region
      %3245 = dma.done [#allocation10], 256
    $region266: #{tpu_custom_call.1} parent=1 // pred_fallthru
      _
    %3246 = vsyncpa [#allocation9], 1
    %3247 = vsyncpa [#allocation12], 1
    %3248 = vsyncpa [#allocation15], 1
    %3249 = vsyncpa [#allocation18], 1
    %3250 = vsyncpa [#allocation21], 1
    %3251 = vsyncpa [#allocation24], 1
    %3252 = vsyncpa [#allocation27], 1
    %3253 = vsyncpa [#allocation30], 1
    %3254 = vsyncpa [#allocation10], 1
  %3255 = vsyncmov [#allocation3]
  %s3256 = vpop.sfrf %3255
  %p3257 = scmp.eq.s32.totalorder %s3256, 0
  %p3258 = pneg %p3257
  %3260 = shalt.err (%p3258)
  %s3261 = scalar_lea.sflag [#allocation3], 1
  %3262 = vsyncmov %s3261
  %s3263 = vpop.sfrf %3262
  %p3264 = scmp.eq.s32.totalorder %s3263, 0
  %p3265 = pneg %p3264
  %3267 = shalt.err (%p3265)

</llo_original>
